<compile_context>
chip_gen: v6e
topology: v6e:2x2x1
jax: 0.10.0
libtpu: 0.0.40
codegen_flags: <defaults>
</compile_context>

<pallas_src>
import math

import jax
import jax.numpy as jnp
from jax.experimental import pallas as pl
from jax.experimental.pallas import tpu as pltpu

# ----------------------------- config ---------------------------------------
VOCAB = 100
VOCAB_PAD = 128          # lane-dense one-hot gather operand
HIDDEN = 32
NUM_HEADS = 2
HEAD_DIM = HIDDEN // NUM_HEADS
FFN_DIM = 64
NUM_LAYERS = 2
MAX_POS = 16
NUM_CLASSES = 6
CLS_PAD = 128            # lane-dense logits store
BATCH = 2
SEQ = 8
LN_EPS = 1e-12
ATTN_SCALE = 1.0 / math.sqrt(HEAD_DIM)


# ----------------------------- in-kernel helpers ------------------------------
def _gelu_tanh(x):
    # TODO(synk): PyTorch nn.GELU defaults to the exact erf form; tanh approx differs ~1e-3.
    c = math.sqrt(2.0 / math.pi)
    return 0.5 * x * (1.0 + jnp.tanh(c * (x + 0.044715 * x * x * x)))


def _layer_norm(x, g, b):
    mu = jnp.mean(x, axis=-1, keepdims=True)
    var = jnp.mean((x - mu) ** 2, axis=-1, keepdims=True)
    return (x - mu) * jax.lax.rsqrt(var + LN_EPS) * g + b


def _dot(a, b):
    return jnp.dot(a, b, preferred_element_type=jnp.float32)


def _bdot(a, b, contract_a, contract_b):
    # batched matmul over leading batch dim (batch dims = (0,),(0,))
    return jax.lax.dot_general(
        a, b, (((contract_a,), (contract_b,)), ((0,), (0,))),
        preferred_element_type=jnp.float32,
    )


# ----------------------------- fused kernel -----------------------------------
def _fused_bert_kernel(
    ids_ref, mask_ref, word_ref, pos_ref, emb_g_ref, emb_b_ref,
    wqkv_ref, bqkv_ref, wo_ref, bo_ref, ln1_g_ref, ln1_b_ref,
    w1_ref, b1_ref, w2_ref, b2_ref, ln2_g_ref, ln2_b_ref,
    cw1_ref, cb1_ref, cw2_ref, cb2_ref, out_ref,
):
    b_dim, s_dim = mask_ref.shape
    rows = b_dim * s_dim

    # ---- embedding gather: one lane-dense one-hot MXU matmul (replaces scalar loads+concats)
    ids = ids_ref[...]                                              # (B*S, 1) int32
    iota = jax.lax.broadcasted_iota(jnp.int32, (rows, VOCAB_PAD), 1)
    onehot = (iota == ids).astype(jnp.float32)                      # (B*S, 128)
    x = _dot(onehot, word_ref[...])                                 # (B*S, HIDDEN)
    # pos_ref is the pre-tiled (B*S, HIDDEN) pos+type(0) slab
    x = _layer_norm(x + pos_ref[...], emb_g_ref[...], emb_b_ref[...])

    mask3 = mask_ref[...].reshape(b_dim, 1, s_dim)                  # additive, bcast over queries

    # ---- transformer layers (static unroll; everything stays in VMEM/vregs) ----
    for l in range(NUM_LAYERS):
        qkv = _dot(x, wqkv_ref[l]) + bqkv_ref[l]                    # (B*S, 3H) fused projection
        wo_l = wo_ref[l]                                            # (H, H)

        attn = jnp.zeros((rows, HIDDEN), jnp.float32)
        for h in range(NUM_HEADS):
            # head column slices (static 16-lane offsets); row-dim reshape is layout-free
            q = qkv[:, h * HEAD_DIM:(h + 1) * HEAD_DIM].reshape(b_dim, s_dim, HEAD_DIM)
            k = qkv[:, HIDDEN + h * HEAD_DIM:HIDDEN + (h + 1) * HEAD_DIM].reshape(
                b_dim, s_dim, HEAD_DIM)
            v = qkv[:, 2 * HIDDEN + h * HEAD_DIM:2 * HIDDEN + (h + 1) * HEAD_DIM].reshape(
                b_dim, s_dim, HEAD_DIM)

            scores = _bdot(q, k, 2, 2) * ATTN_SCALE + mask3          # (B, S, S) batched over B
            scores = scores - jnp.max(scores, axis=-1, keepdims=True)
            p = jnp.exp(scores)
            p = p / jnp.sum(p, axis=-1, keepdims=True)               # exact softmax
            ctx = _bdot(p, v, 2, 1)                                  # (B, S, HEAD_DIM)

            # per-head accumulation through Wo row block (no head/ctx concats)
            attn = attn + _dot(ctx.reshape(rows, HEAD_DIM),
                               wo_l[h * HEAD_DIM:(h + 1) * HEAD_DIM, :])

        x = _layer_norm(attn + bo_ref[l] + x, ln1_g_ref[l], ln1_b_ref[l])

        hmid = _gelu_tanh(_dot(x, w1_ref[l]) + b1_ref[l])
        ffn_out = _dot(hmid, w2_ref[l]) + b2_ref[l]
        x = _layer_norm(ffn_out + x, ln2_g_ref[l], ln2_b_ref[l])

    # ---- classifier head on [CLS] rows (row 0 of each sequence); dropout = identity ----
    cls = x.reshape(b_dim, s_dim, HIDDEN)[:, 0, :]                   # (B, H) row-0 pick
    hcls = _gelu_tanh(_dot(cls, cw1_ref[...]) + cb1_ref[...])
    # cw2/cb2 are zero-padded to 128 output lanes -> lane-dense unmasked store
    out_ref[...] = _dot(hcls, cw2_ref[...]) + cb2_ref[...]           # (B, 128)


# ----------------------------- parameters ------------------------------------
def init_params(key):
    def normal(k, shape, scale=0.02):
        return scale * jax.random.normal(k, shape, dtype=jnp.float32)

    keys = iter(jax.random.split(key, 3 + 4 * NUM_LAYERS + 2))
    params = {
        "word_emb": normal(next(keys), (VOCAB, HIDDEN)),
        "pos_emb": normal(next(keys), (MAX_POS, HIDDEN)),
        "type_emb": normal(next(keys), (2, HIDDEN)),
        "emb_ln_g": jnp.ones((1, HIDDEN), jnp.float32),
        "emb_ln_b": jnp.zeros((1, HIDDEN), jnp.float32),
        # per-layer weights stacked on a leading layer axis (one pallas_call input each)
        "wqkv": jnp.stack([normal(next(keys), (HIDDEN, 3 * HIDDEN)) for _ in range(NUM_LAYERS)]),
        "bqkv": jnp.zeros((NUM_LAYERS, 1, 3 * HIDDEN), jnp.float32),
        "wo": jnp.stack([normal(next(keys), (HIDDEN, HIDDEN)) for _ in range(NUM_LAYERS)]),
        "bo": jnp.zeros((NUM_LAYERS, 1, HIDDEN), jnp.float32),
        "ln1_g": jnp.ones((NUM_LAYERS, 1, HIDDEN), jnp.float32),
        "ln1_b": jnp.zeros((NUM_LAYERS, 1, HIDDEN), jnp.float32),
        "w1": jnp.stack([normal(next(keys), (HIDDEN, FFN_DIM)) for _ in range(NUM_LAYERS)]),
        "b1": jnp.zeros((NUM_LAYERS, 1, FFN_DIM), jnp.float32),
        "w2": jnp.stack([normal(next(keys), (FFN_DIM, HIDDEN)) for _ in range(NUM_LAYERS)]),
        "b2": jnp.zeros((NUM_LAYERS, 1, HIDDEN), jnp.float32),
        "ln2_g": jnp.ones((NUM_LAYERS, 1, HIDDEN), jnp.float32),
        "ln2_b": jnp.zeros((NUM_LAYERS, 1, HIDDEN), jnp.float32),
        "cls_w1": normal(next(keys), (HIDDEN, HIDDEN // 2)),
        "cls_b1": jnp.zeros((1, HIDDEN // 2), jnp.float32),
        "cls_w2": normal(next(keys), (HIDDEN // 2, NUM_CLASSES)),
        "cls_b2": jnp.zeros((1, NUM_CLASSES), jnp.float32),
    }
    return params


# ----------------------------- forward pass -----------------------------------
def custom_model_forward(params, input_ids, attention_mask):
    b, s = input_ids.shape

    ids_flat = input_ids.reshape(b * s, 1).astype(jnp.int32)               # VMEM one-hot input
    # additive attention mask (0 keep / -1e4 pad, HF convention), applied along key axis
    addmask = (1.0 - attention_mask.astype(jnp.float32)) * -1e4            # (B, S)
    # position + token-type(0) rows, pre-tiled over batch (no in-kernel concat)
    pos_type = params["pos_emb"][:s] + params["type_emb"][0][None, :]      # (S, H)
    pos_tiled = jnp.tile(pos_type, (b, 1))                                 # (B*S, H)

    # lane-dense padding of tiny operands (one-hot gather table, classifier output lanes)
    word_pad = jnp.zeros((VOCAB_PAD, HIDDEN), jnp.float32).at[:VOCAB].set(params["word_emb"])
    cls_w2_pad = jnp.zeros((HIDDEN // 2, CLS_PAD), jnp.float32).at[:, :NUM_CLASSES].set(
        params["cls_w2"])
    cls_b2_pad = jnp.zeros((1, CLS_PAD), jnp.float32).at[:, :NUM_CLASSES].set(params["cls_b2"])

    vmem = pl.BlockSpec(memory_space=pltpu.MemorySpace.VMEM)

    out_pad = pl.pallas_call(
        _fused_bert_kernel,
        out_shape=jax.ShapeDtypeStruct((b, CLS_PAD), jnp.float32),
        in_specs=[vmem] * 22,
        out_specs=vmem,
    )(
        ids_flat, addmask, word_pad, pos_tiled,
        params["emb_ln_g"], params["emb_ln_b"],
        params["wqkv"], params["bqkv"], params["wo"], params["bo"],
        params["ln1_g"], params["ln1_b"],
        params["w1"], params["b1"], params["w2"], params["b2"],
        params["ln2_g"], params["ln2_b"],
        params["cls_w1"], params["cls_b1"], cls_w2_pad, cls_b2_pad,
    )
    return out_pad[:, :NUM_CLASSES]


# ----------------------------- main -------------------------------------------
if __name__ == "__main__":
    key = jax.random.PRNGKey(0)
    k_ids, _ = jax.random.split(key)

    input_ids = jax.random.randint(k_ids, (BATCH, SEQ), 0, VOCAB, dtype=jnp.int32)
    attention_mask = jnp.ones((BATCH, SEQ), dtype=jnp.int32)

    params = init_params(jax.random.PRNGKey(42))

    fwd = jax.jit(custom_model_forward)
    logits = fwd(params, input_ids, attention_mask)
    jax.block_until_ready(logits)

    assert logits.shape == (BATCH, NUM_CLASSES), logits.shape
    assert logits.dtype == jnp.float32
    print("KERNEL_OK")
</pallas_src>

<mosaic_0001>
module attributes {stable_mosaic.version = 11 : i64} {
  func.func @_fused_bert_kernel(%arg0: memref<16x1xi32, #tpu.memory_space<vmem>>, %arg1: memref<2x8xf32, #tpu.memory_space<vmem>>, %arg2: memref<128x32xf32, #tpu.memory_space<vmem>>, %arg3: memref<16x32xf32, #tpu.memory_space<vmem>>, %arg4: memref<1x32xf32, #tpu.memory_space<vmem>>, %arg5: memref<1x32xf32, #tpu.memory_space<vmem>>, %arg6: memref<2x32x96xf32, #tpu.memory_space<vmem>>, %arg7: memref<2x1x96xf32, #tpu.memory_space<vmem>>, %arg8: memref<2x32x32xf32, #tpu.memory_space<vmem>>, %arg9: memref<2x1x32xf32, #tpu.memory_space<vmem>>, %arg10: memref<2x1x32xf32, #tpu.memory_space<vmem>>, %arg11: memref<2x1x32xf32, #tpu.memory_space<vmem>>, %arg12: memref<2x32x64xf32, #tpu.memory_space<vmem>>, %arg13: memref<2x1x64xf32, #tpu.memory_space<vmem>>, %arg14: memref<2x64x32xf32, #tpu.memory_space<vmem>>, %arg15: memref<2x1x32xf32, #tpu.memory_space<vmem>>, %arg16: memref<2x1x32xf32, #tpu.memory_space<vmem>>, %arg17: memref<2x1x32xf32, #tpu.memory_space<vmem>>, %arg18: memref<32x16xf32, #tpu.memory_space<vmem>>, %arg19: memref<1x16xf32, #tpu.memory_space<vmem>>, %arg20: memref<16x128xf32, #tpu.memory_space<vmem>>, %arg21: memref<1x128xf32, #tpu.memory_space<vmem>>, %arg22: memref<2x128xf32, #tpu.memory_space<vmem>>) attributes {dimension_semantics = [], scalar_prefetch = 0 : i64, scratch_operands = 0 : i64, tpu.core_type = #tpu.core_type<tc>} {
    %c0 = arith.constant 0 : index
    %c0_0 = arith.constant 0 : index
    %0 = vector.load %arg0[%c0, %c0_0] : memref<16x1xi32, #tpu.memory_space<vmem>>, vector<16x1xi32>
    %1 = tpu.iota {dimensions = array<i32: 1>} : vector<16x128xi32>
    %2 = vector.broadcast %0 : vector<16x1xi32> to vector<16x128xi32>
    %3 = arith.cmpi eq, %1, %2 : vector<16x128xi32>
    %4 = arith.extui %3 : vector<16x128xi1> to vector<16x128xi32>
    %5 = arith.sitofp %4 : vector<16x128xi32> to vector<16x128xf32>
    %c0_1 = arith.constant 0 : index
    %c0_2 = arith.constant 0 : index
    %6 = vector.load %arg2[%c0_1, %c0_2] : memref<128x32xf32, #tpu.memory_space<vmem>>, vector<128x32xf32>
    %cst = arith.constant dense<0.000000e+00> : vector<16x32xf32>
    %7 = tpu.matmul %5, %6, %cst {dimension_numbers = #tpu.dot_dimension_numbers<[1], [0], [0], [1], [0, 0, 1, 1], [], []>} : vector<16x128xf32>, vector<128x32xf32>, vector<16x32xf32> -> vector<16x32xf32>
    %c0_3 = arith.constant 0 : index
    %c0_4 = arith.constant 0 : index
    %8 = vector.load %arg3[%c0_3, %c0_4] : memref<16x32xf32, #tpu.memory_space<vmem>>, vector<16x32xf32>
    %9 = arith.addf %7, %8 : vector<16x32xf32>
    %c0_5 = arith.constant 0 : index
    %c0_6 = arith.constant 0 : index
    %10 = vector.load %arg4[%c0_5, %c0_6] : memref<1x32xf32, #tpu.memory_space<vmem>>, vector<1x32xf32>
    %c0_7 = arith.constant 0 : index
    %c0_8 = arith.constant 0 : index
    %11 = vector.load %arg5[%c0_7, %c0_8] : memref<1x32xf32, #tpu.memory_space<vmem>>, vector<1x32xf32>
    %cst_9 = arith.constant dense<0.000000e+00> : vector<16xf32>
    %12 = vector.multi_reduction <add>, %9, %cst_9 [1] : vector<16x32xf32> to vector<16xf32>
    %13 = vector.shape_cast %12 : vector<16xf32> to vector<16x1xf32>
    %cst_10 = arith.constant 3.200000e+01 : f32
    %14 = vector.broadcast %cst_10 : f32 to vector<16x1xf32>
    %15 = arith.divf %13, %14 : vector<16x1xf32>
    %16 = vector.broadcast %15 : vector<16x1xf32> to vector<16x32xf32>
    %17 = arith.subf %9, %16 : vector<16x32xf32>
    %18 = arith.mulf %17, %17 : vector<16x32xf32>
    %cst_11 = arith.constant dense<0.000000e+00> : vector<16xf32>
    %19 = vector.multi_reduction <add>, %18, %cst_11 [1] : vector<16x32xf32> to vector<16xf32>
    %20 = vector.shape_cast %19 : vector<16xf32> to vector<16x1xf32>
    %cst_12 = arith.constant 3.200000e+01 : f32
    %21 = vector.broadcast %cst_12 : f32 to vector<16x1xf32>
    %22 = arith.divf %20, %21 : vector<16x1xf32>
    %23 = vector.broadcast %15 : vector<16x1xf32> to vector<16x32xf32>
    %24 = arith.subf %9, %23 : vector<16x32xf32>
    %cst_13 = arith.constant 9.99999996E-13 : f32
    %25 = vector.broadcast %cst_13 : f32 to vector<16x1xf32>
    %26 = arith.addf %22, %25 : vector<16x1xf32>
    %27 = math.rsqrt %26 : vector<16x1xf32>
    %28 = vector.broadcast %27 : vector<16x1xf32> to vector<16x32xf32>
    %29 = arith.mulf %24, %28 : vector<16x32xf32>
    %30 = vector.broadcast %10 : vector<1x32xf32> to vector<16x32xf32>
    %31 = arith.mulf %29, %30 : vector<16x32xf32>
    %32 = vector.broadcast %11 : vector<1x32xf32> to vector<16x32xf32>
    %33 = arith.addf %31, %32 : vector<16x32xf32>
    %c0_14 = arith.constant 0 : index
    %c0_15 = arith.constant 0 : index
    %34 = vector.load %arg1[%c0_14, %c0_15] : memref<2x8xf32, #tpu.memory_space<vmem>>, vector<2x8xf32>
    %35 = vector.shape_cast %34 : vector<2x8xf32> to vector<2x1x8xf32>
    %c0_16 = arith.constant 0 : index
    %c0_17 = arith.constant 0 : index
    %c0_18 = arith.constant 0 : index
    %36 = vector.load %arg6[%c0_16, %c0_17, %c0_18] : memref<2x32x96xf32, #tpu.memory_space<vmem>>, vector<1x32x96xf32>
    %37 = vector.shape_cast %36 : vector<1x32x96xf32> to vector<32x96xf32>
    %cst_19 = arith.constant dense<0.000000e+00> : vector<16x96xf32>
    %38 = tpu.matmul %33, %37, %cst_19 {dimension_numbers = #tpu.dot_dimension_numbers<[1], [0], [0], [1], [0, 0, 1, 1], [], []>} : vector<16x32xf32>, vector<32x96xf32>, vector<16x96xf32> -> vector<16x96xf32>
    %c0_20 = arith.constant 0 : index
    %c0_21 = arith.constant 0 : index
    %c0_22 = arith.constant 0 : index
    %39 = vector.load %arg7[%c0_20, %c0_21, %c0_22] : memref<2x1x96xf32, #tpu.memory_space<vmem>>, vector<1x1x96xf32>
    %40 = vector.shape_cast %39 : vector<1x1x96xf32> to vector<1x96xf32>
    %41 = vector.broadcast %40 : vector<1x96xf32> to vector<16x96xf32>
    %42 = arith.addf %38, %41 : vector<16x96xf32>
    %c0_23 = arith.constant 0 : index
    %c0_24 = arith.constant 0 : index
    %c0_25 = arith.constant 0 : index
    %43 = vector.load %arg8[%c0_23, %c0_24, %c0_25] : memref<2x32x32xf32, #tpu.memory_space<vmem>>, vector<1x32x32xf32>
    %44 = vector.shape_cast %43 : vector<1x32x32xf32> to vector<32x32xf32>
    %cst_26 = arith.constant 0.000000e+00 : f32
    %45 = vector.broadcast %cst_26 : f32 to vector<16x32xf32>
    %46 = vector.extract_strided_slice %42 {offsets = [0, 0], sizes = [16, 16], strides = [1, 1]} : vector<16x96xf32> to vector<16x16xf32>
    %47 = vector.shape_cast %46 : vector<16x16xf32> to vector<2x8x16xf32>
    %48 = vector.extract_strided_slice %42 {offsets = [0, 32], sizes = [16, 16], strides = [1, 1]} : vector<16x96xf32> to vector<16x16xf32>
    %49 = vector.shape_cast %48 : vector<16x16xf32> to vector<2x8x16xf32>
    %50 = vector.extract_strided_slice %42 {offsets = [0, 64], sizes = [16, 16], strides = [1, 1]} : vector<16x96xf32> to vector<16x16xf32>
    %51 = vector.shape_cast %50 : vector<16x16xf32> to vector<2x8x16xf32>
    %cst_27 = arith.constant dense<0.000000e+00> : vector<2x8x8xf32>
    %52 = tpu.matmul %47, %49, %cst_27 {dimension_numbers = #tpu.dot_dimension_numbers<[2], [2], [1], [1], [0, 0, 0, 1, 1, 1], [0], [0]>} : vector<2x8x16xf32>, vector<2x8x16xf32>, vector<2x8x8xf32> -> vector<2x8x8xf32>
    %cst_28 = arith.constant 2.500000e-01 : f32
    %53 = vector.broadcast %cst_28 : f32 to vector<2x8x8xf32>
    %54 = arith.mulf %52, %53 : vector<2x8x8xf32>
    %55 = vector.broadcast %35 : vector<2x1x8xf32> to vector<2x8x8xf32>
    %56 = arith.addf %54, %55 : vector<2x8x8xf32>
    %cst_29 = arith.constant dense<0xFF800000> : vector<2x8xf32>
    %57 = vector.multi_reduction <maximumf>, %56, %cst_29 [2] : vector<2x8x8xf32> to vector<2x8xf32>
    %58 = vector.shape_cast %57 : vector<2x8xf32> to vector<2x8x1xf32>
    %59 = vector.broadcast %58 : vector<2x8x1xf32> to vector<2x8x8xf32>
    %60 = arith.subf %56, %59 : vector<2x8x8xf32>
    %61 = math.exp %60 : vector<2x8x8xf32>
    %cst_30 = arith.constant dense<0.000000e+00> : vector<2x8xf32>
    %62 = vector.multi_reduction <add>, %61, %cst_30 [2] : vector<2x8x8xf32> to vector<2x8xf32>
    %63 = vector.shape_cast %62 : vector<2x8xf32> to vector<2x8x1xf32>
    %64 = vector.broadcast %63 : vector<2x8x1xf32> to vector<2x8x8xf32>
    %65 = arith.divf %61, %64 : vector<2x8x8xf32>
    %cst_31 = arith.constant dense<0.000000e+00> : vector<2x8x16xf32>
    %66 = tpu.matmul %65, %51, %cst_31 {dimension_numbers = #tpu.dot_dimension_numbers<[2], [1], [1], [2], [0, 0, 0, 1, 1, 2], [0], [0]>} : vector<2x8x8xf32>, vector<2x8x16xf32>, vector<2x8x16xf32> -> vector<2x8x16xf32>
    %67 = vector.shape_cast %66 : vector<2x8x16xf32> to vector<16x16xf32>
    %68 = vector.extract_strided_slice %44 {offsets = [0, 0], sizes = [16, 32], strides = [1, 1]} : vector<32x32xf32> to vector<16x32xf32>
    %cst_32 = arith.constant dense<0.000000e+00> : vector<16x32xf32>
    %69 = tpu.matmul %67, %68, %cst_32 {dimension_numbers = #tpu.dot_dimension_numbers<[1], [0], [0], [1], [0, 0, 1, 1], [], []>} : vector<16x16xf32>, vector<16x32xf32>, vector<16x32xf32> -> vector<16x32xf32>
    %70 = arith.addf %45, %69 : vector<16x32xf32>
    %71 = vector.extract_strided_slice %42 {offsets = [0, 16], sizes = [16, 16], strides = [1, 1]} : vector<16x96xf32> to vector<16x16xf32>
    %72 = vector.shape_cast %71 : vector<16x16xf32> to vector<2x8x16xf32>
    %73 = vector.extract_strided_slice %42 {offsets = [0, 48], sizes = [16, 16], strides = [1, 1]} : vector<16x96xf32> to vector<16x16xf32>
    %74 = vector.shape_cast %73 : vector<16x16xf32> to vector<2x8x16xf32>
    %75 = vector.extract_strided_slice %42 {offsets = [0, 80], sizes = [16, 16], strides = [1, 1]} : vector<16x96xf32> to vector<16x16xf32>
    %76 = vector.shape_cast %75 : vector<16x16xf32> to vector<2x8x16xf32>
    %cst_33 = arith.constant dense<0.000000e+00> : vector<2x8x8xf32>
    %77 = tpu.matmul %72, %74, %cst_33 {dimension_numbers = #tpu.dot_dimension_numbers<[2], [2], [1], [1], [0, 0, 0, 1, 1, 1], [0], [0]>} : vector<2x8x16xf32>, vector<2x8x16xf32>, vector<2x8x8xf32> -> vector<2x8x8xf32>
    %cst_34 = arith.constant 2.500000e-01 : f32
    %78 = vector.broadcast %cst_34 : f32 to vector<2x8x8xf32>
    %79 = arith.mulf %77, %78 : vector<2x8x8xf32>
    %80 = vector.broadcast %35 : vector<2x1x8xf32> to vector<2x8x8xf32>
    %81 = arith.addf %79, %80 : vector<2x8x8xf32>
    %cst_35 = arith.constant dense<0xFF800000> : vector<2x8xf32>
    %82 = vector.multi_reduction <maximumf>, %81, %cst_35 [2] : vector<2x8x8xf32> to vector<2x8xf32>
    %83 = vector.shape_cast %82 : vector<2x8xf32> to vector<2x8x1xf32>
    %84 = vector.broadcast %83 : vector<2x8x1xf32> to vector<2x8x8xf32>
    %85 = arith.subf %81, %84 : vector<2x8x8xf32>
    %86 = math.exp %85 : vector<2x8x8xf32>
    %cst_36 = arith.constant dense<0.000000e+00> : vector<2x8xf32>
    %87 = vector.multi_reduction <add>, %86, %cst_36 [2] : vector<2x8x8xf32> to vector<2x8xf32>
    %88 = vector.shape_cast %87 : vector<2x8xf32> to vector<2x8x1xf32>
    %89 = vector.broadcast %88 : vector<2x8x1xf32> to vector<2x8x8xf32>
    %90 = arith.divf %86, %89 : vector<2x8x8xf32>
    %cst_37 = arith.constant dense<0.000000e+00> : vector<2x8x16xf32>
    %91 = tpu.matmul %90, %76, %cst_37 {dimension_numbers = #tpu.dot_dimension_numbers<[2], [1], [1], [2], [0, 0, 0, 1, 1, 2], [0], [0]>} : vector<2x8x8xf32>, vector<2x8x16xf32>, vector<2x8x16xf32> -> vector<2x8x16xf32>
    %92 = vector.shape_cast %91 : vector<2x8x16xf32> to vector<16x16xf32>
    %93 = vector.extract_strided_slice %44 {offsets = [16, 0], sizes = [16, 32], strides = [1, 1]} : vector<32x32xf32> to vector<16x32xf32>
    %cst_38 = arith.constant dense<0.000000e+00> : vector<16x32xf32>
    %94 = tpu.matmul %92, %93, %cst_38 {dimension_numbers = #tpu.dot_dimension_numbers<[1], [0], [0], [1], [0, 0, 1, 1], [], []>} : vector<16x16xf32>, vector<16x32xf32>, vector<16x32xf32> -> vector<16x32xf32>
    %95 = arith.addf %70, %94 : vector<16x32xf32>
    %c0_39 = arith.constant 0 : index
    %c0_40 = arith.constant 0 : index
    %c0_41 = arith.constant 0 : index
    %96 = vector.load %arg9[%c0_39, %c0_40, %c0_41] : memref<2x1x32xf32, #tpu.memory_space<vmem>>, vector<1x1x32xf32>
    %97 = vector.shape_cast %96 : vector<1x1x32xf32> to vector<1x32xf32>
    %98 = vector.broadcast %97 : vector<1x32xf32> to vector<16x32xf32>
    %99 = arith.addf %95, %98 : vector<16x32xf32>
    %100 = arith.addf %99, %33 : vector<16x32xf32>
    %c0_42 = arith.constant 0 : index
    %c0_43 = arith.constant 0 : index
    %c0_44 = arith.constant 0 : index
    %101 = vector.load %arg10[%c0_42, %c0_43, %c0_44] : memref<2x1x32xf32, #tpu.memory_space<vmem>>, vector<1x1x32xf32>
    %102 = vector.shape_cast %101 : vector<1x1x32xf32> to vector<1x32xf32>
    %c0_45 = arith.constant 0 : index
    %c0_46 = arith.constant 0 : index
    %c0_47 = arith.constant 0 : index
    %103 = vector.load %arg11[%c0_45, %c0_46, %c0_47] : memref<2x1x32xf32, #tpu.memory_space<vmem>>, vector<1x1x32xf32>
    %104 = vector.shape_cast %103 : vector<1x1x32xf32> to vector<1x32xf32>
    %cst_48 = arith.constant dense<0.000000e+00> : vector<16xf32>
    %105 = vector.multi_reduction <add>, %100, %cst_48 [1] : vector<16x32xf32> to vector<16xf32>
    %106 = vector.shape_cast %105 : vector<16xf32> to vector<16x1xf32>
    %cst_49 = arith.constant 3.200000e+01 : f32
    %107 = vector.broadcast %cst_49 : f32 to vector<16x1xf32>
    %108 = arith.divf %106, %107 : vector<16x1xf32>
    %109 = vector.broadcast %108 : vector<16x1xf32> to vector<16x32xf32>
    %110 = arith.subf %100, %109 : vector<16x32xf32>
    %111 = arith.mulf %110, %110 : vector<16x32xf32>
    %cst_50 = arith.constant dense<0.000000e+00> : vector<16xf32>
    %112 = vector.multi_reduction <add>, %111, %cst_50 [1] : vector<16x32xf32> to vector<16xf32>
    %113 = vector.shape_cast %112 : vector<16xf32> to vector<16x1xf32>
    %cst_51 = arith.constant 3.200000e+01 : f32
    %114 = vector.broadcast %cst_51 : f32 to vector<16x1xf32>
    %115 = arith.divf %113, %114 : vector<16x1xf32>
    %116 = vector.broadcast %108 : vector<16x1xf32> to vector<16x32xf32>
    %117 = arith.subf %100, %116 : vector<16x32xf32>
    %cst_52 = arith.constant 9.99999996E-13 : f32
    %118 = vector.broadcast %cst_52 : f32 to vector<16x1xf32>
    %119 = arith.addf %115, %118 : vector<16x1xf32>
    %120 = math.rsqrt %119 : vector<16x1xf32>
    %121 = vector.broadcast %120 : vector<16x1xf32> to vector<16x32xf32>
    %122 = arith.mulf %117, %121 : vector<16x32xf32>
    %123 = vector.broadcast %102 : vector<1x32xf32> to vector<16x32xf32>
    %124 = arith.mulf %122, %123 : vector<16x32xf32>
    %125 = vector.broadcast %104 : vector<1x32xf32> to vector<16x32xf32>
    %126 = arith.addf %124, %125 : vector<16x32xf32>
    %c0_53 = arith.constant 0 : index
    %c0_54 = arith.constant 0 : index
    %c0_55 = arith.constant 0 : index
    %127 = vector.load %arg12[%c0_53, %c0_54, %c0_55] : memref<2x32x64xf32, #tpu.memory_space<vmem>>, vector<1x32x64xf32>
    %128 = vector.shape_cast %127 : vector<1x32x64xf32> to vector<32x64xf32>
    %cst_56 = arith.constant dense<0.000000e+00> : vector<16x64xf32>
    %129 = tpu.matmul %126, %128, %cst_56 {dimension_numbers = #tpu.dot_dimension_numbers<[1], [0], [0], [1], [0, 0, 1, 1], [], []>} : vector<16x32xf32>, vector<32x64xf32>, vector<16x64xf32> -> vector<16x64xf32>
    %c0_57 = arith.constant 0 : index
    %c0_58 = arith.constant 0 : index
    %c0_59 = arith.constant 0 : index
    %130 = vector.load %arg13[%c0_57, %c0_58, %c0_59] : memref<2x1x64xf32, #tpu.memory_space<vmem>>, vector<1x1x64xf32>
    %131 = vector.shape_cast %130 : vector<1x1x64xf32> to vector<1x64xf32>
    %132 = vector.broadcast %131 : vector<1x64xf32> to vector<16x64xf32>
    %133 = arith.addf %129, %132 : vector<16x64xf32>
    %cst_60 = arith.constant 5.000000e-01 : f32
    %134 = vector.broadcast %cst_60 : f32 to vector<16x64xf32>
    %135 = arith.mulf %134, %133 : vector<16x64xf32>
    %cst_61 = arith.constant 4.471500e-02 : f32
    %136 = vector.broadcast %cst_61 : f32 to vector<16x64xf32>
    %137 = arith.mulf %136, %133 : vector<16x64xf32>
    %138 = arith.mulf %137, %133 : vector<16x64xf32>
    %139 = arith.mulf %138, %133 : vector<16x64xf32>
    %140 = arith.addf %133, %139 : vector<16x64xf32>
    %cst_62 = arith.constant 0.797884583 : f32
    %141 = vector.broadcast %cst_62 : f32 to vector<16x64xf32>
    %142 = arith.mulf %141, %140 : vector<16x64xf32>
    %143 = math.tanh %142 : vector<16x64xf32>
    %cst_63 = arith.constant 1.000000e+00 : f32
    %144 = vector.broadcast %cst_63 : f32 to vector<16x64xf32>
    %145 = arith.addf %144, %143 : vector<16x64xf32>
    %146 = arith.mulf %135, %145 : vector<16x64xf32>
    %c0_64 = arith.constant 0 : index
    %c0_65 = arith.constant 0 : index
    %c0_66 = arith.constant 0 : index
    %147 = vector.load %arg14[%c0_64, %c0_65, %c0_66] : memref<2x64x32xf32, #tpu.memory_space<vmem>>, vector<1x64x32xf32>
    %148 = vector.shape_cast %147 : vector<1x64x32xf32> to vector<64x32xf32>
    %cst_67 = arith.constant dense<0.000000e+00> : vector<16x32xf32>
    %149 = tpu.matmul %146, %148, %cst_67 {dimension_numbers = #tpu.dot_dimension_numbers<[1], [0], [0], [1], [0, 0, 1, 1], [], []>} : vector<16x64xf32>, vector<64x32xf32>, vector<16x32xf32> -> vector<16x32xf32>
    %c0_68 = arith.constant 0 : index
    %c0_69 = arith.constant 0 : index
    %c0_70 = arith.constant 0 : index
    %150 = vector.load %arg15[%c0_68, %c0_69, %c0_70] : memref<2x1x32xf32, #tpu.memory_space<vmem>>, vector<1x1x32xf32>
    %151 = vector.shape_cast %150 : vector<1x1x32xf32> to vector<1x32xf32>
    %152 = vector.broadcast %151 : vector<1x32xf32> to vector<16x32xf32>
    %153 = arith.addf %149, %152 : vector<16x32xf32>
    %154 = arith.addf %153, %126 : vector<16x32xf32>
    %c0_71 = arith.constant 0 : index
    %c0_72 = arith.constant 0 : index
    %c0_73 = arith.constant 0 : index
    %155 = vector.load %arg16[%c0_71, %c0_72, %c0_73] : memref<2x1x32xf32, #tpu.memory_space<vmem>>, vector<1x1x32xf32>
    %156 = vector.shape_cast %155 : vector<1x1x32xf32> to vector<1x32xf32>
    %c0_74 = arith.constant 0 : index
    %c0_75 = arith.constant 0 : index
    %c0_76 = arith.constant 0 : index
    %157 = vector.load %arg17[%c0_74, %c0_75, %c0_76] : memref<2x1x32xf32, #tpu.memory_space<vmem>>, vector<1x1x32xf32>
    %158 = vector.shape_cast %157 : vector<1x1x32xf32> to vector<1x32xf32>
    %cst_77 = arith.constant dense<0.000000e+00> : vector<16xf32>
    %159 = vector.multi_reduction <add>, %154, %cst_77 [1] : vector<16x32xf32> to vector<16xf32>
    %160 = vector.shape_cast %159 : vector<16xf32> to vector<16x1xf32>
    %cst_78 = arith.constant 3.200000e+01 : f32
    %161 = vector.broadcast %cst_78 : f32 to vector<16x1xf32>
    %162 = arith.divf %160, %161 : vector<16x1xf32>
    %163 = vector.broadcast %162 : vector<16x1xf32> to vector<16x32xf32>
    %164 = arith.subf %154, %163 : vector<16x32xf32>
    %165 = arith.mulf %164, %164 : vector<16x32xf32>
    %cst_79 = arith.constant dense<0.000000e+00> : vector<16xf32>
    %166 = vector.multi_reduction <add>, %165, %cst_79 [1] : vector<16x32xf32> to vector<16xf32>
    %167 = vector.shape_cast %166 : vector<16xf32> to vector<16x1xf32>
    %cst_80 = arith.constant 3.200000e+01 : f32
    %168 = vector.broadcast %cst_80 : f32 to vector<16x1xf32>
    %169 = arith.divf %167, %168 : vector<16x1xf32>
    %170 = vector.broadcast %162 : vector<16x1xf32> to vector<16x32xf32>
    %171 = arith.subf %154, %170 : vector<16x32xf32>
    %cst_81 = arith.constant 9.99999996E-13 : f32
    %172 = vector.broadcast %cst_81 : f32 to vector<16x1xf32>
    %173 = arith.addf %169, %172 : vector<16x1xf32>
    %174 = math.rsqrt %173 : vector<16x1xf32>
    %175 = vector.broadcast %174 : vector<16x1xf32> to vector<16x32xf32>
    %176 = arith.mulf %171, %175 : vector<16x32xf32>
    %177 = vector.broadcast %156 : vector<1x32xf32> to vector<16x32xf32>
    %178 = arith.mulf %176, %177 : vector<16x32xf32>
    %179 = vector.broadcast %158 : vector<1x32xf32> to vector<16x32xf32>
    %180 = arith.addf %178, %179 : vector<16x32xf32>
    %c1 = arith.constant 1 : index
    %c0_82 = arith.constant 0 : index
    %c0_83 = arith.constant 0 : index
    %181 = vector.load %arg6[%c1, %c0_82, %c0_83] : memref<2x32x96xf32, #tpu.memory_space<vmem>>, vector<1x32x96xf32>
    %182 = vector.shape_cast %181 : vector<1x32x96xf32> to vector<32x96xf32>
    %cst_84 = arith.constant dense<0.000000e+00> : vector<16x96xf32>
    %183 = tpu.matmul %180, %182, %cst_84 {dimension_numbers = #tpu.dot_dimension_numbers<[1], [0], [0], [1], [0, 0, 1, 1], [], []>} : vector<16x32xf32>, vector<32x96xf32>, vector<16x96xf32> -> vector<16x96xf32>
    %c1_85 = arith.constant 1 : index
    %c0_86 = arith.constant 0 : index
    %c0_87 = arith.constant 0 : index
    %184 = vector.load %arg7[%c1_85, %c0_86, %c0_87] : memref<2x1x96xf32, #tpu.memory_space<vmem>>, vector<1x1x96xf32>
    %185 = vector.shape_cast %184 : vector<1x1x96xf32> to vector<1x96xf32>
    %186 = vector.broadcast %185 : vector<1x96xf32> to vector<16x96xf32>
    %187 = arith.addf %183, %186 : vector<16x96xf32>
    %c1_88 = arith.constant 1 : index
    %c0_89 = arith.constant 0 : index
    %c0_90 = arith.constant 0 : index
    %188 = vector.load %arg8[%c1_88, %c0_89, %c0_90] : memref<2x32x32xf32, #tpu.memory_space<vmem>>, vector<1x32x32xf32>
    %189 = vector.shape_cast %188 : vector<1x32x32xf32> to vector<32x32xf32>
    %cst_91 = arith.constant 0.000000e+00 : f32
    %190 = vector.broadcast %cst_91 : f32 to vector<16x32xf32>
    %191 = vector.extract_strided_slice %187 {offsets = [0, 0], sizes = [16, 16], strides = [1, 1]} : vector<16x96xf32> to vector<16x16xf32>
    %192 = vector.shape_cast %191 : vector<16x16xf32> to vector<2x8x16xf32>
    %193 = vector.extract_strided_slice %187 {offsets = [0, 32], sizes = [16, 16], strides = [1, 1]} : vector<16x96xf32> to vector<16x16xf32>
    %194 = vector.shape_cast %193 : vector<16x16xf32> to vector<2x8x16xf32>
    %195 = vector.extract_strided_slice %187 {offsets = [0, 64], sizes = [16, 16], strides = [1, 1]} : vector<16x96xf32> to vector<16x16xf32>
    %196 = vector.shape_cast %195 : vector<16x16xf32> to vector<2x8x16xf32>
    %cst_92 = arith.constant dense<0.000000e+00> : vector<2x8x8xf32>
    %197 = tpu.matmul %192, %194, %cst_92 {dimension_numbers = #tpu.dot_dimension_numbers<[2], [2], [1], [1], [0, 0, 0, 1, 1, 1], [0], [0]>} : vector<2x8x16xf32>, vector<2x8x16xf32>, vector<2x8x8xf32> -> vector<2x8x8xf32>
    %cst_93 = arith.constant 2.500000e-01 : f32
    %198 = vector.broadcast %cst_93 : f32 to vector<2x8x8xf32>
    %199 = arith.mulf %197, %198 : vector<2x8x8xf32>
    %200 = vector.broadcast %35 : vector<2x1x8xf32> to vector<2x8x8xf32>
    %201 = arith.addf %199, %200 : vector<2x8x8xf32>
    %cst_94 = arith.constant dense<0xFF800000> : vector<2x8xf32>
    %202 = vector.multi_reduction <maximumf>, %201, %cst_94 [2] : vector<2x8x8xf32> to vector<2x8xf32>
    %203 = vector.shape_cast %202 : vector<2x8xf32> to vector<2x8x1xf32>
    %204 = vector.broadcast %203 : vector<2x8x1xf32> to vector<2x8x8xf32>
    %205 = arith.subf %201, %204 : vector<2x8x8xf32>
    %206 = math.exp %205 : vector<2x8x8xf32>
    %cst_95 = arith.constant dense<0.000000e+00> : vector<2x8xf32>
    %207 = vector.multi_reduction <add>, %206, %cst_95 [2] : vector<2x8x8xf32> to vector<2x8xf32>
    %208 = vector.shape_cast %207 : vector<2x8xf32> to vector<2x8x1xf32>
    %209 = vector.broadcast %208 : vector<2x8x1xf32> to vector<2x8x8xf32>
    %210 = arith.divf %206, %209 : vector<2x8x8xf32>
    %cst_96 = arith.constant dense<0.000000e+00> : vector<2x8x16xf32>
    %211 = tpu.matmul %210, %196, %cst_96 {dimension_numbers = #tpu.dot_dimension_numbers<[2], [1], [1], [2], [0, 0, 0, 1, 1, 2], [0], [0]>} : vector<2x8x8xf32>, vector<2x8x16xf32>, vector<2x8x16xf32> -> vector<2x8x16xf32>
    %212 = vector.shape_cast %211 : vector<2x8x16xf32> to vector<16x16xf32>
    %213 = vector.extract_strided_slice %189 {offsets = [0, 0], sizes = [16, 32], strides = [1, 1]} : vector<32x32xf32> to vector<16x32xf32>
    %cst_97 = arith.constant dense<0.000000e+00> : vector<16x32xf32>
    %214 = tpu.matmul %212, %213, %cst_97 {dimension_numbers = #tpu.dot_dimension_numbers<[1], [0], [0], [1], [0, 0, 1, 1], [], []>} : vector<16x16xf32>, vector<16x32xf32>, vector<16x32xf32> -> vector<16x32xf32>
    %215 = arith.addf %190, %214 : vector<16x32xf32>
    %216 = vector.extract_strided_slice %187 {offsets = [0, 16], sizes = [16, 16], strides = [1, 1]} : vector<16x96xf32> to vector<16x16xf32>
    %217 = vector.shape_cast %216 : vector<16x16xf32> to vector<2x8x16xf32>
    %218 = vector.extract_strided_slice %187 {offsets = [0, 48], sizes = [16, 16], strides = [1, 1]} : vector<16x96xf32> to vector<16x16xf32>
    %219 = vector.shape_cast %218 : vector<16x16xf32> to vector<2x8x16xf32>
    %220 = vector.extract_strided_slice %187 {offsets = [0, 80], sizes = [16, 16], strides = [1, 1]} : vector<16x96xf32> to vector<16x16xf32>
    %221 = vector.shape_cast %220 : vector<16x16xf32> to vector<2x8x16xf32>
    %cst_98 = arith.constant dense<0.000000e+00> : vector<2x8x8xf32>
    %222 = tpu.matmul %217, %219, %cst_98 {dimension_numbers = #tpu.dot_dimension_numbers<[2], [2], [1], [1], [0, 0, 0, 1, 1, 1], [0], [0]>} : vector<2x8x16xf32>, vector<2x8x16xf32>, vector<2x8x8xf32> -> vector<2x8x8xf32>
    %cst_99 = arith.constant 2.500000e-01 : f32
    %223 = vector.broadcast %cst_99 : f32 to vector<2x8x8xf32>
    %224 = arith.mulf %222, %223 : vector<2x8x8xf32>
    %225 = vector.broadcast %35 : vector<2x1x8xf32> to vector<2x8x8xf32>
    %226 = arith.addf %224, %225 : vector<2x8x8xf32>
    %cst_100 = arith.constant dense<0xFF800000> : vector<2x8xf32>
    %227 = vector.multi_reduction <maximumf>, %226, %cst_100 [2] : vector<2x8x8xf32> to vector<2x8xf32>
    %228 = vector.shape_cast %227 : vector<2x8xf32> to vector<2x8x1xf32>
    %229 = vector.broadcast %228 : vector<2x8x1xf32> to vector<2x8x8xf32>
    %230 = arith.subf %226, %229 : vector<2x8x8xf32>
    %231 = math.exp %230 : vector<2x8x8xf32>
    %cst_101 = arith.constant dense<0.000000e+00> : vector<2x8xf32>
    %232 = vector.multi_reduction <add>, %231, %cst_101 [2] : vector<2x8x8xf32> to vector<2x8xf32>
    %233 = vector.shape_cast %232 : vector<2x8xf32> to vector<2x8x1xf32>
    %234 = vector.broadcast %233 : vector<2x8x1xf32> to vector<2x8x8xf32>
    %235 = arith.divf %231, %234 : vector<2x8x8xf32>
    %cst_102 = arith.constant dense<0.000000e+00> : vector<2x8x16xf32>
    %236 = tpu.matmul %235, %221, %cst_102 {dimension_numbers = #tpu.dot_dimension_numbers<[2], [1], [1], [2], [0, 0, 0, 1, 1, 2], [0], [0]>} : vector<2x8x8xf32>, vector<2x8x16xf32>, vector<2x8x16xf32> -> vector<2x8x16xf32>
    %237 = vector.shape_cast %236 : vector<2x8x16xf32> to vector<16x16xf32>
    %238 = vector.extract_strided_slice %189 {offsets = [16, 0], sizes = [16, 32], strides = [1, 1]} : vector<32x32xf32> to vector<16x32xf32>
    %cst_103 = arith.constant dense<0.000000e+00> : vector<16x32xf32>
    %239 = tpu.matmul %237, %238, %cst_103 {dimension_numbers = #tpu.dot_dimension_numbers<[1], [0], [0], [1], [0, 0, 1, 1], [], []>} : vector<16x16xf32>, vector<16x32xf32>, vector<16x32xf32> -> vector<16x32xf32>
    %240 = arith.addf %215, %239 : vector<16x32xf32>
    %c1_104 = arith.constant 1 : index
    %c0_105 = arith.constant 0 : index
    %c0_106 = arith.constant 0 : index
    %241 = vector.load %arg9[%c1_104, %c0_105, %c0_106] : memref<2x1x32xf32, #tpu.memory_space<vmem>>, vector<1x1x32xf32>
    %242 = vector.shape_cast %241 : vector<1x1x32xf32> to vector<1x32xf32>
    %243 = vector.broadcast %242 : vector<1x32xf32> to vector<16x32xf32>
    %244 = arith.addf %240, %243 : vector<16x32xf32>
    %245 = arith.addf %244, %180 : vector<16x32xf32>
    %c1_107 = arith.constant 1 : index
    %c0_108 = arith.constant 0 : index
    %c0_109 = arith.constant 0 : index
    %246 = vector.load %arg10[%c1_107, %c0_108, %c0_109] : memref<2x1x32xf32, #tpu.memory_space<vmem>>, vector<1x1x32xf32>
    %247 = vector.shape_cast %246 : vector<1x1x32xf32> to vector<1x32xf32>
    %c1_110 = arith.constant 1 : index
    %c0_111 = arith.constant 0 : index
    %c0_112 = arith.constant 0 : index
    %248 = vector.load %arg11[%c1_110, %c0_111, %c0_112] : memref<2x1x32xf32, #tpu.memory_space<vmem>>, vector<1x1x32xf32>
    %249 = vector.shape_cast %248 : vector<1x1x32xf32> to vector<1x32xf32>
    %cst_113 = arith.constant dense<0.000000e+00> : vector<16xf32>
    %250 = vector.multi_reduction <add>, %245, %cst_113 [1] : vector<16x32xf32> to vector<16xf32>
    %251 = vector.shape_cast %250 : vector<16xf32> to vector<16x1xf32>
    %cst_114 = arith.constant 3.200000e+01 : f32
    %252 = vector.broadcast %cst_114 : f32 to vector<16x1xf32>
    %253 = arith.divf %251, %252 : vector<16x1xf32>
    %254 = vector.broadcast %253 : vector<16x1xf32> to vector<16x32xf32>
    %255 = arith.subf %245, %254 : vector<16x32xf32>
    %256 = arith.mulf %255, %255 : vector<16x32xf32>
    %cst_115 = arith.constant dense<0.000000e+00> : vector<16xf32>
    %257 = vector.multi_reduction <add>, %256, %cst_115 [1] : vector<16x32xf32> to vector<16xf32>
    %258 = vector.shape_cast %257 : vector<16xf32> to vector<16x1xf32>
    %cst_116 = arith.constant 3.200000e+01 : f32
    %259 = vector.broadcast %cst_116 : f32 to vector<16x1xf32>
    %260 = arith.divf %258, %259 : vector<16x1xf32>
    %261 = vector.broadcast %253 : vector<16x1xf32> to vector<16x32xf32>
    %262 = arith.subf %245, %261 : vector<16x32xf32>
    %cst_117 = arith.constant 9.99999996E-13 : f32
    %263 = vector.broadcast %cst_117 : f32 to vector<16x1xf32>
    %264 = arith.addf %260, %263 : vector<16x1xf32>
    %265 = math.rsqrt %264 : vector<16x1xf32>
    %266 = vector.broadcast %265 : vector<16x1xf32> to vector<16x32xf32>
    %267 = arith.mulf %262, %266 : vector<16x32xf32>
    %268 = vector.broadcast %247 : vector<1x32xf32> to vector<16x32xf32>
    %269 = arith.mulf %267, %268 : vector<16x32xf32>
    %270 = vector.broadcast %249 : vector<1x32xf32> to vector<16x32xf32>
    %271 = arith.addf %269, %270 : vector<16x32xf32>
    %c1_118 = arith.constant 1 : index
    %c0_119 = arith.constant 0 : index
    %c0_120 = arith.constant 0 : index
    %272 = vector.load %arg12[%c1_118, %c0_119, %c0_120] : memref<2x32x64xf32, #tpu.memory_space<vmem>>, vector<1x32x64xf32>
    %273 = vector.shape_cast %272 : vector<1x32x64xf32> to vector<32x64xf32>
    %cst_121 = arith.constant dense<0.000000e+00> : vector<16x64xf32>
    %274 = tpu.matmul %271, %273, %cst_121 {dimension_numbers = #tpu.dot_dimension_numbers<[1], [0], [0], [1], [0, 0, 1, 1], [], []>} : vector<16x32xf32>, vector<32x64xf32>, vector<16x64xf32> -> vector<16x64xf32>
    %c1_122 = arith.constant 1 : index
    %c0_123 = arith.constant 0 : index
    %c0_124 = arith.constant 0 : index
    %275 = vector.load %arg13[%c1_122, %c0_123, %c0_124] : memref<2x1x64xf32, #tpu.memory_space<vmem>>, vector<1x1x64xf32>
    %276 = vector.shape_cast %275 : vector<1x1x64xf32> to vector<1x64xf32>
    %277 = vector.broadcast %276 : vector<1x64xf32> to vector<16x64xf32>
    %278 = arith.addf %274, %277 : vector<16x64xf32>
    %cst_125 = arith.constant 5.000000e-01 : f32
    %279 = vector.broadcast %cst_125 : f32 to vector<16x64xf32>
    %280 = arith.mulf %279, %278 : vector<16x64xf32>
    %cst_126 = arith.constant 4.471500e-02 : f32
    %281 = vector.broadcast %cst_126 : f32 to vector<16x64xf32>
    %282 = arith.mulf %281, %278 : vector<16x64xf32>
    %283 = arith.mulf %282, %278 : vector<16x64xf32>
    %284 = arith.mulf %283, %278 : vector<16x64xf32>
    %285 = arith.addf %278, %284 : vector<16x64xf32>
    %cst_127 = arith.constant 0.797884583 : f32
    %286 = vector.broadcast %cst_127 : f32 to vector<16x64xf32>
    %287 = arith.mulf %286, %285 : vector<16x64xf32>
    %288 = math.tanh %287 : vector<16x64xf32>
    %cst_128 = arith.constant 1.000000e+00 : f32
    %289 = vector.broadcast %cst_128 : f32 to vector<16x64xf32>
    %290 = arith.addf %289, %288 : vector<16x64xf32>
    %291 = arith.mulf %280, %290 : vector<16x64xf32>
    %c1_129 = arith.constant 1 : index
    %c0_130 = arith.constant 0 : index
    %c0_131 = arith.constant 0 : index
    %292 = vector.load %arg14[%c1_129, %c0_130, %c0_131] : memref<2x64x32xf32, #tpu.memory_space<vmem>>, vector<1x64x32xf32>
    %293 = vector.shape_cast %292 : vector<1x64x32xf32> to vector<64x32xf32>
    %cst_132 = arith.constant dense<0.000000e+00> : vector<16x32xf32>
    %294 = tpu.matmul %291, %293, %cst_132 {dimension_numbers = #tpu.dot_dimension_numbers<[1], [0], [0], [1], [0, 0, 1, 1], [], []>} : vector<16x64xf32>, vector<64x32xf32>, vector<16x32xf32> -> vector<16x32xf32>
    %c1_133 = arith.constant 1 : index
    %c0_134 = arith.constant 0 : index
    %c0_135 = arith.constant 0 : index
    %295 = vector.load %arg15[%c1_133, %c0_134, %c0_135] : memref<2x1x32xf32, #tpu.memory_space<vmem>>, vector<1x1x32xf32>
    %296 = vector.shape_cast %295 : vector<1x1x32xf32> to vector<1x32xf32>
    %297 = vector.broadcast %296 : vector<1x32xf32> to vector<16x32xf32>
    %298 = arith.addf %294, %297 : vector<16x32xf32>
    %299 = arith.addf %298, %271 : vector<16x32xf32>
    %c1_136 = arith.constant 1 : index
    %c0_137 = arith.constant 0 : index
    %c0_138 = arith.constant 0 : index
    %300 = vector.load %arg16[%c1_136, %c0_137, %c0_138] : memref<2x1x32xf32, #tpu.memory_space<vmem>>, vector<1x1x32xf32>
    %301 = vector.shape_cast %300 : vector<1x1x32xf32> to vector<1x32xf32>
    %c1_139 = arith.constant 1 : index
    %c0_140 = arith.constant 0 : index
    %c0_141 = arith.constant 0 : index
    %302 = vector.load %arg17[%c1_139, %c0_140, %c0_141] : memref<2x1x32xf32, #tpu.memory_space<vmem>>, vector<1x1x32xf32>
    %303 = vector.shape_cast %302 : vector<1x1x32xf32> to vector<1x32xf32>
    %cst_142 = arith.constant dense<0.000000e+00> : vector<16xf32>
    %304 = vector.multi_reduction <add>, %299, %cst_142 [1] : vector<16x32xf32> to vector<16xf32>
    %305 = vector.shape_cast %304 : vector<16xf32> to vector<16x1xf32>
    %cst_143 = arith.constant 3.200000e+01 : f32
    %306 = vector.broadcast %cst_143 : f32 to vector<16x1xf32>
    %307 = arith.divf %305, %306 : vector<16x1xf32>
    %308 = vector.broadcast %307 : vector<16x1xf32> to vector<16x32xf32>
    %309 = arith.subf %299, %308 : vector<16x32xf32>
    %310 = arith.mulf %309, %309 : vector<16x32xf32>
    %cst_144 = arith.constant dense<0.000000e+00> : vector<16xf32>
    %311 = vector.multi_reduction <add>, %310, %cst_144 [1] : vector<16x32xf32> to vector<16xf32>
    %312 = vector.shape_cast %311 : vector<16xf32> to vector<16x1xf32>
    %cst_145 = arith.constant 3.200000e+01 : f32
    %313 = vector.broadcast %cst_145 : f32 to vector<16x1xf32>
    %314 = arith.divf %312, %313 : vector<16x1xf32>
    %315 = vector.broadcast %307 : vector<16x1xf32> to vector<16x32xf32>
    %316 = arith.subf %299, %315 : vector<16x32xf32>
    %cst_146 = arith.constant 9.99999996E-13 : f32
    %317 = vector.broadcast %cst_146 : f32 to vector<16x1xf32>
    %318 = arith.addf %314, %317 : vector<16x1xf32>
    %319 = math.rsqrt %318 : vector<16x1xf32>
    %320 = vector.broadcast %319 : vector<16x1xf32> to vector<16x32xf32>
    %321 = arith.mulf %316, %320 : vector<16x32xf32>
    %322 = vector.broadcast %301 : vector<1x32xf32> to vector<16x32xf32>
    %323 = arith.mulf %321, %322 : vector<16x32xf32>
    %324 = vector.broadcast %303 : vector<1x32xf32> to vector<16x32xf32>
    %325 = arith.addf %323, %324 : vector<16x32xf32>
    %326 = vector.shape_cast %325 : vector<16x32xf32> to vector<2x8x32xf32>
    %327 = vector.extract_strided_slice %326 {offsets = [0, 0, 0], sizes = [2, 1, 32], strides = [1, 1, 1]} : vector<2x8x32xf32> to vector<2x1x32xf32>
    %328 = vector.shape_cast %327 : vector<2x1x32xf32> to vector<2x32xf32>
    %c0_147 = arith.constant 0 : index
    %c0_148 = arith.constant 0 : index
    %329 = vector.load %arg18[%c0_147, %c0_148] : memref<32x16xf32, #tpu.memory_space<vmem>>, vector<32x16xf32>
    %cst_149 = arith.constant dense<0.000000e+00> : vector<2x16xf32>
    %330 = tpu.matmul %328, %329, %cst_149 {dimension_numbers = #tpu.dot_dimension_numbers<[1], [0], [0], [1], [0, 0, 1, 1], [], []>} : vector<2x32xf32>, vector<32x16xf32>, vector<2x16xf32> -> vector<2x16xf32>
    %c0_150 = arith.constant 0 : index
    %c0_151 = arith.constant 0 : index
    %331 = vector.load %arg19[%c0_150, %c0_151] : memref<1x16xf32, #tpu.memory_space<vmem>>, vector<1x16xf32>
    %332 = vector.broadcast %331 : vector<1x16xf32> to vector<2x16xf32>
    %333 = arith.addf %330, %332 : vector<2x16xf32>
    %cst_152 = arith.constant 5.000000e-01 : f32
    %334 = vector.broadcast %cst_152 : f32 to vector<2x16xf32>
    %335 = arith.mulf %334, %333 : vector<2x16xf32>
    %cst_153 = arith.constant 4.471500e-02 : f32
    %336 = vector.broadcast %cst_153 : f32 to vector<2x16xf32>
    %337 = arith.mulf %336, %333 : vector<2x16xf32>
    %338 = arith.mulf %337, %333 : vector<2x16xf32>
    %339 = arith.mulf %338, %333 : vector<2x16xf32>
    %340 = arith.addf %333, %339 : vector<2x16xf32>
    %cst_154 = arith.constant 0.797884583 : f32
    %341 = vector.broadcast %cst_154 : f32 to vector<2x16xf32>
    %342 = arith.mulf %341, %340 : vector<2x16xf32>
    %343 = math.tanh %342 : vector<2x16xf32>
    %cst_155 = arith.constant 1.000000e+00 : f32
    %344 = vector.broadcast %cst_155 : f32 to vector<2x16xf32>
    %345 = arith.addf %344, %343 : vector<2x16xf32>
    %346 = arith.mulf %335, %345 : vector<2x16xf32>
    %c0_156 = arith.constant 0 : index
    %c0_157 = arith.constant 0 : index
    %347 = vector.load %arg20[%c0_156, %c0_157] : memref<16x128xf32, #tpu.memory_space<vmem>>, vector<16x128xf32>
    %cst_158 = arith.constant dense<0.000000e+00> : vector<2x128xf32>
    %348 = tpu.matmul %346, %347, %cst_158 {dimension_numbers = #tpu.dot_dimension_numbers<[1], [0], [0], [1], [0, 0, 1, 1], [], []>} : vector<2x16xf32>, vector<16x128xf32>, vector<2x128xf32> -> vector<2x128xf32>
    %c0_159 = arith.constant 0 : index
    %c0_160 = arith.constant 0 : index
    %349 = vector.load %arg21[%c0_159, %c0_160] : memref<1x128xf32, #tpu.memory_space<vmem>>, vector<1x128xf32>
    %350 = vector.broadcast %349 : vector<1x128xf32> to vector<2x128xf32>
    %351 = arith.addf %348, %350 : vector<2x128xf32>
    %c0_161 = arith.constant 0 : index
    %c0_162 = arith.constant 0 : index
    %352 = vector.load %arg22[%c0_161, %c0_162] : memref<2x128xf32, #tpu.memory_space<vmem>>, vector<2x128xf32>
    tpu.vector_store %arg22[%c0_161, %c0_162], %351 {strides = array<i32>} : memref<2x128xf32, #tpu.memory_space<vmem>>, vector<2x128xf32>,
    return
  }
}

</mosaic_0001>

<llo_original>
// kernel: custom_model_forward.1
$region0: #{custom_model_forward.1}
  #allocation0 [shape = 'u32[]', space=smem, size = 0x4, offset = 0x4, fixed_abs, tag = 'smem constant byte address 0x4 - core index']
  #allocation1 [shape = 'u32[144,128]{1,0:T(1,128)}', space=vmem, size = 0x12000, scoped, tag = 'internal scratch']
  %s0 = inlined_call_operand.vmem [shape: s32[16,1], index: 0, kind: input, shape index: {}]
  %s1 = inlined_call_operand.vmem [shape: f32[2,8], index: 1, kind: input, shape index: {}]
  %s2 = inlined_call_operand.vmem [shape: f32[128,32], index: 2, kind: input, shape index: {}]
  %s3 = inlined_call_operand.vmem [shape: f32[16,32], index: 3, kind: input, shape index: {}]
  %s4 = inlined_call_operand.vmem [shape: f32[1,32], index: 4, kind: input, shape index: {}]
  %s5 = inlined_call_operand.vmem [shape: f32[1,32], index: 5, kind: input, shape index: {}]
  %s6 = inlined_call_operand.vmem [shape: f32[2,32,96], index: 6, kind: input, shape index: {}]
  %s7 = inlined_call_operand.vmem [shape: f32[2,1,96], index: 7, kind: input, shape index: {}]
  %s8 = inlined_call_operand.vmem [shape: f32[2,32,32], index: 8, kind: input, shape index: {}]
  %s9 = inlined_call_operand.vmem [shape: f32[2,1,32], index: 9, kind: input, shape index: {}]
  %s10 = inlined_call_operand.vmem [shape: f32[2,1,32], index: 10, kind: input, shape index: {}]
  %s11 = inlined_call_operand.vmem [shape: f32[2,1,32], index: 11, kind: input, shape index: {}]
  %s12 = inlined_call_operand.vmem [shape: f32[2,32,64], index: 12, kind: input, shape index: {}]
  %s13 = inlined_call_operand.vmem [shape: f32[2,1,64], index: 13, kind: input, shape index: {}]
  %s14 = inlined_call_operand.vmem [shape: f32[2,64,32], index: 14, kind: input, shape index: {}]
  %s15 = inlined_call_operand.vmem [shape: f32[2,1,32], index: 15, kind: input, shape index: {}]
  %s16 = inlined_call_operand.vmem [shape: f32[2,1,32], index: 16, kind: input, shape index: {}]
  %s17 = inlined_call_operand.vmem [shape: f32[2,1,32], index: 17, kind: input, shape index: {}]
  %s18 = inlined_call_operand.vmem [shape: f32[32,16], index: 18, kind: input, shape index: {}]
  %s19 = inlined_call_operand.vmem [shape: f32[1,16], index: 19, kind: input, shape index: {}]
  %s20 = inlined_call_operand.vmem [shape: f32[16,128], index: 20, kind: input, shape index: {}]
  %s21 = inlined_call_operand.vmem [shape: f32[1,128], index: 21, kind: input, shape index: {}]
  %s22 = inlined_call_operand.hbm [shape: f32[2,128], index: 22, kind: output, shape index: {}]
  %s23 = sld [smem:[#allocation0]]
  $region98: #{custom_model_forward.1} parent=0
    _
  %s25 = ssub.s32 1, %s23
  %s26 = scalar_select 0, %s25, %s23
  $region1: #{custom_model_forward.1} parent=0
    #allocation2 [shape = 'u8[1024]{0}', space=vmem, size = 0x400, scoped, tag = 'output window, operand 0, single buffered']
    #allocation3 [shape = 's32[1]{0}', space=sflag, size = 0x4, scoped, tag = 'scoped memory for custom_model_forward.1']
    %27 = vsyncpa [#allocation3], 0
    // Predicated region
    $region2: #{custom_model_forward.1} parent=1 // pred_check
      _
    $region3: #{custom_model_forward.1} parent=1 // pred_check_branch
      %29 = sbr.rel (0) target = $region5
    $region4: #{custom_model_forward.1} parent=1 // pred_region
      _
    $region5: #{custom_model_forward.1} parent=1 // pred_fallthru
      _
    // Predicated region
    $region6: #{custom_model_forward.1} parent=1 // pred_check
      _
    $region7: #{custom_model_forward.1} parent=1 // pred_check_branch
      %31 = sbr.rel (0) target = $region9
    $region8: #{custom_model_forward.1} parent=1 // pred_region
      _
    $region9: #{custom_model_forward.1} parent=1 // pred_fallthru
      _
    // Predicated region
    $region10: #{custom_model_forward.1} parent=1 // pred_check
      _
    $region11: #{custom_model_forward.1} parent=1 // pred_check_branch
      %33 = sbr.rel (0) target = $region13
    $region12: #{custom_model_forward.1} parent=1 // pred_region
      _
    $region13: #{custom_model_forward.1} parent=1 // pred_fallthru
      _
    // Predicated region
    $region14: #{custom_model_forward.1} parent=1 // pred_check
      _
    $region15: #{custom_model_forward.1} parent=1 // pred_check_branch
      %35 = sbr.rel (0) target = $region17
    $region16: #{custom_model_forward.1} parent=1 // pred_region
      _
    $region17: #{custom_model_forward.1} parent=1 // pred_fallthru
      _
    // Predicated region
    $region18: #{custom_model_forward.1} parent=1 // pred_check
      _
    $region19: #{custom_model_forward.1} parent=1 // pred_check_branch
      %37 = sbr.rel (0) target = $region21
    $region20: #{custom_model_forward.1} parent=1 // pred_region
      _
    $region21: #{custom_model_forward.1} parent=1 // pred_fallthru
      _
    // Predicated region
    $region22: #{custom_model_forward.1} parent=1 // pred_check
      _
    $region23: #{custom_model_forward.1} parent=1 // pred_check_branch
      %39 = sbr.rel (0) target = $region25
    $region24: #{custom_model_forward.1} parent=1 // pred_region
      _
    $region25: #{custom_model_forward.1} parent=1 // pred_fallthru
      _
    // Predicated region
    $region26: #{custom_model_forward.1} parent=1 // pred_check
      _
    $region27: #{custom_model_forward.1} parent=1 // pred_check_branch
      %41 = sbr.rel (0) target = $region29
    $region28: #{custom_model_forward.1} parent=1 // pred_region
      _
    $region29: #{custom_model_forward.1} parent=1 // pred_fallthru
      _
    // Predicated region
    $region30: #{custom_model_forward.1} parent=1 // pred_check
      _
    $region31: #{custom_model_forward.1} parent=1 // pred_check_branch
      %43 = sbr.rel (0) target = $region33
    $region32: #{custom_model_forward.1} parent=1 // pred_region
      _
    $region33: #{custom_model_forward.1} parent=1 // pred_fallthru
      _
    // Predicated region
    $region34: #{custom_model_forward.1} parent=1 // pred_check
      _
    $region35: #{custom_model_forward.1} parent=1 // pred_check_branch
      %45 = sbr.rel (0) target = $region37
    $region36: #{custom_model_forward.1} parent=1 // pred_region
      _
    $region37: #{custom_model_forward.1} parent=1 // pred_fallthru
      _
    // Predicated region
    $region38: #{custom_model_forward.1} parent=1 // pred_check
      _
    $region39: #{custom_model_forward.1} parent=1 // pred_check_branch
      %47 = sbr.rel (0) target = $region41
    $region40: #{custom_model_forward.1} parent=1 // pred_region
      _
    $region41: #{custom_model_forward.1} parent=1 // pred_fallthru
      _
    // Predicated region
    $region42: #{custom_model_forward.1} parent=1 // pred_check
      _
    $region43: #{custom_model_forward.1} parent=1 // pred_check_branch
      %49 = sbr.rel (0) target = $region45
    $region44: #{custom_model_forward.1} parent=1 // pred_region
      _
    $region45: #{custom_model_forward.1} parent=1 // pred_fallthru
      _
    // Predicated region
    $region46: #{custom_model_forward.1} parent=1 // pred_check
      _
    $region47: #{custom_model_forward.1} parent=1 // pred_check_branch
      %51 = sbr.rel (0) target = $region49
    $region48: #{custom_model_forward.1} parent=1 // pred_region
      _
    $region49: #{custom_model_forward.1} parent=1 // pred_fallthru
      _
    // Predicated region
    $region50: #{custom_model_forward.1} parent=1 // pred_check
      _
    $region51: #{custom_model_forward.1} parent=1 // pred_check_branch
      %53 = sbr.rel (0) target = $region53
    $region52: #{custom_model_forward.1} parent=1 // pred_region
      _
    $region53: #{custom_model_forward.1} parent=1 // pred_fallthru
      _
    // Predicated region
    $region54: #{custom_model_forward.1} parent=1 // pred_check
      _
    $region55: #{custom_model_forward.1} parent=1 // pred_check_branch
      %55 = sbr.rel (0) target = $region57
    $region56: #{custom_model_forward.1} parent=1 // pred_region
      _
    $region57: #{custom_model_forward.1} parent=1 // pred_fallthru
      _
    // Predicated region
    $region58: #{custom_model_forward.1} parent=1 // pred_check
      _
    $region59: #{custom_model_forward.1} parent=1 // pred_check_branch
      %57 = sbr.rel (0) target = $region61
    $region60: #{custom_model_forward.1} parent=1 // pred_region
      _
    $region61: #{custom_model_forward.1} parent=1 // pred_fallthru
      _
    // Predicated region
    $region62: #{custom_model_forward.1} parent=1 // pred_check
      _
    $region63: #{custom_model_forward.1} parent=1 // pred_check_branch
      %59 = sbr.rel (0) target = $region65
    $region64: #{custom_model_forward.1} parent=1 // pred_region
      _
    $region65: #{custom_model_forward.1} parent=1 // pred_fallthru
      _
    // Predicated region
    $region66: #{custom_model_forward.1} parent=1 // pred_check
      _
    $region67: #{custom_model_forward.1} parent=1 // pred_check_branch
      %61 = sbr.rel (0) target = $region69
    $region68: #{custom_model_forward.1} parent=1 // pred_region
      _
    $region69: #{custom_model_forward.1} parent=1 // pred_fallthru
      _
    // Predicated region
    $region70: #{custom_model_forward.1} parent=1 // pred_check
      _
    $region71: #{custom_model_forward.1} parent=1 // pred_check_branch
      %63 = sbr.rel (0) target = $region73
    $region72: #{custom_model_forward.1} parent=1 // pred_region
      _
    $region73: #{custom_model_forward.1} parent=1 // pred_fallthru
      _
    // Predicated region
    $region74: #{custom_model_forward.1} parent=1 // pred_check
      _
    $region75: #{custom_model_forward.1} parent=1 // pred_check_branch
      %65 = sbr.rel (0) target = $region77
    $region76: #{custom_model_forward.1} parent=1 // pred_region
      _
    $region77: #{custom_model_forward.1} parent=1 // pred_fallthru
      _
    // Predicated region
    $region78: #{custom_model_forward.1} parent=1 // pred_check
      _
    $region79: #{custom_model_forward.1} parent=1 // pred_check_branch
      %67 = sbr.rel (0) target = $region81
    $region80: #{custom_model_forward.1} parent=1 // pred_region
      _
    $region81: #{custom_model_forward.1} parent=1 // pred_fallthru
      _
    // Predicated region
    $region82: #{custom_model_forward.1} parent=1 // pred_check
      _
    $region83: #{custom_model_forward.1} parent=1 // pred_check_branch
      %69 = sbr.rel (0) target = $region85
    $region84: #{custom_model_forward.1} parent=1 // pred_region
      _
    $region85: #{custom_model_forward.1} parent=1 // pred_fallthru
      _
    // Predicated region
    $region86: #{custom_model_forward.1} parent=1 // pred_check
      _
    $region87: #{custom_model_forward.1} parent=1 // pred_check_branch
      %71 = sbr.rel (0) target = $region89
    $region88: #{custom_model_forward.1} parent=1 // pred_region
      _
    $region89: #{custom_model_forward.1} parent=1 // pred_fallthru
      _
    %v72 = vld [vmem:[%s0] sm:$0xff]
    %v73 = vld [vmem:[%s0 + $0x8] sm:$0xff]
    %v74 = vlaneseq
    %v75 = vand.u32 %v74, 127
    %76 = vset.pattern.permute.xlu0 0
    %77 = vperm.xlu0 %76, %v72
    %v78 = vpop.permute.xlu0 %77
    %79 = vset.pattern.permute.xlu0 0
    %80 = vperm.xlu0 %79, %v73
    %v81 = vpop.permute.xlu0 %80
    %vm82 = vcmp.eq.s32.totalorder %v75, %v78
    %vm83 = vcmp.eq.s32.totalorder %v75, %v81
    %v84 = vsel %vm82, 1, 0
    %v85 = vsel %vm83, 1, 0
    %v86 = vcvt.s32.f32 %v84
    %v87 = vcvt.s32.f32 %v85
    %v88 = vld [vmem:[%s2] sm:$0xff]
    %v89 = vld [vmem:[%s2 + $0x8] sm:$0xff]
    %v90 = vld [vmem:[%s2 + $0x10] sm:$0xff]
    %v91 = vld [vmem:[%s2 + $0x18] sm:$0xff]
    %v92 = vld [vmem:[%s2 + $0x20] sm:$0xff]
    %v93 = vld [vmem:[%s2 + $0x28] sm:$0xff]
    %v94 = vld [vmem:[%s2 + $0x30] sm:$0xff]
    %v95 = vld [vmem:[%s2 + $0x38] sm:$0xff]
    %v96 = vld [vmem:[%s2 + $0x40] sm:$0xff]
    %v97 = vld [vmem:[%s2 + $0x48] sm:$0xff]
    %v98 = vld [vmem:[%s2 + $0x50] sm:$0xff]
    %v99 = vld [vmem:[%s2 + $0x58] sm:$0xff]
    %v100 = vld [vmem:[%s2 + $0x60] sm:$0xff]
    %v101 = vld [vmem:[%s2 + $0x68] sm:$0xff]
    %v102 = vld [vmem:[%s2 + $0x70] sm:$0xff]
    %v103 = vld [vmem:[%s2 + $0x78] sm:$0xff]
    %v104 = vld [vmem:[%s3] sm:$0xff]
    %v105 = vld [vmem:[%s3 + $0x8] sm:$0xff]
    %106 = vmatprep.subr.mxu0 0.0
    %107 = vmatpush1.msra.mxu0 %v103
    %108 = vmatprep.subr.mxu0 0.0
    %109 = vmatpush1.msra.mxu0 %v102
    %110 = vmatprep.subr.mxu0 0.0
    %111 = vmatpush1.msra.mxu0 %v101
    %112 = vmatprep.subr.mxu0 0.0
    %113 = vmatpush1.msra.mxu0 %v100
    %114 = vmatprep.subr.mxu0 0.0
    %115 = vmatpush1.msra.mxu0 %v99
    %116 = vmatprep.subr.mxu0 0.0
    %117 = vmatpush1.msra.mxu0 %v98
    %118 = vmatprep.subr.mxu0 0.0
    %119 = vmatpush1.msra.mxu0 %v97
    %120 = vmatprep.subr.mxu0 0.0
    %121 = vmatpush1.msra.mxu0 %v96
    %122 = vmatprep.subr.mxu0 0.0
    %123 = vmatpush1.msra.mxu0 %v95
    %124 = vmatprep.subr.mxu0 0.0
    %125 = vmatpush1.msra.mxu0 %v94
    %126 = vmatprep.subr.mxu0 0.0
    %127 = vmatpush1.msra.mxu0 %v93
    %128 = vmatprep.subr.mxu0 0.0
    %129 = vmatpush1.msra.mxu0 %v92
    %130 = vmatprep.subr.mxu0 0.0
    %131 = vmatpush1.msra.mxu0 %v91
    %132 = vmatprep.subr.mxu0 0.0
    %133 = vmatpush1.msra.mxu0 %v90
    %134 = vmatprep.subr.mxu0 0.0
    %135 = vmatpush1.msra.mxu0 %v89
    %136 = vmatprep.subr.mxu0 0.0
    %137 = vmatpush1.msra.mxu0 %v88
    %138 = vmatprep.subr.mxu0 0.0
    %139 = vmatpush2.msra.mxu0 0.0
    %140 = vmatprep.subr.mxu0 0.0
    %141 = vmatpush2.msra.mxu0 0.0
    %142 = vmatprep.subr.mxu0 0.0
    %143 = vmatpush2.msra.mxu0 0.0
    %144 = vmatprep.subr.mxu0 0.0
    %145 = vmatpush2.msra.mxu0 0.0
    %146 = vmatprep.subr.mxu0 0.0
    %147 = vmatpush2.msra.mxu0 0.0
    %148 = vmatprep.subr.mxu0 0.0
    %149 = vmatpush2.msra.mxu0 0.0
    %150 = vmatprep.subr.mxu0 0.0
    %151 = vmatpush2.msra.mxu0 0.0
    %152 = vmatprep.subr.mxu0 0.0
    %153 = vmatpush2.msra.mxu0 0.0
    %154 = vmatprep.subr.mxu0 0.0
    %155 = vmatpush2.msra.mxu0 0.0
    %156 = vmatprep.subr.mxu0 0.0
    %157 = vmatpush2.msra.mxu0 0.0
    %158 = vmatprep.subr.mxu0 0.0
    %159 = vmatpush2.msra.mxu0 0.0
    %160 = vmatprep.subr.mxu0 0.0
    %161 = vmatpush2.msra.mxu0 0.0
    %162 = vmatprep.subr.mxu0 0.0
    %163 = vmatpush2.msra.mxu0 0.0
    %164 = vmatprep.subr.mxu0 0.0
    %165 = vmatpush2.msra.mxu0 0.0
    %166 = vmatprep.subr.mxu0 0.0
    %167 = vmatpush2.msra.mxu0 0.0
    %168 = vmatprep.subr.mxu0 0.0
    %169 = vmatpush2.msra.mxu0 0.0
    %170 = vmatprep.mubr.f32.mxu0 0.0
    %171 = vmatmul.mubr.f32.gmra.mxu0 %v86
    %v172 = vpop.f32.mrf.mxu0
    %v173 = vadd.f32 %v104, %v172
    %v174 = vpop.f32.mrf.mxu0
    %175 = vmatprep.mubr.f32.mxu0 0.0
    %176 = vmatmul.mubr.f32.gmra.mxu0 %v87
    %v177 = vpop.f32.mrf.mxu0
    %v178 = vadd.f32 %v105, %v177
    %v179 = vpop.f32.mrf.mxu0
    %180 = vdwg.mxu0
    %v181 = vld [vmem:[%s4] sm:$0x1]
    %v182 = vld [vmem:[%s5] sm:$0x1]
    %vm183 = vcmask 261120
    %v184 = vsel %vm183, %v173, 0.0
    %185 = vadd.xlane.f32.xlu0 %v184
    %v186 = vpop.xlane.xlu0 %185
    %v187 = vsel %vm183, %v178, 0.0
    %188 = vadd.xlane.f32.xlu0 %v187
    %v189 = vpop.xlane.xlu0 %188
    %v190 = vrcp.pop 32.0
    %v191 = vmul.f32 %v186, %v190
    %v192 = vmul.f32 %v189, %v190
    %v193 = vsub.f32 %v173, %v191
    %v194 = vsub.f32 %v178, %v192
    %v195 = vmul.f32 %v193, %v193
    %v196 = vmul.f32 %v194, %v194
    %v197 = vsel %vm183, %v195, 0.0
    %198 = vadd.xlane.f32.xlu0 %v197
    %v199 = vpop.xlane.xlu0 %198
    %v200 = vsel %vm183, %v196, 0.0
    %201 = vadd.xlane.f32.xlu0 %v200
    %v202 = vpop.xlane.xlu0 %201
    %v203 = vmul.f32 %v199, %v190
    %v204 = vmul.f32 %v202, %v190
    %v205 = vadd.f32 %v203, 1e-12
    %v206 = vadd.f32 %v204, 1e-12
    %v207 = vrsqrt.pop %v205
    %v208 = vrsqrt.pop %v206
    %v209 = vmul.f32 %v193, %v207
    %v210 = vmul.f32 %v194, %v208
    %v212 = vlaneseq
    %v213 = vshrl.u32 %v212, 7
    %v214 = vsub.s32 0, %v213
    %v215 = vrot.slane %v181, %v214
    %v217 = vmul.f32 %v209, %v215
    %v218 = vmul.f32 %v210, %v215
    %v220 = vlaneseq
    %v221 = vshrl.u32 %v220, 7
    %v222 = vsub.s32 0, %v221
    %v223 = vrot.slane %v182, %v222
    %v225 = vadd.f32 %v217, %v223
    %v226 = vadd.f32 %v218, %v223
    %v227 = vld [vmem:[%s1] sm:$0x3]
    %v230 = vunpack.c.l.s4 1966171168
    %v231 = vunpack.c.0.s8 %v230
    %v232 = vlaneseq
    %v233 = vshrl.u32 %v232, 7
    %v234 = vsub.s32 %v231, %v233
    %v235 = vrot.slane %v227, %v234
    %v236 = vcombine.high %v235, %v235
    %v238 = vunpack.c.l.s4 1966171168
    %v239 = vunpack.c.0.s8 %v238
    %v240 = vlaneseq
    %v241 = vshrl.u32 %v240, 7
    %v242 = vsub.s32 %v239, %v241
    %v243 = vrot.slane %v235, %v242
    %v245 = vunpack.c.l.s4 1966171168
    %v246 = vunpack.c.0.s8 %v245
    %v247 = vlaneseq
    %v248 = vshrl.u32 %v247, 7
    %v249 = vsub.s32 %v246, %v248
    %v250 = vrot.slane %v236, %v249
    %v251 = vld [vmem:[%s6] sm:$0xff]
    %v252 = vld [vmem:[%s6 + $0x8] sm:$0xff]
    %v253 = vld [vmem:[%s6 + $0x10] sm:$0xff]
    %v254 = vld [vmem:[%s6 + $0x18] sm:$0xff]
    %v255 = vld [vmem:[%s7] sm:$0x1]
    %v257 = vlaneseq
    %v258 = vshrl.u32 %v257, 7
    %v259 = vsub.s32 0, %v258
    %v260 = vrot.slane %v255, %v259
    %v263 = vsel %vm183, %v225, 0
    %v266 = vsel %vm183, %v226, 0
    %268 = vmatprep.subr.mxu0 0.0
    %269 = vmatpush1.msra.mxu0 0.0
    %270 = vmatprep.subr.mxu0 0.0
    %271 = vmatpush1.msra.mxu0 0.0
    %272 = vmatprep.subr.mxu0 0.0
    %273 = vmatpush1.msra.mxu0 0.0
    %274 = vmatprep.subr.mxu0 0.0
    %275 = vmatpush1.msra.mxu0 0.0
    %276 = vmatprep.subr.mxu0 0.0
    %277 = vmatpush1.msra.mxu0 0.0
    %278 = vmatprep.subr.mxu0 0.0
    %279 = vmatpush1.msra.mxu0 0.0
    %280 = vmatprep.subr.mxu0 0.0
    %281 = vmatpush1.msra.mxu0 0.0
    %282 = vmatprep.subr.mxu0 0.0
    %283 = vmatpush1.msra.mxu0 0.0
    %284 = vmatprep.subr.mxu0 0.0
    %285 = vmatpush1.msra.mxu0 0.0
    %286 = vmatprep.subr.mxu0 0.0
    %287 = vmatpush1.msra.mxu0 0.0
    %288 = vmatprep.subr.mxu0 0.0
    %289 = vmatpush1.msra.mxu0 0.0
    %290 = vmatprep.subr.mxu0 0.0
    %291 = vmatpush1.msra.mxu0 0.0
    %292 = vmatprep.subr.mxu0 0.0
    %293 = vmatpush1.msra.mxu0 %v254
    %294 = vmatprep.subr.mxu0 0.0
    %295 = vmatpush1.msra.mxu0 %v253
    %296 = vmatprep.subr.mxu0 0.0
    %297 = vmatpush1.msra.mxu0 %v252
    %298 = vmatprep.subr.mxu0 0.0
    %299 = vmatpush1.msra.mxu0 %v251
    %300 = vmatprep.subr.mxu0 0.0
    %301 = vmatpush2.msra.mxu0 0.0
    %302 = vmatprep.subr.mxu0 0.0
    %303 = vmatpush2.msra.mxu0 0.0
    %304 = vmatprep.subr.mxu0 0.0
    %305 = vmatpush2.msra.mxu0 0.0
    %306 = vmatprep.subr.mxu0 0.0
    %307 = vmatpush2.msra.mxu0 0.0
    %308 = vmatprep.subr.mxu0 0.0
    %309 = vmatpush2.msra.mxu0 0.0
    %310 = vmatprep.subr.mxu0 0.0
    %311 = vmatpush2.msra.mxu0 0.0
    %312 = vmatprep.subr.mxu0 0.0
    %313 = vmatpush2.msra.mxu0 0.0
    %314 = vmatprep.subr.mxu0 0.0
    %315 = vmatpush2.msra.mxu0 0.0
    %316 = vmatprep.subr.mxu0 0.0
    %317 = vmatpush2.msra.mxu0 0.0
    %318 = vmatprep.subr.mxu0 0.0
    %319 = vmatpush2.msra.mxu0 0.0
    %320 = vmatprep.subr.mxu0 0.0
    %321 = vmatpush2.msra.mxu0 0.0
    %322 = vmatprep.subr.mxu0 0.0
    %323 = vmatpush2.msra.mxu0 0.0
    %324 = vmatprep.subr.mxu0 0.0
    %325 = vmatpush2.msra.mxu0 0.0
    %326 = vmatprep.subr.mxu0 0.0
    %327 = vmatpush2.msra.mxu0 0.0
    %328 = vmatprep.subr.mxu0 0.0
    %329 = vmatpush2.msra.mxu0 0.0
    %330 = vmatprep.subr.mxu0 0.0
    %331 = vmatpush2.msra.mxu0 0.0
    %332 = vmatprep.mubr.f32.mxu0 0.0
    %333 = vmatmul.mubr.f32.gmra.mxu0 %v263
    %v334 = vpop.f32.mrf.mxu0
    %v335 = vadd.f32 %v260, %v334
    %v336 = vpop.f32.mrf.mxu0
    %337 = vmatprep.mubr.f32.mxu0 0.0
    %338 = vmatmul.mubr.f32.gmra.mxu0 %v266
    %v339 = vpop.f32.mrf.mxu0
    %v340 = vadd.f32 %v260, %v339
    %v341 = vpop.f32.mrf.mxu0
    %342 = vdwg.mxu0
    %v343 = vld [vmem:[%s8] sm:$0xff]
    %v344 = vld [vmem:[%s8 + $0x8] sm:$0xff]
    %v345 = vld [vmem:[%s8 + $0x10] sm:$0xff]
    %v346 = vld [vmem:[%s8 + $0x18] sm:$0xff]
    %348 = vrot.lane.b32.xlu0 %v335, 96
    %v349 = vpop.permute.xlu0 %348
    %vm350 = vcmask 130048
    %v351 = vsel %vm350, %v335, 0
    %v353 = vsel %vm350, %v349, 0
    %355 = vmatprep.subr.mxu0 0.0
    %356 = vmatpush1.xpose.msra.mxu0 0.0
    %357 = vmatprep.subr.mxu0 0.0
    %358 = vmatpush1.xpose.msra.mxu0 0.0
    %359 = vmatprep.subr.mxu0 0.0
    %360 = vmatpush1.xpose.msra.mxu0 0.0
    %361 = vmatprep.subr.mxu0 0.0
    %362 = vmatpush1.xpose.msra.mxu0 0.0
    %363 = vmatprep.subr.mxu0 0.0
    %364 = vmatpush1.xpose.msra.mxu0 0.0
    %365 = vmatprep.subr.mxu0 0.0
    %366 = vmatpush1.xpose.msra.mxu0 0.0
    %367 = vmatprep.subr.mxu0 0.0
    %368 = vmatpush1.xpose.msra.mxu0 0.0
    %369 = vmatprep.subr.mxu0 0.0
    %370 = vmatpush1.xpose.msra.mxu0 0.0
    %371 = vmatprep.subr.mxu0 0.0
    %372 = vmatpush1.xpose.msra.mxu0 0.0
    %373 = vmatprep.subr.mxu0 0.0
    %374 = vmatpush1.xpose.msra.mxu0 0.0
    %375 = vmatprep.subr.mxu0 0.0
    %376 = vmatpush1.xpose.msra.mxu0 0.0
    %377 = vmatprep.subr.mxu0 0.0
    %378 = vmatpush1.xpose.msra.mxu0 0.0
    %379 = vmatprep.subr.mxu0 0.0
    %380 = vmatpush1.xpose.msra.mxu0 0.0
    %381 = vmatprep.subr.mxu0 0.0
    %382 = vmatpush1.xpose.msra.mxu0 0.0
    %383 = vmatprep.subr.mxu0 0.0
    %384 = vmatpush1.xpose.msra.mxu0 0.0
    %385 = vmatprep.subr.mxu0 0.0
    %386 = vmatpush1.xpose.msra.mxu0 %v353
    %387 = vmatprep.subr.mxu0 0.0
    %388 = vmatpush2.xpose.msra.mxu0 0.0
    %389 = vmatprep.subr.mxu0 0.0
    %390 = vmatpush2.xpose.msra.mxu0 0.0
    %391 = vmatprep.subr.mxu0 0.0
    %392 = vmatpush2.xpose.msra.mxu0 0.0
    %393 = vmatprep.subr.mxu0 0.0
    %394 = vmatpush2.xpose.msra.mxu0 0.0
    %395 = vmatprep.subr.mxu0 0.0
    %396 = vmatpush2.xpose.msra.mxu0 0.0
    %397 = vmatprep.subr.mxu0 0.0
    %398 = vmatpush2.xpose.msra.mxu0 0.0
    %399 = vmatprep.subr.mxu0 0.0
    %400 = vmatpush2.xpose.msra.mxu0 0.0
    %401 = vmatprep.subr.mxu0 0.0
    %402 = vmatpush2.xpose.msra.mxu0 0.0
    %403 = vmatprep.subr.mxu0 0.0
    %404 = vmatpush2.xpose.msra.mxu0 0.0
    %405 = vmatprep.subr.mxu0 0.0
    %406 = vmatpush2.xpose.msra.mxu0 0.0
    %407 = vmatprep.subr.mxu0 0.0
    %408 = vmatpush2.xpose.msra.mxu0 0.0
    %409 = vmatprep.subr.mxu0 0.0
    %410 = vmatpush2.xpose.msra.mxu0 0.0
    %411 = vmatprep.subr.mxu0 0.0
    %412 = vmatpush2.xpose.msra.mxu0 0.0
    %413 = vmatprep.subr.mxu0 0.0
    %414 = vmatpush2.xpose.msra.mxu0 0.0
    %415 = vmatprep.subr.mxu0 0.0
    %416 = vmatpush2.xpose.msra.mxu0 0.0
    %417 = vmatprep.subr.mxu0 0.0
    %418 = vmatpush2.xpose.msra.mxu0 0.0
    %419 = vmatprep.mubr.f32.mxu0 0.0
    %420 = vmatmul.mubr.f32.gmra.mxu0 %v351
    %v421 = vpop.f32.mrf.mxu0
    %v422 = vadd.f32 0.0, %v421
    %v423 = vpop.f32.mrf.mxu0
    %424 = vdwg.mxu0
    %426 = vrot.lane.b32.xlu0 %v340, 96
    %v427 = vpop.permute.xlu0 %426
    %v428 = vsel %vm350, %v340, 0
    %v430 = vsel %vm350, %v427, 0
    %432 = vmatprep.subr.mxu0 0.0
    %433 = vmatpush1.xpose.msra.mxu0 0.0
    %434 = vmatprep.subr.mxu0 0.0
    %435 = vmatpush1.xpose.msra.mxu0 0.0
    %436 = vmatprep.subr.mxu0 0.0
    %437 = vmatpush1.xpose.msra.mxu0 0.0
    %438 = vmatprep.subr.mxu0 0.0
    %439 = vmatpush1.xpose.msra.mxu0 0.0
    %440 = vmatprep.subr.mxu0 0.0
    %441 = vmatpush1.xpose.msra.mxu0 0.0
    %442 = vmatprep.subr.mxu0 0.0
    %443 = vmatpush1.xpose.msra.mxu0 0.0
    %444 = vmatprep.subr.mxu0 0.0
    %445 = vmatpush1.xpose.msra.mxu0 0.0
    %446 = vmatprep.subr.mxu0 0.0
    %447 = vmatpush1.xpose.msra.mxu0 0.0
    %448 = vmatprep.subr.mxu0 0.0
    %449 = vmatpush1.xpose.msra.mxu0 0.0
    %450 = vmatprep.subr.mxu0 0.0
    %451 = vmatpush1.xpose.msra.mxu0 0.0
    %452 = vmatprep.subr.mxu0 0.0
    %453 = vmatpush1.xpose.msra.mxu0 0.0
    %454 = vmatprep.subr.mxu0 0.0
    %455 = vmatpush1.xpose.msra.mxu0 0.0
    %456 = vmatprep.subr.mxu0 0.0
    %457 = vmatpush1.xpose.msra.mxu0 0.0
    %458 = vmatprep.subr.mxu0 0.0
    %459 = vmatpush1.xpose.msra.mxu0 0.0
    %460 = vmatprep.subr.mxu0 0.0
    %461 = vmatpush1.xpose.msra.mxu0 0.0
    %462 = vmatprep.subr.mxu0 0.0
    %463 = vmatpush1.xpose.msra.mxu0 %v430
    %464 = vmatprep.subr.mxu0 0.0
    %465 = vmatpush2.xpose.msra.mxu0 0.0
    %466 = vmatprep.subr.mxu0 0.0
    %467 = vmatpush2.xpose.msra.mxu0 0.0
    %468 = vmatprep.subr.mxu0 0.0
    %469 = vmatpush2.xpose.msra.mxu0 0.0
    %470 = vmatprep.subr.mxu0 0.0
    %471 = vmatpush2.xpose.msra.mxu0 0.0
    %472 = vmatprep.subr.mxu0 0.0
    %473 = vmatpush2.xpose.msra.mxu0 0.0
    %474 = vmatprep.subr.mxu0 0.0
    %475 = vmatpush2.xpose.msra.mxu0 0.0
    %476 = vmatprep.subr.mxu0 0.0
    %477 = vmatpush2.xpose.msra.mxu0 0.0
    %478 = vmatprep.subr.mxu0 0.0
    %479 = vmatpush2.xpose.msra.mxu0 0.0
    %480 = vmatprep.subr.mxu0 0.0
    %481 = vmatpush2.xpose.msra.mxu0 0.0
    %482 = vmatprep.subr.mxu0 0.0
    %483 = vmatpush2.xpose.msra.mxu0 0.0
    %484 = vmatprep.subr.mxu0 0.0
    %485 = vmatpush2.xpose.msra.mxu0 0.0
    %486 = vmatprep.subr.mxu0 0.0
    %487 = vmatpush2.xpose.msra.mxu0 0.0
    %488 = vmatprep.subr.mxu0 0.0
    %489 = vmatpush2.xpose.msra.mxu0 0.0
    %490 = vmatprep.subr.mxu0 0.0
    %491 = vmatpush2.xpose.msra.mxu0 0.0
    %492 = vmatprep.subr.mxu0 0.0
    %493 = vmatpush2.xpose.msra.mxu0 0.0
    %494 = vmatprep.subr.mxu0 0.0
    %495 = vmatpush2.xpose.msra.mxu0 0.0
    %496 = vmatprep.mubr.f32.mxu0 0.0
    %497 = vmatmul.mubr.f32.gmra.mxu0 %v428
    %v498 = vpop.f32.mrf.mxu0
    %v499 = vadd.f32 0.0, %v498
    %v500 = vpop.f32.mrf.mxu0
    %501 = vdwg.mxu0
    %v502 = vmul.f32 %v422, 0.25
    %v503 = vmul.f32 %v499, 0.25
    %v504 = vlaneseq
    %v505 = vshrl.u32 %v504, 7
    %v506 = vsub.s32 0, %v505
    %v507 = vrot.slane %v243, %v506
    %v508 = vlaneseq
    %v509 = vshrl.u32 %v508, 7
    %v510 = vsub.s32 0, %v509
    %v511 = vrot.slane %v250, %v510
    %v514 = vadd.f32 %v502, %v507
    %v515 = vadd.f32 %v503, %v511
    %vm516 = vcmask 64512
    %v517 = vsel %vm516, %v514, -inf
    %518 = vmax.xlane.f32.xlu0 %v517
    %v519 = vpop.xlane.xlu0 %518
    %v520 = vsel %vm516, %v515, -inf
    %521 = vmax.xlane.f32.xlu0 %v520
    %v522 = vpop.xlane.xlu0 %521
    %v523 = vsub.f32 %v514, %v519
    %v524 = vsub.f32 %v515, %v522
    %v525 = vmul.f32 %v523, 1.442695
    %v526 = vpow.pop %v525
    %v527 = vmul.f32 %v524, 1.442695
    %v528 = vpow.pop %v527
    %v529 = vsel %vm516, %v526, 0.0
    %530 = vadd.xlane.f32.xlu0 %v529
    %v531 = vpop.xlane.xlu0 %530
    %v532 = vsel %vm516, %v528, 0.0
    %533 = vadd.xlane.f32.xlu0 %v532
    %v534 = vpop.xlane.xlu0 %533
    %v535 = vrcp.pop %v531
    %v536 = vmul.f32 %v526, %v535
    %v537 = vrcp.pop %v534
    %v538 = vmul.f32 %v528, %v537
    %539 = vrot.lane.b32.xlu0 %v335, 64
    %v540 = vpop.permute.xlu0 %539
    %v543 = vsel %vm516, %v536, 0
    %545 = vmatprep.subr.mxu0 0.0
    %546 = vmatpush1.msra.mxu0 0.0
    %547 = vmatprep.subr.mxu0 0.0
    %548 = vmatpush1.msra.mxu0 0.0
    %549 = vmatprep.subr.mxu0 0.0
    %550 = vmatpush1.msra.mxu0 0.0
    %551 = vmatprep.subr.mxu0 0.0
    %552 = vmatpush1.msra.mxu0 0.0
    %553 = vmatprep.subr.mxu0 0.0
    %554 = vmatpush1.msra.mxu0 0.0
    %555 = vmatprep.subr.mxu0 0.0
    %556 = vmatpush1.msra.mxu0 0.0
    %557 = vmatprep.subr.mxu0 0.0
    %558 = vmatpush1.msra.mxu0 0.0
    %559 = vmatprep.subr.mxu0 0.0
    %560 = vmatpush1.msra.mxu0 0.0
    %561 = vmatprep.subr.mxu0 0.0
    %562 = vmatpush1.msra.mxu0 0.0
    %563 = vmatprep.subr.mxu0 0.0
    %564 = vmatpush1.msra.mxu0 0.0
    %565 = vmatprep.subr.mxu0 0.0
    %566 = vmatpush1.msra.mxu0 0.0
    %567 = vmatprep.subr.mxu0 0.0
    %568 = vmatpush1.msra.mxu0 0.0
    %569 = vmatprep.subr.mxu0 0.0
    %570 = vmatpush1.msra.mxu0 0.0
    %571 = vmatprep.subr.mxu0 0.0
    %572 = vmatpush1.msra.mxu0 0.0
    %573 = vmatprep.subr.mxu0 0.0
    %574 = vmatpush1.msra.mxu0 0.0
    %575 = vmatprep.subr.mxu0 0.0
    %576 = vmatpush1.msra.mxu0 %v540
    %577 = vmatprep.subr.mxu0 0.0
    %578 = vmatpush2.msra.mxu0 0.0
    %579 = vmatprep.subr.mxu0 0.0
    %580 = vmatpush2.msra.mxu0 0.0
    %581 = vmatprep.subr.mxu0 0.0
    %582 = vmatpush2.msra.mxu0 0.0
    %583 = vmatprep.subr.mxu0 0.0
    %584 = vmatpush2.msra.mxu0 0.0
    %585 = vmatprep.subr.mxu0 0.0
    %586 = vmatpush2.msra.mxu0 0.0
    %587 = vmatprep.subr.mxu0 0.0
    %588 = vmatpush2.msra.mxu0 0.0
    %589 = vmatprep.subr.mxu0 0.0
    %590 = vmatpush2.msra.mxu0 0.0
    %591 = vmatprep.subr.mxu0 0.0
    %592 = vmatpush2.msra.mxu0 0.0
    %593 = vmatprep.subr.mxu0 0.0
    %594 = vmatpush2.msra.mxu0 0.0
    %595 = vmatprep.subr.mxu0 0.0
    %596 = vmatpush2.msra.mxu0 0.0
    %597 = vmatprep.subr.mxu0 0.0
    %598 = vmatpush2.msra.mxu0 0.0
    %599 = vmatprep.subr.mxu0 0.0
    %600 = vmatpush2.msra.mxu0 0.0
    %601 = vmatprep.subr.mxu0 0.0
    %602 = vmatpush2.msra.mxu0 0.0
    %603 = vmatprep.subr.mxu0 0.0
    %604 = vmatpush2.msra.mxu0 0.0
    %605 = vmatprep.subr.mxu0 0.0
    %606 = vmatpush2.msra.mxu0 0.0
    %607 = vmatprep.subr.mxu0 0.0
    %608 = vmatpush2.msra.mxu0 0.0
    %609 = vmatprep.mubr.f32.mxu0 0.0
    %610 = vmatmul.mubr.f32.gmra.mxu0 %v543
    %v611 = vpop.f32.mrf.mxu0
    %v612 = vadd.f32 0.0, %v611
    %v613 = vpop.f32.mrf.mxu0
    %614 = vdwg.mxu0
    %615 = vrot.lane.b32.xlu0 %v340, 64
    %v616 = vpop.permute.xlu0 %615
    %v619 = vsel %vm516, %v538, 0
    %621 = vmatprep.subr.mxu0 0.0
    %622 = vmatpush1.msra.mxu0 0.0
    %623 = vmatprep.subr.mxu0 0.0
    %624 = vmatpush1.msra.mxu0 0.0
    %625 = vmatprep.subr.mxu0 0.0
    %626 = vmatpush1.msra.mxu0 0.0
    %627 = vmatprep.subr.mxu0 0.0
    %628 = vmatpush1.msra.mxu0 0.0
    %629 = vmatprep.subr.mxu0 0.0
    %630 = vmatpush1.msra.mxu0 0.0
    %631 = vmatprep.subr.mxu0 0.0
    %632 = vmatpush1.msra.mxu0 0.0
    %633 = vmatprep.subr.mxu0 0.0
    %634 = vmatpush1.msra.mxu0 0.0
    %635 = vmatprep.subr.mxu0 0.0
    %636 = vmatpush1.msra.mxu0 0.0
    %637 = vmatprep.subr.mxu0 0.0
    %638 = vmatpush1.msra.mxu0 0.0
    %639 = vmatprep.subr.mxu0 0.0
    %640 = vmatpush1.msra.mxu0 0.0
    %641 = vmatprep.subr.mxu0 0.0
    %642 = vmatpush1.msra.mxu0 0.0
    %643 = vmatprep.subr.mxu0 0.0
    %644 = vmatpush1.msra.mxu0 0.0
    %645 = vmatprep.subr.mxu0 0.0
    %646 = vmatpush1.msra.mxu0 0.0
    %647 = vmatprep.subr.mxu0 0.0
    %648 = vmatpush1.msra.mxu0 0.0
    %649 = vmatprep.subr.mxu0 0.0
    %650 = vmatpush1.msra.mxu0 0.0
    %651 = vmatprep.subr.mxu0 0.0
    %652 = vmatpush1.msra.mxu0 %v616
    %653 = vmatprep.subr.mxu0 0.0
    %654 = vmatpush2.msra.mxu0 0.0
    %655 = vmatprep.subr.mxu0 0.0
    %656 = vmatpush2.msra.mxu0 0.0
    %657 = vmatprep.subr.mxu0 0.0
    %658 = vmatpush2.msra.mxu0 0.0
    %659 = vmatprep.subr.mxu0 0.0
    %660 = vmatpush2.msra.mxu0 0.0
    %661 = vmatprep.subr.mxu0 0.0
    %662 = vmatpush2.msra.mxu0 0.0
    %663 = vmatprep.subr.mxu0 0.0
    %664 = vmatpush2.msra.mxu0 0.0
    %665 = vmatprep.subr.mxu0 0.0
    %666 = vmatpush2.msra.mxu0 0.0
    %667 = vmatprep.subr.mxu0 0.0
    %668 = vmatpush2.msra.mxu0 0.0
    %669 = vmatprep.subr.mxu0 0.0
    %670 = vmatpush2.msra.mxu0 0.0
    %671 = vmatprep.subr.mxu0 0.0
    %672 = vmatpush2.msra.mxu0 0.0
    %673 = vmatprep.subr.mxu0 0.0
    %674 = vmatpush2.msra.mxu0 0.0
    %675 = vmatprep.subr.mxu0 0.0
    %676 = vmatpush2.msra.mxu0 0.0
    %677 = vmatprep.subr.mxu0 0.0
    %678 = vmatpush2.msra.mxu0 0.0
    %679 = vmatprep.subr.mxu0 0.0
    %680 = vmatpush2.msra.mxu0 0.0
    %681 = vmatprep.subr.mxu0 0.0
    %682 = vmatpush2.msra.mxu0 0.0
    %683 = vmatprep.subr.mxu0 0.0
    %684 = vmatpush2.msra.mxu0 0.0
    %685 = vmatprep.mubr.f32.mxu0 0.0
    %686 = vmatmul.mubr.f32.gmra.mxu0 %v619
    %v687 = vpop.f32.mrf.mxu0
    %v688 = vadd.f32 0.0, %v687
    %v689 = vpop.f32.mrf.mxu0
    %690 = vdwg.mxu0
    %691 = vrot.lane.b32.xlu0 %v335, 112
    %v692 = vpop.permute.xlu0 %691
    %693 = vrot.lane.b32.xlu0 %v335, 80
    %v694 = vpop.permute.xlu0 %693
    %v695 = vsel %vm350, %v692, 0
    %v697 = vsel %vm350, %v694, 0
    %699 = vmatprep.subr.mxu0 0.0
    %700 = vmatpush1.xpose.msra.mxu0 0.0
    %701 = vmatprep.subr.mxu0 0.0
    %702 = vmatpush1.xpose.msra.mxu0 0.0
    %703 = vmatprep.subr.mxu0 0.0
    %704 = vmatpush1.xpose.msra.mxu0 0.0
    %705 = vmatprep.subr.mxu0 0.0
    %706 = vmatpush1.xpose.msra.mxu0 0.0
    %707 = vmatprep.subr.mxu0 0.0
    %708 = vmatpush1.xpose.msra.mxu0 0.0
    %709 = vmatprep.subr.mxu0 0.0
    %710 = vmatpush1.xpose.msra.mxu0 0.0
    %711 = vmatprep.subr.mxu0 0.0
    %712 = vmatpush1.xpose.msra.mxu0 0.0
    %713 = vmatprep.subr.mxu0 0.0
    %714 = vmatpush1.xpose.msra.mxu0 0.0
    %715 = vmatprep.subr.mxu0 0.0
    %716 = vmatpush1.xpose.msra.mxu0 0.0
    %717 = vmatprep.subr.mxu0 0.0
    %718 = vmatpush1.xpose.msra.mxu0 0.0
    %719 = vmatprep.subr.mxu0 0.0
    %720 = vmatpush1.xpose.msra.mxu0 0.0
    %721 = vmatprep.subr.mxu0 0.0
    %722 = vmatpush1.xpose.msra.mxu0 0.0
    %723 = vmatprep.subr.mxu0 0.0
    %724 = vmatpush1.xpose.msra.mxu0 0.0
    %725 = vmatprep.subr.mxu0 0.0
    %726 = vmatpush1.xpose.msra.mxu0 0.0
    %727 = vmatprep.subr.mxu0 0.0
    %728 = vmatpush1.xpose.msra.mxu0 0.0
    %729 = vmatprep.subr.mxu0 0.0
    %730 = vmatpush1.xpose.msra.mxu0 %v697
    %731 = vmatprep.subr.mxu0 0.0
    %732 = vmatpush2.xpose.msra.mxu0 0.0
    %733 = vmatprep.subr.mxu0 0.0
    %734 = vmatpush2.xpose.msra.mxu0 0.0
    %735 = vmatprep.subr.mxu0 0.0
    %736 = vmatpush2.xpose.msra.mxu0 0.0
    %737 = vmatprep.subr.mxu0 0.0
    %738 = vmatpush2.xpose.msra.mxu0 0.0
    %739 = vmatprep.subr.mxu0 0.0
    %740 = vmatpush2.xpose.msra.mxu0 0.0
    %741 = vmatprep.subr.mxu0 0.0
    %742 = vmatpush2.xpose.msra.mxu0 0.0
    %743 = vmatprep.subr.mxu0 0.0
    %744 = vmatpush2.xpose.msra.mxu0 0.0
    %745 = vmatprep.subr.mxu0 0.0
    %746 = vmatpush2.xpose.msra.mxu0 0.0
    %747 = vmatprep.subr.mxu0 0.0
    %748 = vmatpush2.xpose.msra.mxu0 0.0
    %749 = vmatprep.subr.mxu0 0.0
    %750 = vmatpush2.xpose.msra.mxu0 0.0
    %751 = vmatprep.subr.mxu0 0.0
    %752 = vmatpush2.xpose.msra.mxu0 0.0
    %753 = vmatprep.subr.mxu0 0.0
    %754 = vmatpush2.xpose.msra.mxu0 0.0
    %755 = vmatprep.subr.mxu0 0.0
    %756 = vmatpush2.xpose.msra.mxu0 0.0
    %757 = vmatprep.subr.mxu0 0.0
    %758 = vmatpush2.xpose.msra.mxu0 0.0
    %759 = vmatprep.subr.mxu0 0.0
    %760 = vmatpush2.xpose.msra.mxu0 0.0
    %761 = vmatprep.subr.mxu0 0.0
    %762 = vmatpush2.xpose.msra.mxu0 0.0
    %763 = vmatprep.mubr.f32.mxu0 0.0
    %764 = vmatmul.mubr.f32.gmra.mxu0 %v695
    %v765 = vpop.f32.mrf.mxu0
    %v766 = vadd.f32 0.0, %v765
    %v767 = vpop.f32.mrf.mxu0
    %768 = vdwg.mxu0
    %769 = vrot.lane.b32.xlu0 %v340, 112
    %v770 = vpop.permute.xlu0 %769
    %771 = vrot.lane.b32.xlu0 %v340, 80
    %v772 = vpop.permute.xlu0 %771
    %v773 = vsel %vm350, %v770, 0
    %v775 = vsel %vm350, %v772, 0
    %777 = vmatprep.subr.mxu0 0.0
    %778 = vmatpush1.xpose.msra.mxu0 0.0
    %779 = vmatprep.subr.mxu0 0.0
    %780 = vmatpush1.xpose.msra.mxu0 0.0
    %781 = vmatprep.subr.mxu0 0.0
    %782 = vmatpush1.xpose.msra.mxu0 0.0
    %783 = vmatprep.subr.mxu0 0.0
    %784 = vmatpush1.xpose.msra.mxu0 0.0
    %785 = vmatprep.subr.mxu0 0.0
    %786 = vmatpush1.xpose.msra.mxu0 0.0
    %787 = vmatprep.subr.mxu0 0.0
    %788 = vmatpush1.xpose.msra.mxu0 0.0
    %789 = vmatprep.subr.mxu0 0.0
    %790 = vmatpush1.xpose.msra.mxu0 0.0
    %791 = vmatprep.subr.mxu0 0.0
    %792 = vmatpush1.xpose.msra.mxu0 0.0
    %793 = vmatprep.subr.mxu0 0.0
    %794 = vmatpush1.xpose.msra.mxu0 0.0
    %795 = vmatprep.subr.mxu0 0.0
    %796 = vmatpush1.xpose.msra.mxu0 0.0
    %797 = vmatprep.subr.mxu0 0.0
    %798 = vmatpush1.xpose.msra.mxu0 0.0
    %799 = vmatprep.subr.mxu0 0.0
    %800 = vmatpush1.xpose.msra.mxu0 0.0
    %801 = vmatprep.subr.mxu0 0.0
    %802 = vmatpush1.xpose.msra.mxu0 0.0
    %803 = vmatprep.subr.mxu0 0.0
    %804 = vmatpush1.xpose.msra.mxu0 0.0
    %805 = vmatprep.subr.mxu0 0.0
    %806 = vmatpush1.xpose.msra.mxu0 0.0
    %807 = vmatprep.subr.mxu0 0.0
    %808 = vmatpush1.xpose.msra.mxu0 %v775
    %809 = vmatprep.subr.mxu0 0.0
    %810 = vmatpush2.xpose.msra.mxu0 0.0
    %811 = vmatprep.subr.mxu0 0.0
    %812 = vmatpush2.xpose.msra.mxu0 0.0
    %813 = vmatprep.subr.mxu0 0.0
    %814 = vmatpush2.xpose.msra.mxu0 0.0
    %815 = vmatprep.subr.mxu0 0.0
    %816 = vmatpush2.xpose.msra.mxu0 0.0
    %817 = vmatprep.subr.mxu0 0.0
    %818 = vmatpush2.xpose.msra.mxu0 0.0
    %819 = vmatprep.subr.mxu0 0.0
    %820 = vmatpush2.xpose.msra.mxu0 0.0
    %821 = vmatprep.subr.mxu0 0.0
    %822 = vmatpush2.xpose.msra.mxu0 0.0
    %823 = vmatprep.subr.mxu0 0.0
    %824 = vmatpush2.xpose.msra.mxu0 0.0
    %825 = vmatprep.subr.mxu0 0.0
    %826 = vmatpush2.xpose.msra.mxu0 0.0
    %827 = vmatprep.subr.mxu0 0.0
    %828 = vmatpush2.xpose.msra.mxu0 0.0
    %829 = vmatprep.subr.mxu0 0.0
    %830 = vmatpush2.xpose.msra.mxu0 0.0
    %831 = vmatprep.subr.mxu0 0.0
    %832 = vmatpush2.xpose.msra.mxu0 0.0
    %833 = vmatprep.subr.mxu0 0.0
    %834 = vmatpush2.xpose.msra.mxu0 0.0
    %835 = vmatprep.subr.mxu0 0.0
    %836 = vmatpush2.xpose.msra.mxu0 0.0
    %837 = vmatprep.subr.mxu0 0.0
    %838 = vmatpush2.xpose.msra.mxu0 0.0
    %839 = vmatprep.subr.mxu0 0.0
    %840 = vmatpush2.xpose.msra.mxu0 0.0
    %841 = vmatprep.mubr.f32.mxu0 0.0
    %842 = vmatmul.mubr.f32.gmra.mxu0 %v773
    %v843 = vpop.f32.mrf.mxu0
    %v844 = vadd.f32 0.0, %v843
    %v845 = vpop.f32.mrf.mxu0
    %846 = vdwg.mxu0
    %v847 = vmul.f32 %v766, 0.25
    %v848 = vmul.f32 %v844, 0.25
    %v849 = vadd.f32 %v847, %v507
    %v850 = vadd.f32 %v848, %v511
    %v851 = vsel %vm516, %v849, -inf
    %852 = vmax.xlane.f32.xlu0 %v851
    %v853 = vpop.xlane.xlu0 %852
    %v854 = vsel %vm516, %v850, -inf
    %855 = vmax.xlane.f32.xlu0 %v854
    %v856 = vpop.xlane.xlu0 %855
    %v857 = vsub.f32 %v849, %v853
    %v858 = vsub.f32 %v850, %v856
    %v859 = vmul.f32 %v857, 1.442695
    %v860 = vpow.pop %v859
    %v861 = vmul.f32 %v858, 1.442695
    %v862 = vpow.pop %v861
    %v863 = vsel %vm516, %v860, 0.0
    %864 = vadd.xlane.f32.xlu0 %v863
    %v865 = vpop.xlane.xlu0 %864
    %v866 = vsel %vm516, %v862, 0.0
    %867 = vadd.xlane.f32.xlu0 %v866
    %v868 = vpop.xlane.xlu0 %867
    %v869 = vrcp.pop %v865
    %v870 = vmul.f32 %v860, %v869
    %v871 = vrcp.pop %v868
    %v872 = vmul.f32 %v862, %v871
    %873 = vrot.lane.b32.xlu0 %v335, 48
    %v874 = vpop.permute.xlu0 %873
    %v877 = vsel %vm516, %v870, 0
    %879 = vmatprep.subr.mxu0 0.0
    %880 = vmatpush1.msra.mxu0 0.0
    %881 = vmatprep.subr.mxu0 0.0
    %882 = vmatpush1.msra.mxu0 0.0
    %883 = vmatprep.subr.mxu0 0.0
    %884 = vmatpush1.msra.mxu0 0.0
    %885 = vmatprep.subr.mxu0 0.0
    %886 = vmatpush1.msra.mxu0 0.0
    %887 = vmatprep.subr.mxu0 0.0
    %888 = vmatpush1.msra.mxu0 0.0
    %889 = vmatprep.subr.mxu0 0.0
    %890 = vmatpush1.msra.mxu0 0.0
    %891 = vmatprep.subr.mxu0 0.0
    %892 = vmatpush1.msra.mxu0 0.0
    %893 = vmatprep.subr.mxu0 0.0
    %894 = vmatpush1.msra.mxu0 0.0
    %895 = vmatprep.subr.mxu0 0.0
    %896 = vmatpush1.msra.mxu0 0.0
    %897 = vmatprep.subr.mxu0 0.0
    %898 = vmatpush1.msra.mxu0 0.0
    %899 = vmatprep.subr.mxu0 0.0
    %900 = vmatpush1.msra.mxu0 0.0
    %901 = vmatprep.subr.mxu0 0.0
    %902 = vmatpush1.msra.mxu0 0.0
    %903 = vmatprep.subr.mxu0 0.0
    %904 = vmatpush1.msra.mxu0 0.0
    %905 = vmatprep.subr.mxu0 0.0
    %906 = vmatpush1.msra.mxu0 0.0
    %907 = vmatprep.subr.mxu0 0.0
    %908 = vmatpush1.msra.mxu0 0.0
    %909 = vmatprep.subr.mxu0 0.0
    %910 = vmatpush1.msra.mxu0 %v874
    %911 = vmatprep.subr.mxu0 0.0
    %912 = vmatpush2.msra.mxu0 0.0
    %913 = vmatprep.subr.mxu0 0.0
    %914 = vmatpush2.msra.mxu0 0.0
    %915 = vmatprep.subr.mxu0 0.0
    %916 = vmatpush2.msra.mxu0 0.0
    %917 = vmatprep.subr.mxu0 0.0
    %918 = vmatpush2.msra.mxu0 0.0
    %919 = vmatprep.subr.mxu0 0.0
    %920 = vmatpush2.msra.mxu0 0.0
    %921 = vmatprep.subr.mxu0 0.0
    %922 = vmatpush2.msra.mxu0 0.0
    %923 = vmatprep.subr.mxu0 0.0
    %924 = vmatpush2.msra.mxu0 0.0
    %925 = vmatprep.subr.mxu0 0.0
    %926 = vmatpush2.msra.mxu0 0.0
    %927 = vmatprep.subr.mxu0 0.0
    %928 = vmatpush2.msra.mxu0 0.0
    %929 = vmatprep.subr.mxu0 0.0
    %930 = vmatpush2.msra.mxu0 0.0
    %931 = vmatprep.subr.mxu0 0.0
    %932 = vmatpush2.msra.mxu0 0.0
    %933 = vmatprep.subr.mxu0 0.0
    %934 = vmatpush2.msra.mxu0 0.0
    %935 = vmatprep.subr.mxu0 0.0
    %936 = vmatpush2.msra.mxu0 0.0
    %937 = vmatprep.subr.mxu0 0.0
    %938 = vmatpush2.msra.mxu0 0.0
    %939 = vmatprep.subr.mxu0 0.0
    %940 = vmatpush2.msra.mxu0 0.0
    %941 = vmatprep.subr.mxu0 0.0
    %942 = vmatpush2.msra.mxu0 0.0
    %943 = vmatprep.mubr.f32.mxu0 0.0
    %944 = vmatmul.mubr.f32.gmra.mxu0 %v877
    %v945 = vpop.f32.mrf.mxu0
    %v946 = vadd.f32 0.0, %v945
    %v947 = vpop.f32.mrf.mxu0
    %948 = vdwg.mxu0
    %949 = vrot.lane.b32.xlu0 %v340, 48
    %v950 = vpop.permute.xlu0 %949
    %v953 = vsel %vm516, %v872, 0
    %955 = vmatprep.subr.mxu0 0.0
    %956 = vmatpush1.msra.mxu0 0.0
    %957 = vmatprep.subr.mxu0 0.0
    %958 = vmatpush1.msra.mxu0 0.0
    %959 = vmatprep.subr.mxu0 0.0
    %960 = vmatpush1.msra.mxu0 0.0
    %961 = vmatprep.subr.mxu0 0.0
    %962 = vmatpush1.msra.mxu0 0.0
    %963 = vmatprep.subr.mxu0 0.0
    %964 = vmatpush1.msra.mxu0 0.0
    %965 = vmatprep.subr.mxu0 0.0
    %966 = vmatpush1.msra.mxu0 0.0
    %967 = vmatprep.subr.mxu0 0.0
    %968 = vmatpush1.msra.mxu0 0.0
    %969 = vmatprep.subr.mxu0 0.0
    %970 = vmatpush1.msra.mxu0 0.0
    %971 = vmatprep.subr.mxu0 0.0
    %972 = vmatpush1.msra.mxu0 0.0
    %973 = vmatprep.subr.mxu0 0.0
    %974 = vmatpush1.msra.mxu0 0.0
    %975 = vmatprep.subr.mxu0 0.0
    %976 = vmatpush1.msra.mxu0 0.0
    %977 = vmatprep.subr.mxu0 0.0
    %978 = vmatpush1.msra.mxu0 0.0
    %979 = vmatprep.subr.mxu0 0.0
    %980 = vmatpush1.msra.mxu0 0.0
    %981 = vmatprep.subr.mxu0 0.0
    %982 = vmatpush1.msra.mxu0 0.0
    %983 = vmatprep.subr.mxu0 0.0
    %984 = vmatpush1.msra.mxu0 0.0
    %985 = vmatprep.subr.mxu0 0.0
    %986 = vmatpush1.msra.mxu0 %v950
    %987 = vmatprep.subr.mxu0 0.0
    %988 = vmatpush2.msra.mxu0 0.0
    %989 = vmatprep.subr.mxu0 0.0
    %990 = vmatpush2.msra.mxu0 0.0
    %991 = vmatprep.subr.mxu0 0.0
    %992 = vmatpush2.msra.mxu0 0.0
    %993 = vmatprep.subr.mxu0 0.0
    %994 = vmatpush2.msra.mxu0 0.0
    %995 = vmatprep.subr.mxu0 0.0
    %996 = vmatpush2.msra.mxu0 0.0
    %997 = vmatprep.subr.mxu0 0.0
    %998 = vmatpush2.msra.mxu0 0.0
    %999 = vmatprep.subr.mxu0 0.0
    %1000 = vmatpush2.msra.mxu0 0.0
    %1001 = vmatprep.subr.mxu0 0.0
    %1002 = vmatpush2.msra.mxu0 0.0
    %1003 = vmatprep.subr.mxu0 0.0
    %1004 = vmatpush2.msra.mxu0 0.0
    %1005 = vmatprep.subr.mxu0 0.0
    %1006 = vmatpush2.msra.mxu0 0.0
    %1007 = vmatprep.subr.mxu0 0.0
    %1008 = vmatpush2.msra.mxu0 0.0
    %1009 = vmatprep.subr.mxu0 0.0
    %1010 = vmatpush2.msra.mxu0 0.0
    %1011 = vmatprep.subr.mxu0 0.0
    %1012 = vmatpush2.msra.mxu0 0.0
    %1013 = vmatprep.subr.mxu0 0.0
    %1014 = vmatpush2.msra.mxu0 0.0
    %1015 = vmatprep.subr.mxu0 0.0
    %1016 = vmatpush2.msra.mxu0 0.0
    %1017 = vmatprep.subr.mxu0 0.0
    %1018 = vmatpush2.msra.mxu0 0.0
    %1019 = vmatprep.mubr.f32.mxu0 0.0
    %1020 = vmatmul.mubr.f32.gmra.mxu0 %v953
    %v1021 = vpop.f32.mrf.mxu0
    %v1022 = vadd.f32 0.0, %v1021
    %v1023 = vpop.f32.mrf.mxu0
    %1024 = vdwg.mxu0
    %v1026 = vsel %vm350, %v946, 0
    %v1029 = vsel %vm350, %v1022, 0
    %1031 = vmatprep.subr.mxu0 0.0
    %1032 = vmatpush1.msra.mxu0 0.0
    %1033 = vmatprep.subr.mxu0 0.0
    %1034 = vmatpush1.msra.mxu0 0.0
    %1035 = vmatprep.subr.mxu0 0.0
    %1036 = vmatpush1.msra.mxu0 0.0
    %1037 = vmatprep.subr.mxu0 0.0
    %1038 = vmatpush1.msra.mxu0 0.0
    %1039 = vmatprep.subr.mxu0 0.0
    %1040 = vmatpush1.msra.mxu0 0.0
    %1041 = vmatprep.subr.mxu0 0.0
    %1042 = vmatpush1.msra.mxu0 0.0
    %1043 = vmatprep.subr.mxu0 0.0
    %1044 = vmatpush1.msra.mxu0 0.0
    %1045 = vmatprep.subr.mxu0 0.0
    %1046 = vmatpush1.msra.mxu0 0.0
    %1047 = vmatprep.subr.mxu0 0.0
    %1048 = vmatpush1.msra.mxu0 0.0
    %1049 = vmatprep.subr.mxu0 0.0
    %1050 = vmatpush1.msra.mxu0 0.0
    %1051 = vmatprep.subr.mxu0 0.0
    %1052 = vmatpush1.msra.mxu0 0.0
    %1053 = vmatprep.subr.mxu0 0.0
    %1054 = vmatpush1.msra.mxu0 0.0
    %1055 = vmatprep.subr.mxu0 0.0
    %1056 = vmatpush1.msra.mxu0 0.0
    %1057 = vmatprep.subr.mxu0 0.0
    %1058 = vmatpush1.msra.mxu0 0.0
    %1059 = vmatprep.subr.mxu0 0.0
    %1060 = vmatpush1.msra.mxu0 %v346
    %1061 = vmatprep.subr.mxu0 0.0
    %1062 = vmatpush1.msra.mxu0 %v345
    %1063 = vmatprep.subr.mxu0 0.0
    %1064 = vmatpush2.msra.mxu0 0.0
    %1065 = vmatprep.subr.mxu0 0.0
    %1066 = vmatpush2.msra.mxu0 0.0
    %1067 = vmatprep.subr.mxu0 0.0
    %1068 = vmatpush2.msra.mxu0 0.0
    %1069 = vmatprep.subr.mxu0 0.0
    %1070 = vmatpush2.msra.mxu0 0.0
    %1071 = vmatprep.subr.mxu0 0.0
    %1072 = vmatpush2.msra.mxu0 0.0
    %1073 = vmatprep.subr.mxu0 0.0
    %1074 = vmatpush2.msra.mxu0 0.0
    %1075 = vmatprep.subr.mxu0 0.0
    %1076 = vmatpush2.msra.mxu0 0.0
    %1077 = vmatprep.subr.mxu0 0.0
    %1078 = vmatpush2.msra.mxu0 0.0
    %1079 = vmatprep.subr.mxu0 0.0
    %1080 = vmatpush2.msra.mxu0 0.0
    %1081 = vmatprep.subr.mxu0 0.0
    %1082 = vmatpush2.msra.mxu0 0.0
    %1083 = vmatprep.subr.mxu0 0.0
    %1084 = vmatpush2.msra.mxu0 0.0
    %1085 = vmatprep.subr.mxu0 0.0
    %1086 = vmatpush2.msra.mxu0 0.0
    %1087 = vmatprep.subr.mxu0 0.0
    %1088 = vmatpush2.msra.mxu0 0.0
    %1089 = vmatprep.subr.mxu0 0.0
    %1090 = vmatpush2.msra.mxu0 0.0
    %1091 = vmatprep.subr.mxu0 0.0
    %1092 = vmatpush2.msra.mxu0 0.0
    %1093 = vmatprep.subr.mxu0 0.0
    %1094 = vmatpush2.msra.mxu0 0.0
    %1095 = vmatprep.mubr.f32.mxu0 0.0
    %1096 = vmatmul.mubr.f32.gmra.mxu0 %v1026
    %v1097 = vpop.f32.mrf.mxu0
    %v1098 = vadd.f32 0.0, %v1097
    %v1099 = vpop.f32.mrf.mxu0
    %1100 = vmatprep.mubr.f32.mxu0 0.0
    %1101 = vmatmul.mubr.f32.gmra.mxu0 %v1029
    %v1102 = vpop.f32.mrf.mxu0
    %v1103 = vadd.f32 0.0, %v1102
    %v1104 = vpop.f32.mrf.mxu0
    %1105 = vdwg.mxu0
    %v1107 = vsel %vm350, %v612, 0
    %v1110 = vsel %vm350, %v688, 0
    %1112 = vmatprep.subr.mxu0 0.0
    %1113 = vmatpush1.msra.mxu0 0.0
    %1114 = vmatprep.subr.mxu0 0.0
    %1115 = vmatpush1.msra.mxu0 0.0
    %1116 = vmatprep.subr.mxu0 0.0
    %1117 = vmatpush1.msra.mxu0 0.0
    %1118 = vmatprep.subr.mxu0 0.0
    %1119 = vmatpush1.msra.mxu0 0.0
    %1120 = vmatprep.subr.mxu0 0.0
    %1121 = vmatpush1.msra.mxu0 0.0
    %1122 = vmatprep.subr.mxu0 0.0
    %1123 = vmatpush1.msra.mxu0 0.0
    %1124 = vmatprep.subr.mxu0 0.0
    %1125 = vmatpush1.msra.mxu0 0.0
    %1126 = vmatprep.subr.mxu0 0.0
    %1127 = vmatpush1.msra.mxu0 0.0
    %1128 = vmatprep.subr.mxu0 0.0
    %1129 = vmatpush1.msra.mxu0 0.0
    %1130 = vmatprep.subr.mxu0 0.0
    %1131 = vmatpush1.msra.mxu0 0.0
    %1132 = vmatprep.subr.mxu0 0.0
    %1133 = vmatpush1.msra.mxu0 0.0
    %1134 = vmatprep.subr.mxu0 0.0
    %1135 = vmatpush1.msra.mxu0 0.0
    %1136 = vmatprep.subr.mxu0 0.0
    %1137 = vmatpush1.msra.mxu0 0.0
    %1138 = vmatprep.subr.mxu0 0.0
    %1139 = vmatpush1.msra.mxu0 0.0
    %1140 = vmatprep.subr.mxu0 0.0
    %1141 = vmatpush1.msra.mxu0 %v344
    %1142 = vmatprep.subr.mxu0 0.0
    %1143 = vmatpush1.msra.mxu0 %v343
    %1144 = vmatprep.subr.mxu0 0.0
    %1145 = vmatpush2.msra.mxu0 0.0
    %1146 = vmatprep.subr.mxu0 0.0
    %1147 = vmatpush2.msra.mxu0 0.0
    %1148 = vmatprep.subr.mxu0 0.0
    %1149 = vmatpush2.msra.mxu0 0.0
    %1150 = vmatprep.subr.mxu0 0.0
    %1151 = vmatpush2.msra.mxu0 0.0
    %1152 = vmatprep.subr.mxu0 0.0
    %1153 = vmatpush2.msra.mxu0 0.0
    %1154 = vmatprep.subr.mxu0 0.0
    %1155 = vmatpush2.msra.mxu0 0.0
    %1156 = vmatprep.subr.mxu0 0.0
    %1157 = vmatpush2.msra.mxu0 0.0
    %1158 = vmatprep.subr.mxu0 0.0
    %1159 = vmatpush2.msra.mxu0 0.0
    %1160 = vmatprep.subr.mxu0 0.0
    %1161 = vmatpush2.msra.mxu0 0.0
    %1162 = vmatprep.subr.mxu0 0.0
    %1163 = vmatpush2.msra.mxu0 0.0
    %1164 = vmatprep.subr.mxu0 0.0
    %1165 = vmatpush2.msra.mxu0 0.0
    %1166 = vmatprep.subr.mxu0 0.0
    %1167 = vmatpush2.msra.mxu0 0.0
    %1168 = vmatprep.subr.mxu0 0.0
    %1169 = vmatpush2.msra.mxu0 0.0
    %1170 = vmatprep.subr.mxu0 0.0
    %1171 = vmatpush2.msra.mxu0 0.0
    %1172 = vmatprep.subr.mxu0 0.0
    %1173 = vmatpush2.msra.mxu0 0.0
    %1174 = vmatprep.subr.mxu0 0.0
    %1175 = vmatpush2.msra.mxu0 0.0
    %1176 = vmatprep.mubr.f32.mxu0 0.0
    %1177 = vmatmul.mubr.f32.gmra.mxu0 %v1107
    %v1178 = vpop.f32.mrf.mxu0
    %v1179 = vadd.f32 %v1098, %v1178
    %v1180 = vpop.f32.mrf.mxu0
    %1181 = vmatprep.mubr.f32.mxu0 0.0
    %1182 = vmatmul.mubr.f32.gmra.mxu0 %v1110
    %v1183 = vpop.f32.mrf.mxu0
    %v1184 = vadd.f32 %v1103, %v1183
    %v1185 = vpop.f32.mrf.mxu0
    %1186 = vdwg.mxu0
    %v1187 = vld [vmem:[%s9] sm:$0x1]
    %v1189 = vlaneseq
    %v1190 = vshrl.u32 %v1189, 7
    %v1191 = vsub.s32 0, %v1190
    %v1192 = vrot.slane %v1187, %v1191
    %v1194 = vadd.f32 %v1179, %v1192
    %v1195 = vadd.f32 %v1184, %v1192
    %v1196 = vadd.f32 %v1194, %v225
    %v1197 = vadd.f32 %v1195, %v226
    %v1198 = vld [vmem:[%s10] sm:$0x1]
    %v1199 = vld [vmem:[%s11] sm:$0x1]
    %v1200 = vsel %vm183, %v1196, 0.0
    %1201 = vadd.xlane.f32.xlu0 %v1200
    %v1202 = vpop.xlane.xlu0 %1201
    %v1203 = vsel %vm183, %v1197, 0.0
    %1204 = vadd.xlane.f32.xlu0 %v1203
    %v1205 = vpop.xlane.xlu0 %1204
    %v1206 = vmul.f32 %v1202, %v190
    %v1207 = vmul.f32 %v1205, %v190
    %v1208 = vsub.f32 %v1196, %v1206
    %v1209 = vsub.f32 %v1197, %v1207
    %v1210 = vmul.f32 %v1208, %v1208
    %v1211 = vmul.f32 %v1209, %v1209
    %v1212 = vsel %vm183, %v1210, 0.0
    %1213 = vadd.xlane.f32.xlu0 %v1212
    %v1214 = vpop.xlane.xlu0 %1213
    %v1215 = vsel %vm183, %v1211, 0.0
    %1216 = vadd.xlane.f32.xlu0 %v1215
    %v1217 = vpop.xlane.xlu0 %1216
    %v1218 = vmul.f32 %v1214, %v190
    %v1219 = vmul.f32 %v1217, %v190
    %v1220 = vadd.f32 %v1218, 1e-12
    %v1221 = vadd.f32 %v1219, 1e-12
    %v1222 = vrsqrt.pop %v1220
    %v1223 = vrsqrt.pop %v1221
    %v1224 = vmul.f32 %v1208, %v1222
    %v1225 = vmul.f32 %v1209, %v1223
    %v1227 = vlaneseq
    %v1228 = vshrl.u32 %v1227, 7
    %v1229 = vsub.s32 0, %v1228
    %v1230 = vrot.slane %v1198, %v1229
    %v1232 = vmul.f32 %v1224, %v1230
    %v1233 = vmul.f32 %v1225, %v1230
    %v1235 = vlaneseq
    %v1236 = vshrl.u32 %v1235, 7
    %v1237 = vsub.s32 0, %v1236
    %v1238 = vrot.slane %v1199, %v1237
    %v1240 = vadd.f32 %v1232, %v1238
    %v1241 = vadd.f32 %v1233, %v1238
    %v1242 = vld [vmem:[%s12] sm:$0xff]
    %v1243 = vld [vmem:[%s12 + $0x8] sm:$0xff]
    %v1244 = vld [vmem:[%s12 + $0x10] sm:$0xff]
    %v1245 = vld [vmem:[%s12 + $0x18] sm:$0xff]
    %v1246 = vld [vmem:[%s13] sm:$0x1]
    %v1248 = vlaneseq
    %v1249 = vshrl.u32 %v1248, 7
    %v1250 = vsub.s32 0, %v1249
    %v1251 = vrot.slane %v1246, %v1250
    %v1254 = vsel %vm183, %v1240, 0
    %v1257 = vsel %vm183, %v1241, 0
    %1259 = vmatprep.subr.mxu0 0.0
    %1260 = vmatpush1.msra.mxu0 0.0
    %1261 = vmatprep.subr.mxu0 0.0
    %1262 = vmatpush1.msra.mxu0 0.0
    %1263 = vmatprep.subr.mxu0 0.0
    %1264 = vmatpush1.msra.mxu0 0.0
    %1265 = vmatprep.subr.mxu0 0.0
    %1266 = vmatpush1.msra.mxu0 0.0
    %1267 = vmatprep.subr.mxu0 0.0
    %1268 = vmatpush1.msra.mxu0 0.0
    %1269 = vmatprep.subr.mxu0 0.0
    %1270 = vmatpush1.msra.mxu0 0.0
    %1271 = vmatprep.subr.mxu0 0.0
    %1272 = vmatpush1.msra.mxu0 0.0
    %1273 = vmatprep.subr.mxu0 0.0
    %1274 = vmatpush1.msra.mxu0 0.0
    %1275 = vmatprep.subr.mxu0 0.0
    %1276 = vmatpush1.msra.mxu0 0.0
    %1277 = vmatprep.subr.mxu0 0.0
    %1278 = vmatpush1.msra.mxu0 0.0
    %1279 = vmatprep.subr.mxu0 0.0
    %1280 = vmatpush1.msra.mxu0 0.0
    %1281 = vmatprep.subr.mxu0 0.0
    %1282 = vmatpush1.msra.mxu0 0.0
    %1283 = vmatprep.subr.mxu0 0.0
    %1284 = vmatpush1.msra.mxu0 %v1245
    %1285 = vmatprep.subr.mxu0 0.0
    %1286 = vmatpush1.msra.mxu0 %v1244
    %1287 = vmatprep.subr.mxu0 0.0
    %1288 = vmatpush1.msra.mxu0 %v1243
    %1289 = vmatprep.subr.mxu0 0.0
    %1290 = vmatpush1.msra.mxu0 %v1242
    %1291 = vmatprep.subr.mxu0 0.0
    %1292 = vmatpush2.msra.mxu0 0.0
    %1293 = vmatprep.subr.mxu0 0.0
    %1294 = vmatpush2.msra.mxu0 0.0
    %1295 = vmatprep.subr.mxu0 0.0
    %1296 = vmatpush2.msra.mxu0 0.0
    %1297 = vmatprep.subr.mxu0 0.0
    %1298 = vmatpush2.msra.mxu0 0.0
    %1299 = vmatprep.subr.mxu0 0.0
    %1300 = vmatpush2.msra.mxu0 0.0
    %1301 = vmatprep.subr.mxu0 0.0
    %1302 = vmatpush2.msra.mxu0 0.0
    %1303 = vmatprep.subr.mxu0 0.0
    %1304 = vmatpush2.msra.mxu0 0.0
    %1305 = vmatprep.subr.mxu0 0.0
    %1306 = vmatpush2.msra.mxu0 0.0
    %1307 = vmatprep.subr.mxu0 0.0
    %1308 = vmatpush2.msra.mxu0 0.0
    %1309 = vmatprep.subr.mxu0 0.0
    %1310 = vmatpush2.msra.mxu0 0.0
    %1311 = vmatprep.subr.mxu0 0.0
    %1312 = vmatpush2.msra.mxu0 0.0
    %1313 = vmatprep.subr.mxu0 0.0
    %1314 = vmatpush2.msra.mxu0 0.0
    %1315 = vmatprep.subr.mxu0 0.0
    %1316 = vmatpush2.msra.mxu0 0.0
    %1317 = vmatprep.subr.mxu0 0.0
    %1318 = vmatpush2.msra.mxu0 0.0
    %1319 = vmatprep.subr.mxu0 0.0
    %1320 = vmatpush2.msra.mxu0 0.0
    %1321 = vmatprep.subr.mxu0 0.0
    %1322 = vmatpush2.msra.mxu0 0.0
    %1323 = vmatprep.mubr.f32.mxu0 0.0
    %1324 = vmatmul.mubr.f32.gmra.mxu0 %v1254
    %v1325 = vpop.f32.mrf.mxu0
    %v1326 = vadd.f32 %v1251, %v1325
    %v1327 = vpop.f32.mrf.mxu0
    %1328 = vmatprep.mubr.f32.mxu0 0.0
    %1329 = vmatmul.mubr.f32.gmra.mxu0 %v1257
    %v1330 = vpop.f32.mrf.mxu0
    %v1331 = vadd.f32 %v1251, %v1330
    %v1332 = vpop.f32.mrf.mxu0
    %1333 = vdwg.mxu0
    %v1334 = vmul.f32 %v1326, 0.5
    %v1335 = vmul.f32 %v1331, 0.5
    %v1336 = vmul.f32 %v1326, 0.044715
    %v1337 = vmul.f32 %v1331, 0.044715
    %v1338 = vmul.f32 %v1336, %v1326
    %v1339 = vmul.f32 %v1337, %v1331
    %v1340 = vmul.f32 %v1338, %v1326
    %v1341 = vmul.f32 %v1339, %v1331
    %v1342 = vadd.f32 %v1326, %v1340
    %v1343 = vadd.f32 %v1331, %v1341
    %v1344 = vmul.f32 %v1342, 0.7978846
    %v1345 = vmul.f32 %v1343, 0.7978846
    %v1346 = vtanh.pop %v1344
    %v1347 = vtanh.pop %v1345
    %v1348 = vadd.f32 %v1346, 1.0
    %v1349 = vadd.f32 %v1347, 1.0
    %v1350 = vmul.f32 %v1334, %v1348
    %v1351 = vmul.f32 %v1335, %v1349
    %v1352 = vld [vmem:[%s14] sm:$0xff]
    %v1353 = vld [vmem:[%s14 + $0x8] sm:$0xff]
    %v1354 = vld [vmem:[%s14 + $0x10] sm:$0xff]
    %v1355 = vld [vmem:[%s14 + $0x18] sm:$0xff]
    %v1356 = vld [vmem:[%s14 + $0x20] sm:$0xff]
    %v1357 = vld [vmem:[%s14 + $0x28] sm:$0xff]
    %v1358 = vld [vmem:[%s14 + $0x30] sm:$0xff]
    %v1359 = vld [vmem:[%s14 + $0x38] sm:$0xff]
    %v1360 = vld [vmem:[%s15] sm:$0x1]
    %v1362 = vlaneseq
    %v1363 = vshrl.u32 %v1362, 7
    %v1364 = vsub.s32 0, %v1363
    %v1365 = vrot.slane %v1360, %v1364
    %vm1367 = vcmask 523264
    %v1369 = vsel %vm1367, %v1350, 0
    %v1372 = vsel %vm1367, %v1351, 0
    %1374 = vmatprep.subr.mxu0 0.0
    %1375 = vmatpush1.msra.mxu0 0.0
    %1376 = vmatprep.subr.mxu0 0.0
    %1377 = vmatpush1.msra.mxu0 0.0
    %1378 = vmatprep.subr.mxu0 0.0
    %1379 = vmatpush1.msra.mxu0 0.0
    %1380 = vmatprep.subr.mxu0 0.0
    %1381 = vmatpush1.msra.mxu0 0.0
    %1382 = vmatprep.subr.mxu0 0.0
    %1383 = vmatpush1.msra.mxu0 0.0
    %1384 = vmatprep.subr.mxu0 0.0
    %1385 = vmatpush1.msra.mxu0 0.0
    %1386 = vmatprep.subr.mxu0 0.0
    %1387 = vmatpush1.msra.mxu0 0.0
    %1388 = vmatprep.subr.mxu0 0.0
    %1389 = vmatpush1.msra.mxu0 0.0
    %1390 = vmatprep.subr.mxu0 0.0
    %1391 = vmatpush1.msra.mxu0 %v1359
    %1392 = vmatprep.subr.mxu0 0.0
    %1393 = vmatpush1.msra.mxu0 %v1358
    %1394 = vmatprep.subr.mxu0 0.0
    %1395 = vmatpush1.msra.mxu0 %v1357
    %1396 = vmatprep.subr.mxu0 0.0
    %1397 = vmatpush1.msra.mxu0 %v1356
    %1398 = vmatprep.subr.mxu0 0.0
    %1399 = vmatpush1.msra.mxu0 %v1355
    %1400 = vmatprep.subr.mxu0 0.0
    %1401 = vmatpush1.msra.mxu0 %v1354
    %1402 = vmatprep.subr.mxu0 0.0
    %1403 = vmatpush1.msra.mxu0 %v1353
    %1404 = vmatprep.subr.mxu0 0.0
    %1405 = vmatpush1.msra.mxu0 %v1352
    %1406 = vmatprep.subr.mxu0 0.0
    %1407 = vmatpush2.msra.mxu0 0.0
    %1408 = vmatprep.subr.mxu0 0.0
    %1409 = vmatpush2.msra.mxu0 0.0
    %1410 = vmatprep.subr.mxu0 0.0
    %1411 = vmatpush2.msra.mxu0 0.0
    %1412 = vmatprep.subr.mxu0 0.0
    %1413 = vmatpush2.msra.mxu0 0.0
    %1414 = vmatprep.subr.mxu0 0.0
    %1415 = vmatpush2.msra.mxu0 0.0
    %1416 = vmatprep.subr.mxu0 0.0
    %1417 = vmatpush2.msra.mxu0 0.0
    %1418 = vmatprep.subr.mxu0 0.0
    %1419 = vmatpush2.msra.mxu0 0.0
    %1420 = vmatprep.subr.mxu0 0.0
    %1421 = vmatpush2.msra.mxu0 0.0
    %1422 = vmatprep.subr.mxu0 0.0
    %1423 = vmatpush2.msra.mxu0 0.0
    %1424 = vmatprep.subr.mxu0 0.0
    %1425 = vmatpush2.msra.mxu0 0.0
    %1426 = vmatprep.subr.mxu0 0.0
    %1427 = vmatpush2.msra.mxu0 0.0
    %1428 = vmatprep.subr.mxu0 0.0
    %1429 = vmatpush2.msra.mxu0 0.0
    %1430 = vmatprep.subr.mxu0 0.0
    %1431 = vmatpush2.msra.mxu0 0.0
    %1432 = vmatprep.subr.mxu0 0.0
    %1433 = vmatpush2.msra.mxu0 0.0
    %1434 = vmatprep.subr.mxu0 0.0
    %1435 = vmatpush2.msra.mxu0 0.0
    %1436 = vmatprep.subr.mxu0 0.0
    %1437 = vmatpush2.msra.mxu0 0.0
    %1438 = vmatprep.mubr.f32.mxu0 0.0
    %1439 = vmatmul.mubr.f32.gmra.mxu0 %v1369
    %v1440 = vpop.f32.mrf.mxu0
    %v1441 = vadd.f32 %v1365, %v1440
    %v1442 = vpop.f32.mrf.mxu0
    %1443 = vmatprep.mubr.f32.mxu0 0.0
    %1444 = vmatmul.mubr.f32.gmra.mxu0 %v1372
    %v1445 = vpop.f32.mrf.mxu0
    %v1446 = vadd.f32 %v1365, %v1445
    %v1447 = vpop.f32.mrf.mxu0
    %1448 = vdwg.mxu0
    %v1449 = vadd.f32 %v1441, %v1240
    %v1450 = vadd.f32 %v1446, %v1241
    %v1451 = vld [vmem:[%s16] sm:$0x1]
    %v1452 = vld [vmem:[%s17] sm:$0x1]
    %v1453 = vsel %vm183, %v1449, 0.0
    %1454 = vadd.xlane.f32.xlu0 %v1453
    %v1455 = vpop.xlane.xlu0 %1454
    %v1456 = vsel %vm183, %v1450, 0.0
    %1457 = vadd.xlane.f32.xlu0 %v1456
    %v1458 = vpop.xlane.xlu0 %1457
    %v1459 = vmul.f32 %v1455, %v190
    %v1460 = vmul.f32 %v1458, %v190
    %v1461 = vsub.f32 %v1449, %v1459
    %v1462 = vsub.f32 %v1450, %v1460
    %v1463 = vmul.f32 %v1461, %v1461
    %v1464 = vmul.f32 %v1462, %v1462
    %v1465 = vsel %vm183, %v1463, 0.0
    %1466 = vadd.xlane.f32.xlu0 %v1465
    %v1467 = vpop.xlane.xlu0 %1466
    %v1468 = vsel %vm183, %v1464, 0.0
    %1469 = vadd.xlane.f32.xlu0 %v1468
    %v1470 = vpop.xlane.xlu0 %1469
    %v1471 = vmul.f32 %v1467, %v190
    %v1472 = vmul.f32 %v1470, %v190
    %v1473 = vadd.f32 %v1471, 1e-12
    %v1474 = vadd.f32 %v1472, 1e-12
    %v1475 = vrsqrt.pop %v1473
    %v1476 = vrsqrt.pop %v1474
    %v1477 = vmul.f32 %v1461, %v1475
    %v1478 = vmul.f32 %v1462, %v1476
    %v1480 = vlaneseq
    %v1481 = vshrl.u32 %v1480, 7
    %v1482 = vsub.s32 0, %v1481
    %v1483 = vrot.slane %v1451, %v1482
    %v1485 = vmul.f32 %v1477, %v1483
    %v1486 = vmul.f32 %v1478, %v1483
    %v1488 = vlaneseq
    %v1489 = vshrl.u32 %v1488, 7
    %v1490 = vsub.s32 0, %v1489
    %v1491 = vrot.slane %v1452, %v1490
    %v1493 = vadd.f32 %v1485, %v1491
    %v1494 = vadd.f32 %v1486, %v1491
    %s1495 = scalar_lea.vmem %s6, 32
    %v1496 = vld [vmem:[%s1495] sm:$0xff]
    %v1497 = vld [vmem:[%s1495 + $0x8] sm:$0xff]
    %v1498 = vld [vmem:[%s1495 + $0x10] sm:$0xff]
    %v1499 = vld [vmem:[%s1495 + $0x18] sm:$0xff]
    %s1500 = scalar_lea.vmem %s7, 1
    %v1501 = vld [vmem:[%s1500] sm:$0x1]
    %v1503 = vlaneseq
    %v1504 = vshrl.u32 %v1503, 7
    %v1505 = vsub.s32 0, %v1504
    %v1506 = vrot.slane %v1501, %v1505
    %v1509 = vsel %vm183, %v1493, 0
    %v1512 = vsel %vm183, %v1494, 0
    %1514 = vmatprep.subr.mxu0 0.0
    %1515 = vmatpush1.msra.mxu0 0.0
    %1516 = vmatprep.subr.mxu0 0.0
    %1517 = vmatpush1.msra.mxu0 0.0
    %1518 = vmatprep.subr.mxu0 0.0
    %1519 = vmatpush1.msra.mxu0 0.0
    %1520 = vmatprep.subr.mxu0 0.0
    %1521 = vmatpush1.msra.mxu0 0.0
    %1522 = vmatprep.subr.mxu0 0.0
    %1523 = vmatpush1.msra.mxu0 0.0
    %1524 = vmatprep.subr.mxu0 0.0
    %1525 = vmatpush1.msra.mxu0 0.0
    %1526 = vmatprep.subr.mxu0 0.0
    %1527 = vmatpush1.msra.mxu0 0.0
    %1528 = vmatprep.subr.mxu0 0.0
    %1529 = vmatpush1.msra.mxu0 0.0
    %1530 = vmatprep.subr.mxu0 0.0
    %1531 = vmatpush1.msra.mxu0 0.0
    %1532 = vmatprep.subr.mxu0 0.0
    %1533 = vmatpush1.msra.mxu0 0.0
    %1534 = vmatprep.subr.mxu0 0.0
    %1535 = vmatpush1.msra.mxu0 0.0
    %1536 = vmatprep.subr.mxu0 0.0
    %1537 = vmatpush1.msra.mxu0 0.0
    %1538 = vmatprep.subr.mxu0 0.0
    %1539 = vmatpush1.msra.mxu0 %v1499
    %1540 = vmatprep.subr.mxu0 0.0
    %1541 = vmatpush1.msra.mxu0 %v1498
    %1542 = vmatprep.subr.mxu0 0.0
    %1543 = vmatpush1.msra.mxu0 %v1497
    %1544 = vmatprep.subr.mxu0 0.0
    %1545 = vmatpush1.msra.mxu0 %v1496
    %1546 = vmatprep.subr.mxu0 0.0
    %1547 = vmatpush2.msra.mxu0 0.0
    %1548 = vmatprep.subr.mxu0 0.0
    %1549 = vmatpush2.msra.mxu0 0.0
    %1550 = vmatprep.subr.mxu0 0.0
    %1551 = vmatpush2.msra.mxu0 0.0
    %1552 = vmatprep.subr.mxu0 0.0
    %1553 = vmatpush2.msra.mxu0 0.0
    %1554 = vmatprep.subr.mxu0 0.0
    %1555 = vmatpush2.msra.mxu0 0.0
    %1556 = vmatprep.subr.mxu0 0.0
    %1557 = vmatpush2.msra.mxu0 0.0
    %1558 = vmatprep.subr.mxu0 0.0
    %1559 = vmatpush2.msra.mxu0 0.0
    %1560 = vmatprep.subr.mxu0 0.0
    %1561 = vmatpush2.msra.mxu0 0.0
    %1562 = vmatprep.subr.mxu0 0.0
    %1563 = vmatpush2.msra.mxu0 0.0
    %1564 = vmatprep.subr.mxu0 0.0
    %1565 = vmatpush2.msra.mxu0 0.0
    %1566 = vmatprep.subr.mxu0 0.0
    %1567 = vmatpush2.msra.mxu0 0.0
    %1568 = vmatprep.subr.mxu0 0.0
    %1569 = vmatpush2.msra.mxu0 0.0
    %1570 = vmatprep.subr.mxu0 0.0
    %1571 = vmatpush2.msra.mxu0 0.0
    %1572 = vmatprep.subr.mxu0 0.0
    %1573 = vmatpush2.msra.mxu0 0.0
    %1574 = vmatprep.subr.mxu0 0.0
    %1575 = vmatpush2.msra.mxu0 0.0
    %1576 = vmatprep.subr.mxu0 0.0
    %1577 = vmatpush2.msra.mxu0 0.0
    %1578 = vmatprep.mubr.f32.mxu0 0.0
    %1579 = vmatmul.mubr.f32.gmra.mxu0 %v1509
    %v1580 = vpop.f32.mrf.mxu0
    %v1581 = vadd.f32 %v1506, %v1580
    %v1582 = vpop.f32.mrf.mxu0
    %1583 = vmatprep.mubr.f32.mxu0 0.0
    %1584 = vmatmul.mubr.f32.gmra.mxu0 %v1512
    %v1585 = vpop.f32.mrf.mxu0
    %v1586 = vadd.f32 %v1506, %v1585
    %v1587 = vpop.f32.mrf.mxu0
    %1588 = vdwg.mxu0
    %s1589 = scalar_lea.vmem %s8, 32
    %v1590 = vld [vmem:[%s1589] sm:$0xff]
    %v1591 = vld [vmem:[%s1589 + $0x8] sm:$0xff]
    %v1592 = vld [vmem:[%s1589 + $0x10] sm:$0xff]
    %v1593 = vld [vmem:[%s1589 + $0x18] sm:$0xff]
    %1595 = vrot.lane.b32.xlu0 %v1581, 96
    %v1596 = vpop.permute.xlu0 %1595
    %v1597 = vsel %vm350, %v1581, 0
    %v1599 = vsel %vm350, %v1596, 0
    %1601 = vmatprep.subr.mxu0 0.0
    %1602 = vmatpush1.xpose.msra.mxu0 0.0
    %1603 = vmatprep.subr.mxu0 0.0
    %1604 = vmatpush1.xpose.msra.mxu0 0.0
    %1605 = vmatprep.subr.mxu0 0.0
    %1606 = vmatpush1.xpose.msra.mxu0 0.0
    %1607 = vmatprep.subr.mxu0 0.0
    %1608 = vmatpush1.xpose.msra.mxu0 0.0
    %1609 = vmatprep.subr.mxu0 0.0
    %1610 = vmatpush1.xpose.msra.mxu0 0.0
    %1611 = vmatprep.subr.mxu0 0.0
    %1612 = vmatpush1.xpose.msra.mxu0 0.0
    %1613 = vmatprep.subr.mxu0 0.0
    %1614 = vmatpush1.xpose.msra.mxu0 0.0
    %1615 = vmatprep.subr.mxu0 0.0
    %1616 = vmatpush1.xpose.msra.mxu0 0.0
    %1617 = vmatprep.subr.mxu0 0.0
    %1618 = vmatpush1.xpose.msra.mxu0 0.0
    %1619 = vmatprep.subr.mxu0 0.0
    %1620 = vmatpush1.xpose.msra.mxu0 0.0
    %1621 = vmatprep.subr.mxu0 0.0
    %1622 = vmatpush1.xpose.msra.mxu0 0.0
    %1623 = vmatprep.subr.mxu0 0.0
    %1624 = vmatpush1.xpose.msra.mxu0 0.0
    %1625 = vmatprep.subr.mxu0 0.0
    %1626 = vmatpush1.xpose.msra.mxu0 0.0
    %1627 = vmatprep.subr.mxu0 0.0
    %1628 = vmatpush1.xpose.msra.mxu0 0.0
    %1629 = vmatprep.subr.mxu0 0.0
    %1630 = vmatpush1.xpose.msra.mxu0 0.0
    %1631 = vmatprep.subr.mxu0 0.0
    %1632 = vmatpush1.xpose.msra.mxu0 %v1599
    %1633 = vmatprep.subr.mxu0 0.0
    %1634 = vmatpush2.xpose.msra.mxu0 0.0
    %1635 = vmatprep.subr.mxu0 0.0
    %1636 = vmatpush2.xpose.msra.mxu0 0.0
    %1637 = vmatprep.subr.mxu0 0.0
    %1638 = vmatpush2.xpose.msra.mxu0 0.0
    %1639 = vmatprep.subr.mxu0 0.0
    %1640 = vmatpush2.xpose.msra.mxu0 0.0
    %1641 = vmatprep.subr.mxu0 0.0
    %1642 = vmatpush2.xpose.msra.mxu0 0.0
    %1643 = vmatprep.subr.mxu0 0.0
    %1644 = vmatpush2.xpose.msra.mxu0 0.0
    %1645 = vmatprep.subr.mxu0 0.0
    %1646 = vmatpush2.xpose.msra.mxu0 0.0
    %1647 = vmatprep.subr.mxu0 0.0
    %1648 = vmatpush2.xpose.msra.mxu0 0.0
    %1649 = vmatprep.subr.mxu0 0.0
    %1650 = vmatpush2.xpose.msra.mxu0 0.0
    %1651 = vmatprep.subr.mxu0 0.0
    %1652 = vmatpush2.xpose.msra.mxu0 0.0
    %1653 = vmatprep.subr.mxu0 0.0
    %1654 = vmatpush2.xpose.msra.mxu0 0.0
    %1655 = vmatprep.subr.mxu0 0.0
    %1656 = vmatpush2.xpose.msra.mxu0 0.0
    %1657 = vmatprep.subr.mxu0 0.0
    %1658 = vmatpush2.xpose.msra.mxu0 0.0
    %1659 = vmatprep.subr.mxu0 0.0
    %1660 = vmatpush2.xpose.msra.mxu0 0.0
    %1661 = vmatprep.subr.mxu0 0.0
    %1662 = vmatpush2.xpose.msra.mxu0 0.0
    %1663 = vmatprep.subr.mxu0 0.0
    %1664 = vmatpush2.xpose.msra.mxu0 0.0
    %1665 = vmatprep.mubr.f32.mxu0 0.0
    %1666 = vmatmul.mubr.f32.gmra.mxu0 %v1597
    %v1667 = vpop.f32.mrf.mxu0
    %v1668 = vadd.f32 0.0, %v1667
    %v1669 = vpop.f32.mrf.mxu0
    %1670 = vdwg.mxu0
    %1672 = vrot.lane.b32.xlu0 %v1586, 96
    %v1673 = vpop.permute.xlu0 %1672
    %v1674 = vsel %vm350, %v1586, 0
    %v1676 = vsel %vm350, %v1673, 0
    %1678 = vmatprep.subr.mxu0 0.0
    %1679 = vmatpush1.xpose.msra.mxu0 0.0
    %1680 = vmatprep.subr.mxu0 0.0
    %1681 = vmatpush1.xpose.msra.mxu0 0.0
    %1682 = vmatprep.subr.mxu0 0.0
    %1683 = vmatpush1.xpose.msra.mxu0 0.0
    %1684 = vmatprep.subr.mxu0 0.0
    %1685 = vmatpush1.xpose.msra.mxu0 0.0
    %1686 = vmatprep.subr.mxu0 0.0
    %1687 = vmatpush1.xpose.msra.mxu0 0.0
    %1688 = vmatprep.subr.mxu0 0.0
    %1689 = vmatpush1.xpose.msra.mxu0 0.0
    %1690 = vmatprep.subr.mxu0 0.0
    %1691 = vmatpush1.xpose.msra.mxu0 0.0
    %1692 = vmatprep.subr.mxu0 0.0
    %1693 = vmatpush1.xpose.msra.mxu0 0.0
    %1694 = vmatprep.subr.mxu0 0.0
    %1695 = vmatpush1.xpose.msra.mxu0 0.0
    %1696 = vmatprep.subr.mxu0 0.0
    %1697 = vmatpush1.xpose.msra.mxu0 0.0
    %1698 = vmatprep.subr.mxu0 0.0
    %1699 = vmatpush1.xpose.msra.mxu0 0.0
    %1700 = vmatprep.subr.mxu0 0.0
    %1701 = vmatpush1.xpose.msra.mxu0 0.0
    %1702 = vmatprep.subr.mxu0 0.0
    %1703 = vmatpush1.xpose.msra.mxu0 0.0
    %1704 = vmatprep.subr.mxu0 0.0
    %1705 = vmatpush1.xpose.msra.mxu0 0.0
    %1706 = vmatprep.subr.mxu0 0.0
    %1707 = vmatpush1.xpose.msra.mxu0 0.0
    %1708 = vmatprep.subr.mxu0 0.0
    %1709 = vmatpush1.xpose.msra.mxu0 %v1676
    %1710 = vmatprep.subr.mxu0 0.0
    %1711 = vmatpush2.xpose.msra.mxu0 0.0
    %1712 = vmatprep.subr.mxu0 0.0
    %1713 = vmatpush2.xpose.msra.mxu0 0.0
    %1714 = vmatprep.subr.mxu0 0.0
    %1715 = vmatpush2.xpose.msra.mxu0 0.0
    %1716 = vmatprep.subr.mxu0 0.0
    %1717 = vmatpush2.xpose.msra.mxu0 0.0
    %1718 = vmatprep.subr.mxu0 0.0
    %1719 = vmatpush2.xpose.msra.mxu0 0.0
    %1720 = vmatprep.subr.mxu0 0.0
    %1721 = vmatpush2.xpose.msra.mxu0 0.0
    %1722 = vmatprep.subr.mxu0 0.0
    %1723 = vmatpush2.xpose.msra.mxu0 0.0
    %1724 = vmatprep.subr.mxu0 0.0
    %1725 = vmatpush2.xpose.msra.mxu0 0.0
    %1726 = vmatprep.subr.mxu0 0.0
    %1727 = vmatpush2.xpose.msra.mxu0 0.0
    %1728 = vmatprep.subr.mxu0 0.0
    %1729 = vmatpush2.xpose.msra.mxu0 0.0
    %1730 = vmatprep.subr.mxu0 0.0
    %1731 = vmatpush2.xpose.msra.mxu0 0.0
    %1732 = vmatprep.subr.mxu0 0.0
    %1733 = vmatpush2.xpose.msra.mxu0 0.0
    %1734 = vmatprep.subr.mxu0 0.0
    %1735 = vmatpush2.xpose.msra.mxu0 0.0
    %1736 = vmatprep.subr.mxu0 0.0
    %1737 = vmatpush2.xpose.msra.mxu0 0.0
    %1738 = vmatprep.subr.mxu0 0.0
    %1739 = vmatpush2.xpose.msra.mxu0 0.0
    %1740 = vmatprep.subr.mxu0 0.0
    %1741 = vmatpush2.xpose.msra.mxu0 0.0
    %1742 = vmatprep.mubr.f32.mxu0 0.0
    %1743 = vmatmul.mubr.f32.gmra.mxu0 %v1674
    %v1744 = vpop.f32.mrf.mxu0
    %v1745 = vadd.f32 0.0, %v1744
    %v1746 = vpop.f32.mrf.mxu0
    %1747 = vdwg.mxu0
    %v1748 = vmul.f32 %v1668, 0.25
    %v1749 = vmul.f32 %v1745, 0.25
    %v1750 = vadd.f32 %v1748, %v507
    %v1751 = vadd.f32 %v1749, %v511
    %v1752 = vsel %vm516, %v1750, -inf
    %1753 = vmax.xlane.f32.xlu0 %v1752
    %v1754 = vpop.xlane.xlu0 %1753
    %v1755 = vsel %vm516, %v1751, -inf
    %1756 = vmax.xlane.f32.xlu0 %v1755
    %v1757 = vpop.xlane.xlu0 %1756
    %v1758 = vsub.f32 %v1750, %v1754
    %v1759 = vsub.f32 %v1751, %v1757
    %v1760 = vmul.f32 %v1758, 1.442695
    %v1761 = vpow.pop %v1760
    %v1762 = vmul.f32 %v1759, 1.442695
    %v1763 = vpow.pop %v1762
    %v1764 = vsel %vm516, %v1761, 0.0
    %1765 = vadd.xlane.f32.xlu0 %v1764
    %v1766 = vpop.xlane.xlu0 %1765
    %v1767 = vsel %vm516, %v1763, 0.0
    %1768 = vadd.xlane.f32.xlu0 %v1767
    %v1769 = vpop.xlane.xlu0 %1768
    %v1770 = vrcp.pop %v1766
    %v1771 = vmul.f32 %v1761, %v1770
    %v1772 = vrcp.pop %v1769
    %v1773 = vmul.f32 %v1763, %v1772
    %1774 = vrot.lane.b32.xlu0 %v1581, 64
    %v1775 = vpop.permute.xlu0 %1774
    %v1778 = vsel %vm516, %v1771, 0
    %1780 = vmatprep.subr.mxu0 0.0
    %1781 = vmatpush1.msra.mxu0 0.0
    %1782 = vmatprep.subr.mxu0 0.0
    %1783 = vmatpush1.msra.mxu0 0.0
    %1784 = vmatprep.subr.mxu0 0.0
    %1785 = vmatpush1.msra.mxu0 0.0
    %1786 = vmatprep.subr.mxu0 0.0
    %1787 = vmatpush1.msra.mxu0 0.0
    %1788 = vmatprep.subr.mxu0 0.0
    %1789 = vmatpush1.msra.mxu0 0.0
    %1790 = vmatprep.subr.mxu0 0.0
    %1791 = vmatpush1.msra.mxu0 0.0
    %1792 = vmatprep.subr.mxu0 0.0
    %1793 = vmatpush1.msra.mxu0 0.0
    %1794 = vmatprep.subr.mxu0 0.0
    %1795 = vmatpush1.msra.mxu0 0.0
    %1796 = vmatprep.subr.mxu0 0.0
    %1797 = vmatpush1.msra.mxu0 0.0
    %1798 = vmatprep.subr.mxu0 0.0
    %1799 = vmatpush1.msra.mxu0 0.0
    %1800 = vmatprep.subr.mxu0 0.0
    %1801 = vmatpush1.msra.mxu0 0.0
    %1802 = vmatprep.subr.mxu0 0.0
    %1803 = vmatpush1.msra.mxu0 0.0
    %1804 = vmatprep.subr.mxu0 0.0
    %1805 = vmatpush1.msra.mxu0 0.0
    %1806 = vmatprep.subr.mxu0 0.0
    %1807 = vmatpush1.msra.mxu0 0.0
    %1808 = vmatprep.subr.mxu0 0.0
    %1809 = vmatpush1.msra.mxu0 0.0
    %1810 = vmatprep.subr.mxu0 0.0
    %1811 = vmatpush1.msra.mxu0 %v1775
    %1812 = vmatprep.subr.mxu0 0.0
    %1813 = vmatpush2.msra.mxu0 0.0
    %1814 = vmatprep.subr.mxu0 0.0
    %1815 = vmatpush2.msra.mxu0 0.0
    %1816 = vmatprep.subr.mxu0 0.0
    %1817 = vmatpush2.msra.mxu0 0.0
    %1818 = vmatprep.subr.mxu0 0.0
    %1819 = vmatpush2.msra.mxu0 0.0
    %1820 = vmatprep.subr.mxu0 0.0
    %1821 = vmatpush2.msra.mxu0 0.0
    %1822 = vmatprep.subr.mxu0 0.0
    %1823 = vmatpush2.msra.mxu0 0.0
    %1824 = vmatprep.subr.mxu0 0.0
    %1825 = vmatpush2.msra.mxu0 0.0
    %1826 = vmatprep.subr.mxu0 0.0
    %1827 = vmatpush2.msra.mxu0 0.0
    %1828 = vmatprep.subr.mxu0 0.0
    %1829 = vmatpush2.msra.mxu0 0.0
    %1830 = vmatprep.subr.mxu0 0.0
    %1831 = vmatpush2.msra.mxu0 0.0
    %1832 = vmatprep.subr.mxu0 0.0
    %1833 = vmatpush2.msra.mxu0 0.0
    %1834 = vmatprep.subr.mxu0 0.0
    %1835 = vmatpush2.msra.mxu0 0.0
    %1836 = vmatprep.subr.mxu0 0.0
    %1837 = vmatpush2.msra.mxu0 0.0
    %1838 = vmatprep.subr.mxu0 0.0
    %1839 = vmatpush2.msra.mxu0 0.0
    %1840 = vmatprep.subr.mxu0 0.0
    %1841 = vmatpush2.msra.mxu0 0.0
    %1842 = vmatprep.subr.mxu0 0.0
    %1843 = vmatpush2.msra.mxu0 0.0
    %1844 = vmatprep.mubr.f32.mxu0 0.0
    %1845 = vmatmul.mubr.f32.gmra.mxu0 %v1778
    %v1846 = vpop.f32.mrf.mxu0
    %v1847 = vadd.f32 0.0, %v1846
    %v1848 = vpop.f32.mrf.mxu0
    %1849 = vdwg.mxu0
    %1850 = vrot.lane.b32.xlu0 %v1586, 64
    %v1851 = vpop.permute.xlu0 %1850
    %v1854 = vsel %vm516, %v1773, 0
    %1856 = vmatprep.subr.mxu0 0.0
    %1857 = vmatpush1.msra.mxu0 0.0
    %1858 = vmatprep.subr.mxu0 0.0
    %1859 = vmatpush1.msra.mxu0 0.0
    %1860 = vmatprep.subr.mxu0 0.0
    %1861 = vmatpush1.msra.mxu0 0.0
    %1862 = vmatprep.subr.mxu0 0.0
    %1863 = vmatpush1.msra.mxu0 0.0
    %1864 = vmatprep.subr.mxu0 0.0
    %1865 = vmatpush1.msra.mxu0 0.0
    %1866 = vmatprep.subr.mxu0 0.0
    %1867 = vmatpush1.msra.mxu0 0.0
    %1868 = vmatprep.subr.mxu0 0.0
    %1869 = vmatpush1.msra.mxu0 0.0
    %1870 = vmatprep.subr.mxu0 0.0
    %1871 = vmatpush1.msra.mxu0 0.0
    %1872 = vmatprep.subr.mxu0 0.0
    %1873 = vmatpush1.msra.mxu0 0.0
    %1874 = vmatprep.subr.mxu0 0.0
    %1875 = vmatpush1.msra.mxu0 0.0
    %1876 = vmatprep.subr.mxu0 0.0
    %1877 = vmatpush1.msra.mxu0 0.0
    %1878 = vmatprep.subr.mxu0 0.0
    %1879 = vmatpush1.msra.mxu0 0.0
    %1880 = vmatprep.subr.mxu0 0.0
    %1881 = vmatpush1.msra.mxu0 0.0
    %1882 = vmatprep.subr.mxu0 0.0
    %1883 = vmatpush1.msra.mxu0 0.0
    %1884 = vmatprep.subr.mxu0 0.0
    %1885 = vmatpush1.msra.mxu0 0.0
    %1886 = vmatprep.subr.mxu0 0.0
    %1887 = vmatpush1.msra.mxu0 %v1851
    %1888 = vmatprep.subr.mxu0 0.0
    %1889 = vmatpush2.msra.mxu0 0.0
    %1890 = vmatprep.subr.mxu0 0.0
    %1891 = vmatpush2.msra.mxu0 0.0
    %1892 = vmatprep.subr.mxu0 0.0
    %1893 = vmatpush2.msra.mxu0 0.0
    %1894 = vmatprep.subr.mxu0 0.0
    %1895 = vmatpush2.msra.mxu0 0.0
    %1896 = vmatprep.subr.mxu0 0.0
    %1897 = vmatpush2.msra.mxu0 0.0
    %1898 = vmatprep.subr.mxu0 0.0
    %1899 = vmatpush2.msra.mxu0 0.0
    %1900 = vmatprep.subr.mxu0 0.0
    %1901 = vmatpush2.msra.mxu0 0.0
    %1902 = vmatprep.subr.mxu0 0.0
    %1903 = vmatpush2.msra.mxu0 0.0
    %1904 = vmatprep.subr.mxu0 0.0
    %1905 = vmatpush2.msra.mxu0 0.0
    %1906 = vmatprep.subr.mxu0 0.0
    %1907 = vmatpush2.msra.mxu0 0.0
    %1908 = vmatprep.subr.mxu0 0.0
    %1909 = vmatpush2.msra.mxu0 0.0
    %1910 = vmatprep.subr.mxu0 0.0
    %1911 = vmatpush2.msra.mxu0 0.0
    %1912 = vmatprep.subr.mxu0 0.0
    %1913 = vmatpush2.msra.mxu0 0.0
    %1914 = vmatprep.subr.mxu0 0.0
    %1915 = vmatpush2.msra.mxu0 0.0
    %1916 = vmatprep.subr.mxu0 0.0
    %1917 = vmatpush2.msra.mxu0 0.0
    %1918 = vmatprep.subr.mxu0 0.0
    %1919 = vmatpush2.msra.mxu0 0.0
    %1920 = vmatprep.mubr.f32.mxu0 0.0
    %1921 = vmatmul.mubr.f32.gmra.mxu0 %v1854
    %v1922 = vpop.f32.mrf.mxu0
    %v1923 = vadd.f32 0.0, %v1922
    %v1924 = vpop.f32.mrf.mxu0
    %1925 = vdwg.mxu0
    %1926 = vrot.lane.b32.xlu0 %v1581, 112
    %v1927 = vpop.permute.xlu0 %1926
    %1928 = vrot.lane.b32.xlu0 %v1581, 80
    %v1929 = vpop.permute.xlu0 %1928
    %v1930 = vsel %vm350, %v1927, 0
    %v1932 = vsel %vm350, %v1929, 0
    %1934 = vmatprep.subr.mxu0 0.0
    %1935 = vmatpush1.xpose.msra.mxu0 0.0
    %1936 = vmatprep.subr.mxu0 0.0
    %1937 = vmatpush1.xpose.msra.mxu0 0.0
    %1938 = vmatprep.subr.mxu0 0.0
    %1939 = vmatpush1.xpose.msra.mxu0 0.0
    %1940 = vmatprep.subr.mxu0 0.0
    %1941 = vmatpush1.xpose.msra.mxu0 0.0
    %1942 = vmatprep.subr.mxu0 0.0
    %1943 = vmatpush1.xpose.msra.mxu0 0.0
    %1944 = vmatprep.subr.mxu0 0.0
    %1945 = vmatpush1.xpose.msra.mxu0 0.0
    %1946 = vmatprep.subr.mxu0 0.0
    %1947 = vmatpush1.xpose.msra.mxu0 0.0
    %1948 = vmatprep.subr.mxu0 0.0
    %1949 = vmatpush1.xpose.msra.mxu0 0.0
    %1950 = vmatprep.subr.mxu0 0.0
    %1951 = vmatpush1.xpose.msra.mxu0 0.0
    %1952 = vmatprep.subr.mxu0 0.0
    %1953 = vmatpush1.xpose.msra.mxu0 0.0
    %1954 = vmatprep.subr.mxu0 0.0
    %1955 = vmatpush1.xpose.msra.mxu0 0.0
    %1956 = vmatprep.subr.mxu0 0.0
    %1957 = vmatpush1.xpose.msra.mxu0 0.0
    %1958 = vmatprep.subr.mxu0 0.0
    %1959 = vmatpush1.xpose.msra.mxu0 0.0
    %1960 = vmatprep.subr.mxu0 0.0
    %1961 = vmatpush1.xpose.msra.mxu0 0.0
    %1962 = vmatprep.subr.mxu0 0.0
    %1963 = vmatpush1.xpose.msra.mxu0 0.0
    %1964 = vmatprep.subr.mxu0 0.0
    %1965 = vmatpush1.xpose.msra.mxu0 %v1932
    %1966 = vmatprep.subr.mxu0 0.0
    %1967 = vmatpush2.xpose.msra.mxu0 0.0
    %1968 = vmatprep.subr.mxu0 0.0
    %1969 = vmatpush2.xpose.msra.mxu0 0.0
    %1970 = vmatprep.subr.mxu0 0.0
    %1971 = vmatpush2.xpose.msra.mxu0 0.0
    %1972 = vmatprep.subr.mxu0 0.0
    %1973 = vmatpush2.xpose.msra.mxu0 0.0
    %1974 = vmatprep.subr.mxu0 0.0
    %1975 = vmatpush2.xpose.msra.mxu0 0.0
    %1976 = vmatprep.subr.mxu0 0.0
    %1977 = vmatpush2.xpose.msra.mxu0 0.0
    %1978 = vmatprep.subr.mxu0 0.0
    %1979 = vmatpush2.xpose.msra.mxu0 0.0
    %1980 = vmatprep.subr.mxu0 0.0
    %1981 = vmatpush2.xpose.msra.mxu0 0.0
    %1982 = vmatprep.subr.mxu0 0.0
    %1983 = vmatpush2.xpose.msra.mxu0 0.0
    %1984 = vmatprep.subr.mxu0 0.0
    %1985 = vmatpush2.xpose.msra.mxu0 0.0
    %1986 = vmatprep.subr.mxu0 0.0
    %1987 = vmatpush2.xpose.msra.mxu0 0.0
    %1988 = vmatprep.subr.mxu0 0.0
    %1989 = vmatpush2.xpose.msra.mxu0 0.0
    %1990 = vmatprep.subr.mxu0 0.0
    %1991 = vmatpush2.xpose.msra.mxu0 0.0
    %1992 = vmatprep.subr.mxu0 0.0
    %1993 = vmatpush2.xpose.msra.mxu0 0.0
    %1994 = vmatprep.subr.mxu0 0.0
    %1995 = vmatpush2.xpose.msra.mxu0 0.0
    %1996 = vmatprep.subr.mxu0 0.0
    %1997 = vmatpush2.xpose.msra.mxu0 0.0
    %1998 = vmatprep.mubr.f32.mxu0 0.0
    %1999 = vmatmul.mubr.f32.gmra.mxu0 %v1930
    %v2000 = vpop.f32.mrf.mxu0
    %v2001 = vadd.f32 0.0, %v2000
    %v2002 = vpop.f32.mrf.mxu0
    %2003 = vdwg.mxu0
    %2004 = vrot.lane.b32.xlu0 %v1586, 112
    %v2005 = vpop.permute.xlu0 %2004
    %2006 = vrot.lane.b32.xlu0 %v1586, 80
    %v2007 = vpop.permute.xlu0 %2006
    %v2008 = vsel %vm350, %v2005, 0
    %v2010 = vsel %vm350, %v2007, 0
    %2012 = vmatprep.subr.mxu0 0.0
    %2013 = vmatpush1.xpose.msra.mxu0 0.0
    %2014 = vmatprep.subr.mxu0 0.0
    %2015 = vmatpush1.xpose.msra.mxu0 0.0
    %2016 = vmatprep.subr.mxu0 0.0
    %2017 = vmatpush1.xpose.msra.mxu0 0.0
    %2018 = vmatprep.subr.mxu0 0.0
    %2019 = vmatpush1.xpose.msra.mxu0 0.0
    %2020 = vmatprep.subr.mxu0 0.0
    %2021 = vmatpush1.xpose.msra.mxu0 0.0
    %2022 = vmatprep.subr.mxu0 0.0
    %2023 = vmatpush1.xpose.msra.mxu0 0.0
    %2024 = vmatprep.subr.mxu0 0.0
    %2025 = vmatpush1.xpose.msra.mxu0 0.0
    %2026 = vmatprep.subr.mxu0 0.0
    %2027 = vmatpush1.xpose.msra.mxu0 0.0
    %2028 = vmatprep.subr.mxu0 0.0
    %2029 = vmatpush1.xpose.msra.mxu0 0.0
    %2030 = vmatprep.subr.mxu0 0.0
    %2031 = vmatpush1.xpose.msra.mxu0 0.0
    %2032 = vmatprep.subr.mxu0 0.0
    %2033 = vmatpush1.xpose.msra.mxu0 0.0
    %2034 = vmatprep.subr.mxu0 0.0
    %2035 = vmatpush1.xpose.msra.mxu0 0.0
    %2036 = vmatprep.subr.mxu0 0.0
    %2037 = vmatpush1.xpose.msra.mxu0 0.0
    %2038 = vmatprep.subr.mxu0 0.0
    %2039 = vmatpush1.xpose.msra.mxu0 0.0
    %2040 = vmatprep.subr.mxu0 0.0
    %2041 = vmatpush1.xpose.msra.mxu0 0.0
    %2042 = vmatprep.subr.mxu0 0.0
    %2043 = vmatpush1.xpose.msra.mxu0 %v2010
    %2044 = vmatprep.subr.mxu0 0.0
    %2045 = vmatpush2.xpose.msra.mxu0 0.0
    %2046 = vmatprep.subr.mxu0 0.0
    %2047 = vmatpush2.xpose.msra.mxu0 0.0
    %2048 = vmatprep.subr.mxu0 0.0
    %2049 = vmatpush2.xpose.msra.mxu0 0.0
    %2050 = vmatprep.subr.mxu0 0.0
    %2051 = vmatpush2.xpose.msra.mxu0 0.0
    %2052 = vmatprep.subr.mxu0 0.0
    %2053 = vmatpush2.xpose.msra.mxu0 0.0
    %2054 = vmatprep.subr.mxu0 0.0
    %2055 = vmatpush2.xpose.msra.mxu0 0.0
    %2056 = vmatprep.subr.mxu0 0.0
    %2057 = vmatpush2.xpose.msra.mxu0 0.0
    %2058 = vmatprep.subr.mxu0 0.0
    %2059 = vmatpush2.xpose.msra.mxu0 0.0
    %2060 = vmatprep.subr.mxu0 0.0
    %2061 = vmatpush2.xpose.msra.mxu0 0.0
    %2062 = vmatprep.subr.mxu0 0.0
    %2063 = vmatpush2.xpose.msra.mxu0 0.0
    %2064 = vmatprep.subr.mxu0 0.0
    %2065 = vmatpush2.xpose.msra.mxu0 0.0
    %2066 = vmatprep.subr.mxu0 0.0
    %2067 = vmatpush2.xpose.msra.mxu0 0.0
    %2068 = vmatprep.subr.mxu0 0.0
    %2069 = vmatpush2.xpose.msra.mxu0 0.0
    %2070 = vmatprep.subr.mxu0 0.0
    %2071 = vmatpush2.xpose.msra.mxu0 0.0
    %2072 = vmatprep.subr.mxu0 0.0
    %2073 = vmatpush2.xpose.msra.mxu0 0.0
    %2074 = vmatprep.subr.mxu0 0.0
    %2075 = vmatpush2.xpose.msra.mxu0 0.0
    %2076 = vmatprep.mubr.f32.mxu0 0.0
    %2077 = vmatmul.mubr.f32.gmra.mxu0 %v2008
    %v2078 = vpop.f32.mrf.mxu0
    %v2079 = vadd.f32 0.0, %v2078
    %v2080 = vpop.f32.mrf.mxu0
    %2081 = vdwg.mxu0
    %v2082 = vmul.f32 %v2001, 0.25
    %v2083 = vmul.f32 %v2079, 0.25
    %v2084 = vadd.f32 %v2082, %v507
    %v2085 = vadd.f32 %v2083, %v511
    %v2086 = vsel %vm516, %v2084, -inf
    %2087 = vmax.xlane.f32.xlu0 %v2086
    %v2088 = vpop.xlane.xlu0 %2087
    %v2089 = vsel %vm516, %v2085, -inf
    %2090 = vmax.xlane.f32.xlu0 %v2089
    %v2091 = vpop.xlane.xlu0 %2090
    %v2092 = vsub.f32 %v2084, %v2088
    %v2093 = vsub.f32 %v2085, %v2091
    %v2094 = vmul.f32 %v2092, 1.442695
    %v2095 = vpow.pop %v2094
    %v2096 = vmul.f32 %v2093, 1.442695
    %v2097 = vpow.pop %v2096
    %v2098 = vsel %vm516, %v2095, 0.0
    %2099 = vadd.xlane.f32.xlu0 %v2098
    %v2100 = vpop.xlane.xlu0 %2099
    %v2101 = vsel %vm516, %v2097, 0.0
    %2102 = vadd.xlane.f32.xlu0 %v2101
    %v2103 = vpop.xlane.xlu0 %2102
    %v2104 = vrcp.pop %v2100
    %v2105 = vmul.f32 %v2095, %v2104
    %v2106 = vrcp.pop %v2103
    %v2107 = vmul.f32 %v2097, %v2106
    %2108 = vrot.lane.b32.xlu0 %v1581, 48
    %v2109 = vpop.permute.xlu0 %2108
    %v2112 = vsel %vm516, %v2105, 0
    %2114 = vmatprep.subr.mxu0 0.0
    %2115 = vmatpush1.msra.mxu0 0.0
    %2116 = vmatprep.subr.mxu0 0.0
    %2117 = vmatpush1.msra.mxu0 0.0
    %2118 = vmatprep.subr.mxu0 0.0
    %2119 = vmatpush1.msra.mxu0 0.0
    %2120 = vmatprep.subr.mxu0 0.0
    %2121 = vmatpush1.msra.mxu0 0.0
    %2122 = vmatprep.subr.mxu0 0.0
    %2123 = vmatpush1.msra.mxu0 0.0
    %2124 = vmatprep.subr.mxu0 0.0
    %2125 = vmatpush1.msra.mxu0 0.0
    %2126 = vmatprep.subr.mxu0 0.0
    %2127 = vmatpush1.msra.mxu0 0.0
    %2128 = vmatprep.subr.mxu0 0.0
    %2129 = vmatpush1.msra.mxu0 0.0
    %2130 = vmatprep.subr.mxu0 0.0
    %2131 = vmatpush1.msra.mxu0 0.0
    %2132 = vmatprep.subr.mxu0 0.0
    %2133 = vmatpush1.msra.mxu0 0.0
    %2134 = vmatprep.subr.mxu0 0.0
    %2135 = vmatpush1.msra.mxu0 0.0
    %2136 = vmatprep.subr.mxu0 0.0
    %2137 = vmatpush1.msra.mxu0 0.0
    %2138 = vmatprep.subr.mxu0 0.0
    %2139 = vmatpush1.msra.mxu0 0.0
    %2140 = vmatprep.subr.mxu0 0.0
    %2141 = vmatpush1.msra.mxu0 0.0
    %2142 = vmatprep.subr.mxu0 0.0
    %2143 = vmatpush1.msra.mxu0 0.0
    %2144 = vmatprep.subr.mxu0 0.0
    %2145 = vmatpush1.msra.mxu0 %v2109
    %2146 = vmatprep.subr.mxu0 0.0
    %2147 = vmatpush2.msra.mxu0 0.0
    %2148 = vmatprep.subr.mxu0 0.0
    %2149 = vmatpush2.msra.mxu0 0.0
    %2150 = vmatprep.subr.mxu0 0.0
    %2151 = vmatpush2.msra.mxu0 0.0
    %2152 = vmatprep.subr.mxu0 0.0
    %2153 = vmatpush2.msra.mxu0 0.0
    %2154 = vmatprep.subr.mxu0 0.0
    %2155 = vmatpush2.msra.mxu0 0.0
    %2156 = vmatprep.subr.mxu0 0.0
    %2157 = vmatpush2.msra.mxu0 0.0
    %2158 = vmatprep.subr.mxu0 0.0
    %2159 = vmatpush2.msra.mxu0 0.0
    %2160 = vmatprep.subr.mxu0 0.0
    %2161 = vmatpush2.msra.mxu0 0.0
    %2162 = vmatprep.subr.mxu0 0.0
    %2163 = vmatpush2.msra.mxu0 0.0
    %2164 = vmatprep.subr.mxu0 0.0
    %2165 = vmatpush2.msra.mxu0 0.0
    %2166 = vmatprep.subr.mxu0 0.0
    %2167 = vmatpush2.msra.mxu0 0.0
    %2168 = vmatprep.subr.mxu0 0.0
    %2169 = vmatpush2.msra.mxu0 0.0
    %2170 = vmatprep.subr.mxu0 0.0
    %2171 = vmatpush2.msra.mxu0 0.0
    %2172 = vmatprep.subr.mxu0 0.0
    %2173 = vmatpush2.msra.mxu0 0.0
    %2174 = vmatprep.subr.mxu0 0.0
    %2175 = vmatpush2.msra.mxu0 0.0
    %2176 = vmatprep.subr.mxu0 0.0
    %2177 = vmatpush2.msra.mxu0 0.0
    %2178 = vmatprep.mubr.f32.mxu0 0.0
    %2179 = vmatmul.mubr.f32.gmra.mxu0 %v2112
    %v2180 = vpop.f32.mrf.mxu0
    %v2181 = vadd.f32 0.0, %v2180
    %v2182 = vpop.f32.mrf.mxu0
    %2183 = vdwg.mxu0
    %2184 = vrot.lane.b32.xlu0 %v1586, 48
    %v2185 = vpop.permute.xlu0 %2184
    %v2188 = vsel %vm516, %v2107, 0
    %2190 = vmatprep.subr.mxu0 0.0
    %2191 = vmatpush1.msra.mxu0 0.0
    %2192 = vmatprep.subr.mxu0 0.0
    %2193 = vmatpush1.msra.mxu0 0.0
    %2194 = vmatprep.subr.mxu0 0.0
    %2195 = vmatpush1.msra.mxu0 0.0
    %2196 = vmatprep.subr.mxu0 0.0
    %2197 = vmatpush1.msra.mxu0 0.0
    %2198 = vmatprep.subr.mxu0 0.0
    %2199 = vmatpush1.msra.mxu0 0.0
    %2200 = vmatprep.subr.mxu0 0.0
    %2201 = vmatpush1.msra.mxu0 0.0
    %2202 = vmatprep.subr.mxu0 0.0
    %2203 = vmatpush1.msra.mxu0 0.0
    %2204 = vmatprep.subr.mxu0 0.0
    %2205 = vmatpush1.msra.mxu0 0.0
    %2206 = vmatprep.subr.mxu0 0.0
    %2207 = vmatpush1.msra.mxu0 0.0
    %2208 = vmatprep.subr.mxu0 0.0
    %2209 = vmatpush1.msra.mxu0 0.0
    %2210 = vmatprep.subr.mxu0 0.0
    %2211 = vmatpush1.msra.mxu0 0.0
    %2212 = vmatprep.subr.mxu0 0.0
    %2213 = vmatpush1.msra.mxu0 0.0
    %2214 = vmatprep.subr.mxu0 0.0
    %2215 = vmatpush1.msra.mxu0 0.0
    %2216 = vmatprep.subr.mxu0 0.0
    %2217 = vmatpush1.msra.mxu0 0.0
    %2218 = vmatprep.subr.mxu0 0.0
    %2219 = vmatpush1.msra.mxu0 0.0
    %2220 = vmatprep.subr.mxu0 0.0
    %2221 = vmatpush1.msra.mxu0 %v2185
    %2222 = vmatprep.subr.mxu0 0.0
    %2223 = vmatpush2.msra.mxu0 0.0
    %2224 = vmatprep.subr.mxu0 0.0
    %2225 = vmatpush2.msra.mxu0 0.0
    %2226 = vmatprep.subr.mxu0 0.0
    %2227 = vmatpush2.msra.mxu0 0.0
    %2228 = vmatprep.subr.mxu0 0.0
    %2229 = vmatpush2.msra.mxu0 0.0
    %2230 = vmatprep.subr.mxu0 0.0
    %2231 = vmatpush2.msra.mxu0 0.0
    %2232 = vmatprep.subr.mxu0 0.0
    %2233 = vmatpush2.msra.mxu0 0.0
    %2234 = vmatprep.subr.mxu0 0.0
    %2235 = vmatpush2.msra.mxu0 0.0
    %2236 = vmatprep.subr.mxu0 0.0
    %2237 = vmatpush2.msra.mxu0 0.0
    %2238 = vmatprep.subr.mxu0 0.0
    %2239 = vmatpush2.msra.mxu0 0.0
    %2240 = vmatprep.subr.mxu0 0.0
    %2241 = vmatpush2.msra.mxu0 0.0
    %2242 = vmatprep.subr.mxu0 0.0
    %2243 = vmatpush2.msra.mxu0 0.0
    %2244 = vmatprep.subr.mxu0 0.0
    %2245 = vmatpush2.msra.mxu0 0.0
    %2246 = vmatprep.subr.mxu0 0.0
    %2247 = vmatpush2.msra.mxu0 0.0
    %2248 = vmatprep.subr.mxu0 0.0
    %2249 = vmatpush2.msra.mxu0 0.0
    %2250 = vmatprep.subr.mxu0 0.0
    %2251 = vmatpush2.msra.mxu0 0.0
    %2252 = vmatprep.subr.mxu0 0.0
    %2253 = vmatpush2.msra.mxu0 0.0
    %2254 = vmatprep.mubr.f32.mxu0 0.0
    %2255 = vmatmul.mubr.f32.gmra.mxu0 %v2188
    %v2256 = vpop.f32.mrf.mxu0
    %v2257 = vadd.f32 0.0, %v2256
    %v2258 = vpop.f32.mrf.mxu0
    %2259 = vdwg.mxu0
    %v2261 = vsel %vm350, %v2181, 0
    %v2264 = vsel %vm350, %v2257, 0
    %2266 = vmatprep.subr.mxu0 0.0
    %2267 = vmatpush1.msra.mxu0 0.0
    %2268 = vmatprep.subr.mxu0 0.0
    %2269 = vmatpush1.msra.mxu0 0.0
    %2270 = vmatprep.subr.mxu0 0.0
    %2271 = vmatpush1.msra.mxu0 0.0
    %2272 = vmatprep.subr.mxu0 0.0
    %2273 = vmatpush1.msra.mxu0 0.0
    %2274 = vmatprep.subr.mxu0 0.0
    %2275 = vmatpush1.msra.mxu0 0.0
    %2276 = vmatprep.subr.mxu0 0.0
    %2277 = vmatpush1.msra.mxu0 0.0
    %2278 = vmatprep.subr.mxu0 0.0
    %2279 = vmatpush1.msra.mxu0 0.0
    %2280 = vmatprep.subr.mxu0 0.0
    %2281 = vmatpush1.msra.mxu0 0.0
    %2282 = vmatprep.subr.mxu0 0.0
    %2283 = vmatpush1.msra.mxu0 0.0
    %2284 = vmatprep.subr.mxu0 0.0
    %2285 = vmatpush1.msra.mxu0 0.0
    %2286 = vmatprep.subr.mxu0 0.0
    %2287 = vmatpush1.msra.mxu0 0.0
    %2288 = vmatprep.subr.mxu0 0.0
    %2289 = vmatpush1.msra.mxu0 0.0
    %2290 = vmatprep.subr.mxu0 0.0
    %2291 = vmatpush1.msra.mxu0 0.0
    %2292 = vmatprep.subr.mxu0 0.0
    %2293 = vmatpush1.msra.mxu0 0.0
    %2294 = vmatprep.subr.mxu0 0.0
    %2295 = vmatpush1.msra.mxu0 %v1593
    %2296 = vmatprep.subr.mxu0 0.0
    %2297 = vmatpush1.msra.mxu0 %v1592
    %2298 = vmatprep.subr.mxu0 0.0
    %2299 = vmatpush2.msra.mxu0 0.0
    %2300 = vmatprep.subr.mxu0 0.0
    %2301 = vmatpush2.msra.mxu0 0.0
    %2302 = vmatprep.subr.mxu0 0.0
    %2303 = vmatpush2.msra.mxu0 0.0
    %2304 = vmatprep.subr.mxu0 0.0
    %2305 = vmatpush2.msra.mxu0 0.0
    %2306 = vmatprep.subr.mxu0 0.0
    %2307 = vmatpush2.msra.mxu0 0.0
    %2308 = vmatprep.subr.mxu0 0.0
    %2309 = vmatpush2.msra.mxu0 0.0
    %2310 = vmatprep.subr.mxu0 0.0
    %2311 = vmatpush2.msra.mxu0 0.0
    %2312 = vmatprep.subr.mxu0 0.0
    %2313 = vmatpush2.msra.mxu0 0.0
    %2314 = vmatprep.subr.mxu0 0.0
    %2315 = vmatpush2.msra.mxu0 0.0
    %2316 = vmatprep.subr.mxu0 0.0
    %2317 = vmatpush2.msra.mxu0 0.0
    %2318 = vmatprep.subr.mxu0 0.0
    %2319 = vmatpush2.msra.mxu0 0.0
    %2320 = vmatprep.subr.mxu0 0.0
    %2321 = vmatpush2.msra.mxu0 0.0
    %2322 = vmatprep.subr.mxu0 0.0
    %2323 = vmatpush2.msra.mxu0 0.0
    %2324 = vmatprep.subr.mxu0 0.0
    %2325 = vmatpush2.msra.mxu0 0.0
    %2326 = vmatprep.subr.mxu0 0.0
    %2327 = vmatpush2.msra.mxu0 0.0
    %2328 = vmatprep.subr.mxu0 0.0
    %2329 = vmatpush2.msra.mxu0 0.0
    %2330 = vmatprep.mubr.f32.mxu0 0.0
    %2331 = vmatmul.mubr.f32.gmra.mxu0 %v2261
    %v2332 = vpop.f32.mrf.mxu0
    %v2333 = vadd.f32 0.0, %v2332
    %v2334 = vpop.f32.mrf.mxu0
    %2335 = vmatprep.mubr.f32.mxu0 0.0
    %2336 = vmatmul.mubr.f32.gmra.mxu0 %v2264
    %v2337 = vpop.f32.mrf.mxu0
    %v2338 = vadd.f32 0.0, %v2337
    %v2339 = vpop.f32.mrf.mxu0
    %2340 = vdwg.mxu0
    %v2342 = vsel %vm350, %v1847, 0
    %v2345 = vsel %vm350, %v1923, 0
    %2347 = vmatprep.subr.mxu0 0.0
    %2348 = vmatpush1.msra.mxu0 0.0
    %2349 = vmatprep.subr.mxu0 0.0
    %2350 = vmatpush1.msra.mxu0 0.0
    %2351 = vmatprep.subr.mxu0 0.0
    %2352 = vmatpush1.msra.mxu0 0.0
    %2353 = vmatprep.subr.mxu0 0.0
    %2354 = vmatpush1.msra.mxu0 0.0
    %2355 = vmatprep.subr.mxu0 0.0
    %2356 = vmatpush1.msra.mxu0 0.0
    %2357 = vmatprep.subr.mxu0 0.0
    %2358 = vmatpush1.msra.mxu0 0.0
    %2359 = vmatprep.subr.mxu0 0.0
    %2360 = vmatpush1.msra.mxu0 0.0
    %2361 = vmatprep.subr.mxu0 0.0
    %2362 = vmatpush1.msra.mxu0 0.0
    %2363 = vmatprep.subr.mxu0 0.0
    %2364 = vmatpush1.msra.mxu0 0.0
    %2365 = vmatprep.subr.mxu0 0.0
    %2366 = vmatpush1.msra.mxu0 0.0
    %2367 = vmatprep.subr.mxu0 0.0
    %2368 = vmatpush1.msra.mxu0 0.0
    %2369 = vmatprep.subr.mxu0 0.0
    %2370 = vmatpush1.msra.mxu0 0.0
    %2371 = vmatprep.subr.mxu0 0.0
    %2372 = vmatpush1.msra.mxu0 0.0
    %2373 = vmatprep.subr.mxu0 0.0
    %2374 = vmatpush1.msra.mxu0 0.0
    %2375 = vmatprep.subr.mxu0 0.0
    %2376 = vmatpush1.msra.mxu0 %v1591
    %2377 = vmatprep.subr.mxu0 0.0
    %2378 = vmatpush1.msra.mxu0 %v1590
    %2379 = vmatprep.subr.mxu0 0.0
    %2380 = vmatpush2.msra.mxu0 0.0
    %2381 = vmatprep.subr.mxu0 0.0
    %2382 = vmatpush2.msra.mxu0 0.0
    %2383 = vmatprep.subr.mxu0 0.0
    %2384 = vmatpush2.msra.mxu0 0.0
    %2385 = vmatprep.subr.mxu0 0.0
    %2386 = vmatpush2.msra.mxu0 0.0
    %2387 = vmatprep.subr.mxu0 0.0
    %2388 = vmatpush2.msra.mxu0 0.0
    %2389 = vmatprep.subr.mxu0 0.0
    %2390 = vmatpush2.msra.mxu0 0.0
    %2391 = vmatprep.subr.mxu0 0.0
    %2392 = vmatpush2.msra.mxu0 0.0
    %2393 = vmatprep.subr.mxu0 0.0
    %2394 = vmatpush2.msra.mxu0 0.0
    %2395 = vmatprep.subr.mxu0 0.0
    %2396 = vmatpush2.msra.mxu0 0.0
    %2397 = vmatprep.subr.mxu0 0.0
    %2398 = vmatpush2.msra.mxu0 0.0
    %2399 = vmatprep.subr.mxu0 0.0
    %2400 = vmatpush2.msra.mxu0 0.0
    %2401 = vmatprep.subr.mxu0 0.0
    %2402 = vmatpush2.msra.mxu0 0.0
    %2403 = vmatprep.subr.mxu0 0.0
    %2404 = vmatpush2.msra.mxu0 0.0
    %2405 = vmatprep.subr.mxu0 0.0
    %2406 = vmatpush2.msra.mxu0 0.0
    %2407 = vmatprep.subr.mxu0 0.0
    %2408 = vmatpush2.msra.mxu0 0.0
    %2409 = vmatprep.subr.mxu0 0.0
    %2410 = vmatpush2.msra.mxu0 0.0
    %2411 = vmatprep.mubr.f32.mxu0 0.0
    %2412 = vmatmul.mubr.f32.gmra.mxu0 %v2342
    %v2413 = vpop.f32.mrf.mxu0
    %v2414 = vadd.f32 %v2333, %v2413
    %v2415 = vpop.f32.mrf.mxu0
    %2416 = vmatprep.mubr.f32.mxu0 0.0
    %2417 = vmatmul.mubr.f32.gmra.mxu0 %v2345
    %v2418 = vpop.f32.mrf.mxu0
    %v2419 = vadd.f32 %v2338, %v2418
    %v2420 = vpop.f32.mrf.mxu0
    %2421 = vdwg.mxu0
    %s2422 = scalar_lea.vmem %s9, 1
    %v2423 = vld [vmem:[%s2422] sm:$0x1]
    %v2425 = vlaneseq
    %v2426 = vshrl.u32 %v2425, 7
    %v2427 = vsub.s32 0, %v2426
    %v2428 = vrot.slane %v2423, %v2427
    %v2430 = vadd.f32 %v2414, %v2428
    %v2431 = vadd.f32 %v2419, %v2428
    %v2432 = vadd.f32 %v2430, %v1493
    %v2433 = vadd.f32 %v2431, %v1494
    %s2434 = scalar_lea.vmem %s10, 1
    %v2435 = vld [vmem:[%s2434] sm:$0x1]
    %s2436 = scalar_lea.vmem %s11, 1
    %v2437 = vld [vmem:[%s2436] sm:$0x1]
    %v2438 = vsel %vm183, %v2432, 0.0
    %2439 = vadd.xlane.f32.xlu0 %v2438
    %v2440 = vpop.xlane.xlu0 %2439
    %v2441 = vsel %vm183, %v2433, 0.0
    %2442 = vadd.xlane.f32.xlu0 %v2441
    %v2443 = vpop.xlane.xlu0 %2442
    %v2444 = vmul.f32 %v2440, %v190
    %v2445 = vmul.f32 %v2443, %v190
    %v2446 = vsub.f32 %v2432, %v2444
    %v2447 = vsub.f32 %v2433, %v2445
    %v2448 = vmul.f32 %v2446, %v2446
    %v2449 = vmul.f32 %v2447, %v2447
    %v2450 = vsel %vm183, %v2448, 0.0
    %2451 = vadd.xlane.f32.xlu0 %v2450
    %v2452 = vpop.xlane.xlu0 %2451
    %v2453 = vsel %vm183, %v2449, 0.0
    %2454 = vadd.xlane.f32.xlu0 %v2453
    %v2455 = vpop.xlane.xlu0 %2454
    %v2456 = vmul.f32 %v2452, %v190
    %v2457 = vmul.f32 %v2455, %v190
    %v2458 = vadd.f32 %v2456, 1e-12
    %v2459 = vadd.f32 %v2457, 1e-12
    %v2460 = vrsqrt.pop %v2458
    %v2461 = vrsqrt.pop %v2459
    %v2462 = vmul.f32 %v2446, %v2460
    %v2463 = vmul.f32 %v2447, %v2461
    %v2465 = vlaneseq
    %v2466 = vshrl.u32 %v2465, 7
    %v2467 = vsub.s32 0, %v2466
    %v2468 = vrot.slane %v2435, %v2467
    %v2470 = vmul.f32 %v2462, %v2468
    %v2471 = vmul.f32 %v2463, %v2468
    %v2473 = vlaneseq
    %v2474 = vshrl.u32 %v2473, 7
    %v2475 = vsub.s32 0, %v2474
    %v2476 = vrot.slane %v2437, %v2475
    %v2478 = vadd.f32 %v2470, %v2476
    %v2479 = vadd.f32 %v2471, %v2476
    %s2480 = scalar_lea.vmem %s12, 32
    %v2481 = vld [vmem:[%s2480] sm:$0xff]
    %v2482 = vld [vmem:[%s2480 + $0x8] sm:$0xff]
    %v2483 = vld [vmem:[%s2480 + $0x10] sm:$0xff]
    %v2484 = vld [vmem:[%s2480 + $0x18] sm:$0xff]
    %s2485 = scalar_lea.vmem %s13, 1
    %v2486 = vld [vmem:[%s2485] sm:$0x1]
    %v2488 = vlaneseq
    %v2489 = vshrl.u32 %v2488, 7
    %v2490 = vsub.s32 0, %v2489
    %v2491 = vrot.slane %v2486, %v2490
    %v2494 = vsel %vm183, %v2478, 0
    %v2497 = vsel %vm183, %v2479, 0
    %2499 = vmatprep.subr.mxu0 0.0
    %2500 = vmatpush1.msra.mxu0 0.0
    %2501 = vmatprep.subr.mxu0 0.0
    %2502 = vmatpush1.msra.mxu0 0.0
    %2503 = vmatprep.subr.mxu0 0.0
    %2504 = vmatpush1.msra.mxu0 0.0
    %2505 = vmatprep.subr.mxu0 0.0
    %2506 = vmatpush1.msra.mxu0 0.0
    %2507 = vmatprep.subr.mxu0 0.0
    %2508 = vmatpush1.msra.mxu0 0.0
    %2509 = vmatprep.subr.mxu0 0.0
    %2510 = vmatpush1.msra.mxu0 0.0
    %2511 = vmatprep.subr.mxu0 0.0
    %2512 = vmatpush1.msra.mxu0 0.0
    %2513 = vmatprep.subr.mxu0 0.0
    %2514 = vmatpush1.msra.mxu0 0.0
    %2515 = vmatprep.subr.mxu0 0.0
    %2516 = vmatpush1.msra.mxu0 0.0
    %2517 = vmatprep.subr.mxu0 0.0
    %2518 = vmatpush1.msra.mxu0 0.0
    %2519 = vmatprep.subr.mxu0 0.0
    %2520 = vmatpush1.msra.mxu0 0.0
    %2521 = vmatprep.subr.mxu0 0.0
    %2522 = vmatpush1.msra.mxu0 0.0
    %2523 = vmatprep.subr.mxu0 0.0
    %2524 = vmatpush1.msra.mxu0 %v2484
    %2525 = vmatprep.subr.mxu0 0.0
    %2526 = vmatpush1.msra.mxu0 %v2483
    %2527 = vmatprep.subr.mxu0 0.0
    %2528 = vmatpush1.msra.mxu0 %v2482
    %2529 = vmatprep.subr.mxu0 0.0
    %2530 = vmatpush1.msra.mxu0 %v2481
    %2531 = vmatprep.subr.mxu0 0.0
    %2532 = vmatpush2.msra.mxu0 0.0
    %2533 = vmatprep.subr.mxu0 0.0
    %2534 = vmatpush2.msra.mxu0 0.0
    %2535 = vmatprep.subr.mxu0 0.0
    %2536 = vmatpush2.msra.mxu0 0.0
    %2537 = vmatprep.subr.mxu0 0.0
    %2538 = vmatpush2.msra.mxu0 0.0
    %2539 = vmatprep.subr.mxu0 0.0
    %2540 = vmatpush2.msra.mxu0 0.0
    %2541 = vmatprep.subr.mxu0 0.0
    %2542 = vmatpush2.msra.mxu0 0.0
    %2543 = vmatprep.subr.mxu0 0.0
    %2544 = vmatpush2.msra.mxu0 0.0
    %2545 = vmatprep.subr.mxu0 0.0
    %2546 = vmatpush2.msra.mxu0 0.0
    %2547 = vmatprep.subr.mxu0 0.0
    %2548 = vmatpush2.msra.mxu0 0.0
    %2549 = vmatprep.subr.mxu0 0.0
    %2550 = vmatpush2.msra.mxu0 0.0
    %2551 = vmatprep.subr.mxu0 0.0
    %2552 = vmatpush2.msra.mxu0 0.0
    %2553 = vmatprep.subr.mxu0 0.0
    %2554 = vmatpush2.msra.mxu0 0.0
    %2555 = vmatprep.subr.mxu0 0.0
    %2556 = vmatpush2.msra.mxu0 0.0
    %2557 = vmatprep.subr.mxu0 0.0
    %2558 = vmatpush2.msra.mxu0 0.0
    %2559 = vmatprep.subr.mxu0 0.0
    %2560 = vmatpush2.msra.mxu0 0.0
    %2561 = vmatprep.subr.mxu0 0.0
    %2562 = vmatpush2.msra.mxu0 0.0
    %2563 = vmatprep.mubr.f32.mxu0 0.0
    %2564 = vmatmul.mubr.f32.gmra.mxu0 %v2494
    %v2565 = vpop.f32.mrf.mxu0
    %v2566 = vadd.f32 %v2491, %v2565
    %v2567 = vpop.f32.mrf.mxu0
    %2568 = vmatprep.mubr.f32.mxu0 0.0
    %2569 = vmatmul.mubr.f32.gmra.mxu0 %v2497
    %v2570 = vpop.f32.mrf.mxu0
    %v2571 = vadd.f32 %v2491, %v2570
    %v2572 = vpop.f32.mrf.mxu0
    %2573 = vdwg.mxu0
    %v2574 = vmul.f32 %v2566, 0.5
    %v2575 = vmul.f32 %v2571, 0.5
    %v2576 = vmul.f32 %v2566, 0.044715
    %v2577 = vmul.f32 %v2571, 0.044715
    %v2578 = vmul.f32 %v2576, %v2566
    %v2579 = vmul.f32 %v2577, %v2571
    %v2580 = vmul.f32 %v2578, %v2566
    %v2581 = vmul.f32 %v2579, %v2571
    %v2582 = vadd.f32 %v2566, %v2580
    %v2583 = vadd.f32 %v2571, %v2581
    %v2584 = vmul.f32 %v2582, 0.7978846
    %v2585 = vmul.f32 %v2583, 0.7978846
    %v2586 = vtanh.pop %v2584
    %v2587 = vtanh.pop %v2585
    %v2588 = vadd.f32 %v2586, 1.0
    %v2589 = vadd.f32 %v2587, 1.0
    %v2590 = vmul.f32 %v2574, %v2588
    %v2591 = vmul.f32 %v2575, %v2589
    %s2592 = scalar_lea.vmem %s14, 64
    %v2593 = vld [vmem:[%s2592] sm:$0xff]
    %v2594 = vld [vmem:[%s2592 + $0x8] sm:$0xff]
    %v2595 = vld [vmem:[%s2592 + $0x10] sm:$0xff]
    %v2596 = vld [vmem:[%s2592 + $0x18] sm:$0xff]
    %v2597 = vld [vmem:[%s2592 + $0x20] sm:$0xff]
    %v2598 = vld [vmem:[%s2592 + $0x28] sm:$0xff]
    %v2599 = vld [vmem:[%s2592 + $0x30] sm:$0xff]
    %v2600 = vld [vmem:[%s2592 + $0x38] sm:$0xff]
    %s2601 = scalar_lea.vmem %s15, 1
    %v2602 = vld [vmem:[%s2601] sm:$0x1]
    %v2604 = vlaneseq
    %v2605 = vshrl.u32 %v2604, 7
    %v2606 = vsub.s32 0, %v2605
    %v2607 = vrot.slane %v2602, %v2606
    %v2610 = vsel %vm1367, %v2590, 0
    %v2613 = vsel %vm1367, %v2591, 0
    %2615 = vmatprep.subr.mxu0 0.0
    %2616 = vmatpush1.msra.mxu0 0.0
    %2617 = vmatprep.subr.mxu0 0.0
    %2618 = vmatpush1.msra.mxu0 0.0
    %2619 = vmatprep.subr.mxu0 0.0
    %2620 = vmatpush1.msra.mxu0 0.0
    %2621 = vmatprep.subr.mxu0 0.0
    %2622 = vmatpush1.msra.mxu0 0.0
    %2623 = vmatprep.subr.mxu0 0.0
    %2624 = vmatpush1.msra.mxu0 0.0
    %2625 = vmatprep.subr.mxu0 0.0
    %2626 = vmatpush1.msra.mxu0 0.0
    %2627 = vmatprep.subr.mxu0 0.0
    %2628 = vmatpush1.msra.mxu0 0.0
    %2629 = vmatprep.subr.mxu0 0.0
    %2630 = vmatpush1.msra.mxu0 0.0
    %2631 = vmatprep.subr.mxu0 0.0
    %2632 = vmatpush1.msra.mxu0 %v2600
    %2633 = vmatprep.subr.mxu0 0.0
    %2634 = vmatpush1.msra.mxu0 %v2599
    %2635 = vmatprep.subr.mxu0 0.0
    %2636 = vmatpush1.msra.mxu0 %v2598
    %2637 = vmatprep.subr.mxu0 0.0
    %2638 = vmatpush1.msra.mxu0 %v2597
    %2639 = vmatprep.subr.mxu0 0.0
    %2640 = vmatpush1.msra.mxu0 %v2596
    %2641 = vmatprep.subr.mxu0 0.0
    %2642 = vmatpush1.msra.mxu0 %v2595
    %2643 = vmatprep.subr.mxu0 0.0
    %2644 = vmatpush1.msra.mxu0 %v2594
    %2645 = vmatprep.subr.mxu0 0.0
    %2646 = vmatpush1.msra.mxu0 %v2593
    %2647 = vmatprep.subr.mxu0 0.0
    %2648 = vmatpush2.msra.mxu0 0.0
    %2649 = vmatprep.subr.mxu0 0.0
    %2650 = vmatpush2.msra.mxu0 0.0
    %2651 = vmatprep.subr.mxu0 0.0
    %2652 = vmatpush2.msra.mxu0 0.0
    %2653 = vmatprep.subr.mxu0 0.0
    %2654 = vmatpush2.msra.mxu0 0.0
    %2655 = vmatprep.subr.mxu0 0.0
    %2656 = vmatpush2.msra.mxu0 0.0
    %2657 = vmatprep.subr.mxu0 0.0
    %2658 = vmatpush2.msra.mxu0 0.0
    %2659 = vmatprep.subr.mxu0 0.0
    %2660 = vmatpush2.msra.mxu0 0.0
    %2661 = vmatprep.subr.mxu0 0.0
    %2662 = vmatpush2.msra.mxu0 0.0
    %2663 = vmatprep.subr.mxu0 0.0
    %2664 = vmatpush2.msra.mxu0 0.0
    %2665 = vmatprep.subr.mxu0 0.0
    %2666 = vmatpush2.msra.mxu0 0.0
    %2667 = vmatprep.subr.mxu0 0.0
    %2668 = vmatpush2.msra.mxu0 0.0
    %2669 = vmatprep.subr.mxu0 0.0
    %2670 = vmatpush2.msra.mxu0 0.0
    %2671 = vmatprep.subr.mxu0 0.0
    %2672 = vmatpush2.msra.mxu0 0.0
    %2673 = vmatprep.subr.mxu0 0.0
    %2674 = vmatpush2.msra.mxu0 0.0
    %2675 = vmatprep.subr.mxu0 0.0
    %2676 = vmatpush2.msra.mxu0 0.0
    %2677 = vmatprep.subr.mxu0 0.0
    %2678 = vmatpush2.msra.mxu0 0.0
    %2679 = vmatprep.mubr.f32.mxu0 0.0
    %2680 = vmatmul.mubr.f32.gmra.mxu0 %v2610
    %v2681 = vpop.f32.mrf.mxu0
    %v2682 = vadd.f32 %v2607, %v2681
    %v2683 = vpop.f32.mrf.mxu0
    %2684 = vmatprep.mubr.f32.mxu0 0.0
    %2685 = vmatmul.mubr.f32.gmra.mxu0 %v2613
    %v2686 = vpop.f32.mrf.mxu0
    %v2687 = vadd.f32 %v2607, %v2686
    %v2688 = vpop.f32.mrf.mxu0
    %2689 = vdwg.mxu0
    %v2690 = vadd.f32 %v2682, %v2478
    %v2691 = vadd.f32 %v2687, %v2479
    %s2692 = scalar_lea.vmem %s16, 1
    %v2693 = vld [vmem:[%s2692] sm:$0x1]
    %s2694 = scalar_lea.vmem %s17, 1
    %v2695 = vld [vmem:[%s2694] sm:$0x1]
    %v2696 = vsel %vm183, %v2690, 0.0
    %2697 = vadd.xlane.f32.xlu0 %v2696
    %v2698 = vpop.xlane.xlu0 %2697
    %v2699 = vsel %vm183, %v2691, 0.0
    %2700 = vadd.xlane.f32.xlu0 %v2699
    %v2701 = vpop.xlane.xlu0 %2700
    %v2702 = vmul.f32 %v2698, %v190
    %v2703 = vmul.f32 %v2701, %v190
    %v2704 = vsub.f32 %v2690, %v2702
    %v2705 = vsub.f32 %v2691, %v2703
    %v2706 = vmul.f32 %v2704, %v2704
    %v2707 = vmul.f32 %v2705, %v2705
    %v2708 = vsel %vm183, %v2706, 0.0
    %2709 = vadd.xlane.f32.xlu0 %v2708
    %v2710 = vpop.xlane.xlu0 %2709
    %v2711 = vsel %vm183, %v2707, 0.0
    %2712 = vadd.xlane.f32.xlu0 %v2711
    %v2713 = vpop.xlane.xlu0 %2712
    %v2714 = vmul.f32 %v2710, %v190
    %v2715 = vmul.f32 %v2713, %v190
    %v2716 = vadd.f32 %v2714, 1e-12
    %v2717 = vadd.f32 %v2715, 1e-12
    %v2718 = vrsqrt.pop %v2716
    %v2719 = vrsqrt.pop %v2717
    %v2720 = vmul.f32 %v2704, %v2718
    %v2721 = vmul.f32 %v2705, %v2719
    %v2723 = vlaneseq
    %v2724 = vshrl.u32 %v2723, 7
    %v2725 = vsub.s32 0, %v2724
    %v2726 = vrot.slane %v2693, %v2725
    %v2728 = vmul.f32 %v2720, %v2726
    %v2729 = vmul.f32 %v2721, %v2726
    %v2731 = vlaneseq
    %v2732 = vshrl.u32 %v2731, 7
    %v2733 = vsub.s32 0, %v2732
    %v2734 = vrot.slane %v2695, %v2733
    %v2736 = vadd.f32 %v2728, %v2734
    %v2737 = vadd.f32 %v2729, %v2734
    %v2738 = vld [vmem:[%s18] sm:$0xff]
    %v2739 = vld [vmem:[%s18 + $0x8] sm:$0xff]
    %v2740 = vld [vmem:[%s18 + $0x10] sm:$0xff]
    %v2741 = vld [vmem:[%s18 + $0x18] sm:$0xff]
    %v2742 = vld [vmem:[%s19] sm:$0x1]
    %v2744 = vlaneseq
    %v2745 = vshrl.u32 %v2744, 7
    %v2746 = vsub.s32 0, %v2745
    %v2747 = vrot.slane %v2742, %v2746
    %v2751 = vrot.slane %v2737, 7
    %vm2752 = vcmask 1041409
    %v2753 = vsel %vm2752, %v2751, %v2736
    %v2754 = vsel %vm183, %v2753, 0
    %2756 = vmatprep.subr.mxu0 0.0
    %2757 = vmatpush1.msra.mxu0 0.0
    %2758 = vmatprep.subr.mxu0 0.0
    %2759 = vmatpush1.msra.mxu0 0.0
    %2760 = vmatprep.subr.mxu0 0.0
    %2761 = vmatpush1.msra.mxu0 0.0
    %2762 = vmatprep.subr.mxu0 0.0
    %2763 = vmatpush1.msra.mxu0 0.0
    %2764 = vmatprep.subr.mxu0 0.0
    %2765 = vmatpush1.msra.mxu0 0.0
    %2766 = vmatprep.subr.mxu0 0.0
    %2767 = vmatpush1.msra.mxu0 0.0
    %2768 = vmatprep.subr.mxu0 0.0
    %2769 = vmatpush1.msra.mxu0 0.0
    %2770 = vmatprep.subr.mxu0 0.0
    %2771 = vmatpush1.msra.mxu0 0.0
    %2772 = vmatprep.subr.mxu0 0.0
    %2773 = vmatpush1.msra.mxu0 0.0
    %2774 = vmatprep.subr.mxu0 0.0
    %2775 = vmatpush1.msra.mxu0 0.0
    %2776 = vmatprep.subr.mxu0 0.0
    %2777 = vmatpush1.msra.mxu0 0.0
    %2778 = vmatprep.subr.mxu0 0.0
    %2779 = vmatpush1.msra.mxu0 0.0
    %2780 = vmatprep.subr.mxu0 0.0
    %2781 = vmatpush1.msra.mxu0 %v2741
    %2782 = vmatprep.subr.mxu0 0.0
    %2783 = vmatpush1.msra.mxu0 %v2740
    %2784 = vmatprep.subr.mxu0 0.0
    %2785 = vmatpush1.msra.mxu0 %v2739
    %2786 = vmatprep.subr.mxu0 0.0
    %2787 = vmatpush1.msra.mxu0 %v2738
    %2788 = vmatprep.subr.mxu0 0.0
    %2789 = vmatpush2.msra.mxu0 0.0
    %2790 = vmatprep.subr.mxu0 0.0
    %2791 = vmatpush2.msra.mxu0 0.0
    %2792 = vmatprep.subr.mxu0 0.0
    %2793 = vmatpush2.msra.mxu0 0.0
    %2794 = vmatprep.subr.mxu0 0.0
    %2795 = vmatpush2.msra.mxu0 0.0
    %2796 = vmatprep.subr.mxu0 0.0
    %2797 = vmatpush2.msra.mxu0 0.0
    %2798 = vmatprep.subr.mxu0 0.0
    %2799 = vmatpush2.msra.mxu0 0.0
    %2800 = vmatprep.subr.mxu0 0.0
    %2801 = vmatpush2.msra.mxu0 0.0
    %2802 = vmatprep.subr.mxu0 0.0
    %2803 = vmatpush2.msra.mxu0 0.0
    %2804 = vmatprep.subr.mxu0 0.0
    %2805 = vmatpush2.msra.mxu0 0.0
    %2806 = vmatprep.subr.mxu0 0.0
    %2807 = vmatpush2.msra.mxu0 0.0
    %2808 = vmatprep.subr.mxu0 0.0
    %2809 = vmatpush2.msra.mxu0 0.0
    %2810 = vmatprep.subr.mxu0 0.0
    %2811 = vmatpush2.msra.mxu0 0.0
    %2812 = vmatprep.subr.mxu0 0.0
    %2813 = vmatpush2.msra.mxu0 0.0
    %2814 = vmatprep.subr.mxu0 0.0
    %2815 = vmatpush2.msra.mxu0 0.0
    %2816 = vmatprep.subr.mxu0 0.0
    %2817 = vmatpush2.msra.mxu0 0.0
    %2818 = vmatprep.subr.mxu0 0.0
    %2819 = vmatpush2.msra.mxu0 0.0
    %2820 = vmatprep.mubr.f32.mxu0 0.0
    %2821 = vmatmul.mubr.f32.gmra.mxu0 %v2754
    %v2822 = vpop.f32.mrf.mxu0
    %v2823 = vadd.f32 %v2747, %v2822
    %v2824 = vpop.f32.mrf.mxu0
    %2825 = vdwg.mxu0
    %v2826 = vmul.f32 %v2823, 0.5
    %v2827 = vmul.f32 %v2823, 0.044715
    %v2828 = vmul.f32 %v2827, %v2823
    %v2829 = vmul.f32 %v2828, %v2823
    %v2830 = vadd.f32 %v2823, %v2829
    %v2831 = vmul.f32 %v2830, 0.7978846
    %v2832 = vtanh.pop %v2831
    %v2833 = vadd.f32 %v2832, 1.0
    %v2834 = vmul.f32 %v2826, %v2833
    %v2835 = vld [vmem:[%s20] sm:$0xff]
    %v2836 = vld [vmem:[%s20 + $0x8] sm:$0xff]
    %v2837 = vld [vmem:[%s21] sm:$0x1]
    %v2839 = vlaneseq
    %v2840 = vshrl.u32 %v2839, 7
    %v2841 = vsub.s32 0, %v2840
    %v2842 = vrot.slane %v2837, %v2841
    %v2845 = vsel %vm350, %v2834, 0
    %2847 = vmatprep.subr.mxu0 0.0
    %2848 = vmatpush1.msra.mxu0 0.0
    %2849 = vmatprep.subr.mxu0 0.0
    %2850 = vmatpush1.msra.mxu0 0.0
    %2851 = vmatprep.subr.mxu0 0.0
    %2852 = vmatpush1.msra.mxu0 0.0
    %2853 = vmatprep.subr.mxu0 0.0
    %2854 = vmatpush1.msra.mxu0 0.0
    %2855 = vmatprep.subr.mxu0 0.0
    %2856 = vmatpush1.msra.mxu0 0.0
    %2857 = vmatprep.subr.mxu0 0.0
    %2858 = vmatpush1.msra.mxu0 0.0
    %2859 = vmatprep.subr.mxu0 0.0
    %2860 = vmatpush1.msra.mxu0 0.0
    %2861 = vmatprep.subr.mxu0 0.0
    %2862 = vmatpush1.msra.mxu0 0.0
    %2863 = vmatprep.subr.mxu0 0.0
    %2864 = vmatpush1.msra.mxu0 0.0
    %2865 = vmatprep.subr.mxu0 0.0
    %2866 = vmatpush1.msra.mxu0 0.0
    %2867 = vmatprep.subr.mxu0 0.0
    %2868 = vmatpush1.msra.mxu0 0.0
    %2869 = vmatprep.subr.mxu0 0.0
    %2870 = vmatpush1.msra.mxu0 0.0
    %2871 = vmatprep.subr.mxu0 0.0
    %2872 = vmatpush1.msra.mxu0 0.0
    %2873 = vmatprep.subr.mxu0 0.0
    %2874 = vmatpush1.msra.mxu0 0.0
    %2875 = vmatprep.subr.mxu0 0.0
    %2876 = vmatpush1.msra.mxu0 %v2836
    %2877 = vmatprep.subr.mxu0 0.0
    %2878 = vmatpush1.msra.mxu0 %v2835
    %2879 = vmatprep.subr.mxu0 0.0
    %2880 = vmatpush2.msra.mxu0 0.0
    %2881 = vmatprep.subr.mxu0 0.0
    %2882 = vmatpush2.msra.mxu0 0.0
    %2883 = vmatprep.subr.mxu0 0.0
    %2884 = vmatpush2.msra.mxu0 0.0
    %2885 = vmatprep.subr.mxu0 0.0
    %2886 = vmatpush2.msra.mxu0 0.0
    %2887 = vmatprep.subr.mxu0 0.0
    %2888 = vmatpush2.msra.mxu0 0.0
    %2889 = vmatprep.subr.mxu0 0.0
    %2890 = vmatpush2.msra.mxu0 0.0
    %2891 = vmatprep.subr.mxu0 0.0
    %2892 = vmatpush2.msra.mxu0 0.0
    %2893 = vmatprep.subr.mxu0 0.0
    %2894 = vmatpush2.msra.mxu0 0.0
    %2895 = vmatprep.subr.mxu0 0.0
    %2896 = vmatpush2.msra.mxu0 0.0
    %2897 = vmatprep.subr.mxu0 0.0
    %2898 = vmatpush2.msra.mxu0 0.0
    %2899 = vmatprep.subr.mxu0 0.0
    %2900 = vmatpush2.msra.mxu0 0.0
    %2901 = vmatprep.subr.mxu0 0.0
    %2902 = vmatpush2.msra.mxu0 0.0
    %2903 = vmatprep.subr.mxu0 0.0
    %2904 = vmatpush2.msra.mxu0 0.0
    %2905 = vmatprep.subr.mxu0 0.0
    %2906 = vmatpush2.msra.mxu0 0.0
    %2907 = vmatprep.subr.mxu0 0.0
    %2908 = vmatpush2.msra.mxu0 0.0
    %2909 = vmatprep.subr.mxu0 0.0
    %2910 = vmatpush2.msra.mxu0 0.0
    %2911 = vmatprep.mubr.f32.mxu0 0.0
    %2912 = vmatmul.mubr.f32.gmra.mxu0 %v2845
    %v2913 = vpop.f32.mrf.mxu0
    %v2914 = vadd.f32 %v2842, %v2913
    %v2915 = vpop.f32.mrf.mxu0
    %2916 = vdwg.mxu0
    %2917 = vst [vmem:[#allocation2] sm:$0x3] %v2914
    // Predicated region
    $region90: #{custom_model_forward.1} parent=1 // pred_check
      _
    $region91: #{custom_model_forward.1} parent=1 // pred_check_branch
      %2919 = sbr.rel (0) target = $region93
    $region92: #{custom_model_forward.1} parent=1 // pred_region
      %s2921 = ssub.s32 32, 32
      %2922 = vsyncadd [#allocation3], %s2921
      %s2924 = sshll.u32 [#allocation2], 4
      %s2925 = int_to_ptr.vmem [resolvable:$true] %s2924
      %2927 = dma.vmem_to_hbm [thread:$0]  %s2925, 32, %s22, [#allocation3]
    $region93: #{custom_model_forward.1} parent=1 // pred_fallthru
      _
    // Predicated region
    $region94: #{custom_model_forward.1} parent=1 // pred_check
      _
    $region95: #{custom_model_forward.1} parent=1 // pred_check_branch
      %2929 = sbr.rel (0) target = $region97
    $region96: #{custom_model_forward.1} parent=1 // pred_region
      %2930 = dma.done [#allocation3], 32
    $region97: #{custom_model_forward.1} parent=1 // pred_fallthru
      _
    %2931 = vsyncpa [#allocation3], 1

</llo_original>
